<compile_context>
chip_gen: v6e
topology: v6e:2x2x1
jax: 0.10.0
libtpu: 0.0.40
codegen_flags: <defaults>
</compile_context>

<pallas_src>
import functools

import jax
import jax.numpy as jnp
from jax.experimental import pallas as pl
from jax.experimental.pallas import tpu as pltpu

INPUT_SIZE = 14009
HIDDEN = 50
OUTPUT_SIZE = 1


def _mlp_kernel(x_ref, w1t_ref, b1_ref, w2_ref, b2_ref, o_ref, *, k_valid):
    """Single grid step: full-K fc1 matmul + bias + ReLU + fc2 in one body.

    x_ref is an edge block (B, K_pad) over a (B, k_valid) array: columns
    >= k_valid hold unspecified data and must be masked before use.
    """
    # Mask the padded tail of x (unspecified edge-block contents), then cast
    # to bf16 for the MXU.  A few VPU ops, fully hidden under the weight DMA.
    col = jax.lax.broadcasted_iota(jnp.int32, x_ref.shape, 1)
    x = jnp.where(col < k_valid, x_ref[...], 0.0).astype(jnp.bfloat16)

    # fc1: A . B^T on the MXU (W1 stored lane-dense as (H, K_pad) bf16),
    # f32 accumulation.
    h = jax.lax.dot_general(
        x,
        w1t_ref[...],
        dimension_numbers=(((1,), (1,)), ((), ())),
        preferred_element_type=jnp.float32,
    )                                                       # (B, H) f32
    h = jnp.maximum(h + b1_ref[...], 0.0)                   # bias + ReLU

    # fc2: output width is 1 -> avoid a 1-lane MXU matmul; VPU mul + reduce.
    out = jnp.sum(h * w2_ref[...], axis=-1, keepdims=True)  # (B, 1)
    o_ref[...] = (out + b2_ref[...]).astype(o_ref.dtype)


def prepare_params(w1, b1, w2, b2, *, stream_dtype=jnp.bfloat16):
    """One-time weight prep (run OUTSIDE the jit'd forward).

    w1: (K_in, H) f32 (i.e. PyTorch fc1.weight.T), b1: (1, H) f32,
    w2: (H, O) f32, b2: (1, O) f32.

    Returns (w1t, b1, w2_row, b2) where w1t is (H, K_pad) stream_dtype:
    transposed (lane-dense K on the minor axis) and zero-padded along K to a
    multiple of 128.
    """
    K_in, H = w1.shape
    K_pad = pl.cdiv(K_in, 128) * 128
    w1t = jnp.transpose(w1)                        # (H, K_in), lane-dense
    if K_pad != K_in:
        w1t = jnp.pad(w1t, ((0, 0), (0, K_pad - K_in)))
    w1t = w1t.astype(stream_dtype)
    w2_row = w2.reshape(1, H).astype(jnp.float32)  # (1, H) row for VPU fc2
    return w1t, b1.astype(jnp.float32), w2_row, b2.astype(jnp.float32)


@functools.partial(jax.jit, static_argnames=("k_valid",))
def mlp_forward(x, w1t, b1, w2_row, b2, *, k_valid=INPUT_SIZE):
    """x: (B, K_in) f32 (unpadded); w1t: (H, K_pad) bf16; b1/w2_row: (1, H) f32;
    b2: (1, O) f32."""
    B, K_in = x.shape
    H, K_pad = w1t.shape
    O = b2.shape[1]
    assert K_in == k_valid
    assert K_pad % 128 == 0 and K_pad >= K_in, (K_pad, K_in)

    w_itemsize = jnp.dtype(w1t.dtype).itemsize
    # Real tiled/padded HBM footprint: x rows pad 4->8 sublanes (f32),
    # W1^T rows pad 50->64 sublanes (bf16 packing).
    cost = pl.CostEstimate(
        flops=2 * B * K_pad * H + 4 * B * H,
        transcendentals=0,
        bytes_accessed=(
            8 * K_pad * 4                      # x (sublane-padded) f32
            + 64 * K_pad * w_itemsize          # W1^T (sublane-padded) bf16
            + 4 * (2 * H + O + B * O)          # biases, w2 row, output
        ),
    )

    kernel = functools.partial(_mlp_kernel, k_valid=k_valid)

    return pl.pallas_call(
        kernel,
        out_shape=jax.ShapeDtypeStruct((B, O), jnp.float32),
        grid=(1,),
        in_specs=[
            # x edge block: spans the full (padded) K in one step; tail masked
            # inside the kernel.
            pl.BlockSpec((B, K_pad), lambda k: (0, 0)),
            # W1^T, lane-dense, whole array resident for the single step.
            pl.BlockSpec((H, K_pad), lambda k: (0, 0)),
            pl.BlockSpec((1, H), lambda k: (0, 0)),   # b1 (f32)
            pl.BlockSpec((1, H), lambda k: (0, 0)),   # W2 row (f32)
            pl.BlockSpec((1, O), lambda k: (0, 0)),   # b2 (f32)
        ],
        out_specs=pl.BlockSpec((B, O), lambda k: (0, 0)),
        compiler_params=pltpu.CompilerParams(
            dimension_semantics=("arbitrary",),
        ),
        cost_estimate=cost,
    )(x, w1t, b1, w2_row, b2)


def init_params(key, in_features, hidden, out_features):
    """Deterministic init mimicking PyTorch Linear: U(-1/sqrt(fan_in), +)."""
    k1, k2, k3, k4 = jax.random.split(key, 4)
    s1 = 1.0 / jnp.sqrt(in_features)
    s2 = 1.0 / jnp.sqrt(hidden)
    w1 = jax.random.uniform(k1, (in_features, hidden), jnp.float32, -s1, s1)
    b1 = jax.random.uniform(k2, (1, hidden), jnp.float32, -s1, s1)
    w2 = jax.random.uniform(k3, (hidden, out_features), jnp.float32, -s2, s2)
    b2 = jax.random.uniform(k4, (1, out_features), jnp.float32, -s2, s2)
    return w1, b1, w2, b2


if __name__ == "__main__":
    key = jax.random.PRNGKey(0)
    kx, kp = jax.random.split(key)

    batch = 4
    x = jax.random.normal(kx, (batch, INPUT_SIZE), jnp.float32)
    w1, b1, w2, b2 = init_params(kp, INPUT_SIZE, HIDDEN, OUTPUT_SIZE)

    # One-time weight prep (transpose + pad + bf16) outside the jit'd forward.
    w1t, b1p, w2_row, b2p = prepare_params(w1, b1, w2, b2)

    out = mlp_forward(x, w1t, b1p, w2_row, b2p, k_valid=INPUT_SIZE)
    out = jax.block_until_ready(out)
    assert out.shape == (batch, OUTPUT_SIZE)

    # Reference 1: same bf16-quantized inputs, f32 math (matches kernel path).
    xb = x.astype(jnp.bfloat16).astype(jnp.float32)
    w1b = w1.astype(jnp.bfloat16).astype(jnp.float32)
    ref_bf16 = jnp.maximum(xb @ w1b + b1, 0.0) @ w2 + b2
    assert jnp.allclose(out, ref_bf16, atol=2e-3, rtol=2e-3), (out, ref_bf16)

    # Reference 2: full f32 PyTorch-equivalent forward (bf16 streaming of the
    # K=14009 reduction gives ~1e-3-level differences; loose tolerance).
    ref_f32 = jnp.maximum(x @ w1 + b1, 0.0) @ w2 + b2
    assert jnp.allclose(out, ref_f32, atol=1e-1, rtol=1e-1), (out, ref_f32)

    print("KERNEL_OK")
</pallas_src>

<mosaic_0001>
module attributes {stable_mosaic.version = 11 : i64} {
  func.func @_mlp_kernel(%arg0: i32, %arg1: memref<4x14080xf32, #tpu.memory_space<vmem>>, %arg2: memref<50x14080xbf16, #tpu.memory_space<vmem>>, %arg3: memref<1x50xf32, #tpu.memory_space<vmem>>, %arg4: memref<1x50xf32, #tpu.memory_space<vmem>>, %arg5: memref<1x1xf32, #tpu.memory_space<vmem>>, %arg6: memref<4x1xf32, #tpu.memory_space<vmem>>) attributes {dimension_semantics = [#tpu.dimension_semantics<arbitrary>], iteration_bounds = array<i64: 1>, scalar_prefetch = 0 : i64, scratch_operands = 0 : i64, tpu.core_type = #tpu.core_type<tc>, window_params = [{transform_indices = @transform_0, window_bounds = array<i64: 4, 14080>}, {pipeline_mode = #tpu.pipeline_mode<synchronous>, transform_indices = @transform_1, window_bounds = array<i64: 50, 14080>}, {pipeline_mode = #tpu.pipeline_mode<synchronous>, transform_indices = @transform_2, window_bounds = array<i64: 1, 50>}, {pipeline_mode = #tpu.pipeline_mode<synchronous>, transform_indices = @transform_3, window_bounds = array<i64: 1, 50>}, {pipeline_mode = #tpu.pipeline_mode<synchronous>, transform_indices = @transform_4, window_bounds = array<i64: 1, 1>}, {pipeline_mode = #tpu.pipeline_mode<synchronous>, transform_indices = @transform_5, window_bounds = array<i64: 4, 1>}]} {
    %0 = tpu.iota {dimensions = array<i32: 1>} : vector<4x14080xi32>
    %c14009_i32 = arith.constant 14009 : i32
    %1 = vector.broadcast %c14009_i32 : i32 to vector<4x14080xi32>
    %2 = arith.cmpi slt, %0, %1 : vector<4x14080xi32>
    %c0 = arith.constant 0 : index
    %c0_0 = arith.constant 0 : index
    %3 = vector.load %arg1[%c0, %c0_0] : memref<4x14080xf32, #tpu.memory_space<vmem>>, vector<4x14080xf32>
    %cst = arith.constant 0.000000e+00 : f32
    %4 = vector.broadcast %cst : f32 to vector<4x14080xf32>
    %5 = arith.select %2, %3, %4 : vector<4x14080xi1>, vector<4x14080xf32>
    %6 = arith.truncf %5 : vector<4x14080xf32> to vector<4x14080xbf16>
    %c0_1 = arith.constant 0 : index
    %c0_2 = arith.constant 0 : index
    %7 = vector.load %arg2[%c0_1, %c0_2] : memref<50x14080xbf16, #tpu.memory_space<vmem>>, vector<50x14080xbf16>
    %cst_3 = arith.constant dense<0.000000e+00> : vector<4x50xf32>
    %8 = tpu.matmul %6, %7, %cst_3 {dimension_numbers = #tpu.dot_dimension_numbers<[1], [1], [0], [0], [0, 0, 1, 0], [], []>} : vector<4x14080xbf16>, vector<50x14080xbf16>, vector<4x50xf32> -> vector<4x50xf32>
    %c0_4 = arith.constant 0 : index
    %c0_5 = arith.constant 0 : index
    %9 = vector.load %arg3[%c0_4, %c0_5] : memref<1x50xf32, #tpu.memory_space<vmem>>, vector<1x50xf32>
    %10 = vector.broadcast %9 : vector<1x50xf32> to vector<4x50xf32>
    %11 = arith.addf %8, %10 : vector<4x50xf32>
    %cst_6 = arith.constant 0.000000e+00 : f32
    %12 = vector.broadcast %cst_6 : f32 to vector<4x50xf32>
    %13 = arith.maximumf %11, %12 : vector<4x50xf32>
    %c0_7 = arith.constant 0 : index
    %c0_8 = arith.constant 0 : index
    %14 = vector.load %arg4[%c0_7, %c0_8] : memref<1x50xf32, #tpu.memory_space<vmem>>, vector<1x50xf32>
    %15 = vector.broadcast %14 : vector<1x50xf32> to vector<4x50xf32>
    %16 = arith.mulf %13, %15 : vector<4x50xf32>
    %cst_9 = arith.constant dense<0.000000e+00> : vector<4xf32>
    %17 = vector.multi_reduction <add>, %16, %cst_9 [1] : vector<4x50xf32> to vector<4xf32>
    %18 = vector.shape_cast %17 : vector<4xf32> to vector<4x1xf32>
    %c0_10 = arith.constant 0 : index
    %c0_11 = arith.constant 0 : index
    %19 = vector.load %arg5[%c0_10, %c0_11] : memref<1x1xf32, #tpu.memory_space<vmem>>, vector<1x1xf32>
    %20 = vector.broadcast %19 : vector<1x1xf32> to vector<4x1xf32>
    %21 = arith.addf %18, %20 : vector<4x1xf32>
    %c0_12 = arith.constant 0 : index
    %c0_13 = arith.constant 0 : index
    %22 = vector.load %arg6[%c0_12, %c0_13] : memref<4x1xf32, #tpu.memory_space<vmem>>, vector<4x1xf32>
    tpu.vector_store %arg6[%c0_12, %c0_13], %21 {strides = array<i32>} : memref<4x1xf32, #tpu.memory_space<vmem>>, vector<4x1xf32>,
    return
  }
  func.func @transform_0(%arg0: i32) -> (i32, i32) {
    %c0_i32 = arith.constant 0 : i32
    %c0_i32_0 = arith.constant 0 : i32
    %c0_i32_1 = arith.constant 0 : i32
    return %c0_i32, %c0_i32_0 : i32, i32
  }
  func.func @transform_1(%arg0: i32) -> (i32, i32) {
    %c0_i32 = arith.constant 0 : i32
    %c0_i32_0 = arith.constant 0 : i32
    %c0_i32_1 = arith.constant 0 : i32
    return %c0_i32, %c0_i32_0 : i32, i32
  }
  func.func @transform_2(%arg0: i32) -> (i32, i32) {
    %c0_i32 = arith.constant 0 : i32
    %c0_i32_0 = arith.constant 0 : i32
    %c0_i32_1 = arith.constant 0 : i32
    return %c0_i32, %c0_i32_0 : i32, i32
  }
  func.func @transform_3(%arg0: i32) -> (i32, i32) {
    %c0_i32 = arith.constant 0 : i32
    %c0_i32_0 = arith.constant 0 : i32
    %c0_i32_1 = arith.constant 0 : i32
    return %c0_i32, %c0_i32_0 : i32, i32
  }
  func.func @transform_4(%arg0: i32) -> (i32, i32) {
    %c0_i32 = arith.constant 0 : i32
    %c0_i32_0 = arith.constant 0 : i32
    %c0_i32_1 = arith.constant 0 : i32
    return %c0_i32, %c0_i32_0 : i32, i32
  }
  func.func @transform_5(%arg0: i32) -> (i32, i32) {
    %c0_i32 = arith.constant 0 : i32
    %c0_i32_0 = arith.constant 0 : i32
    %c0_i32_1 = arith.constant 0 : i32
    return %c0_i32, %c0_i32_0 : i32, i32
  }
}

</mosaic_0001>

<llo_original>
// kernel: mlp_forward.1
$region0: #{mlp_forward.1}
  #allocation0 [shape = 'u32[]', space=smem, size = 0x4, offset = 0x4, fixed_abs, tag = 'smem constant byte address 0x4 - core index']
  #allocation1 [shape = 'u32[144,128]{1,0:T(1,128)}', space=vmem, size = 0x12000, scoped, tag = 'internal scratch']
  #allocation2 [shape = 'f32[1,1]{1,0:T(1,128)S(1)}', space=vmem, size = 0x200, scoped, tag = 'scoped memory for mlp_forward.1']
  %s0 = inlined_call_operand.hbm [shape: f32[4,14009], index: 0, kind: input, shape index: {}]
  %s1 = inlined_call_operand.hbm [shape: bf16[50,14080], index: 1, kind: input, shape index: {}]
  %s2 = inlined_call_operand.hbm [shape: f32[1,50], index: 2, kind: input, shape index: {}]
  %s3 = inlined_call_operand.hbm [shape: f32[1,50], index: 3, kind: input, shape index: {}]
  %s4 = inlined_call_operand.<no memory space> [shape: f32[1,1], index: 4, kind: input, shape index: {}]
  %s5 = inlined_call_operand.vmem [shape: f32[4,1], index: 5, kind: output, shape index: {}]
  %s6 = sld [smem:[#allocation0]]
  $region46: #{mlp_forward.1} parent=0
    _
  %s8 = ssub.s32 1, %s6
  %s9 = scalar_select 0, %s8, %s6
  %v10 = vstv %s4
  %11 = vst [vmem:[#allocation2] sm:$0x1] %v10
  $region1: #{mlp_forward.1} parent=0
    #allocation3 [shape = 'u8[225280]{0}', space=vmem, size = 0x37000, scoped, tag = 'input window, operand 0, single buffered']
    #allocation4 [shape = 's32[1]{0}', space=sflag, size = 0x4, scoped, tag = 'scoped memory for mlp_forward.1']
    #allocation5 [shape = 'u8[1576960]{0}', space=vmem, size = 0x181000, scoped, tag = 'input window, operand 1, single buffered']
    #allocation6 [shape = 's32[1]{0}', space=sflag, size = 0x4, scoped, tag = 'scoped memory for mlp_forward.1']
    #allocation7 [shape = 'u8[512]{0}', space=vmem, size = 0x400, scoped, tag = 'input window, operand 2, single buffered']
    #allocation8 [shape = 'u8[512]{0}', space=vmem, size = 0x400, scoped, tag = 'input window, operand 3, single buffered']
    #allocation9 [shape = 's32[1]{0}', space=sflag, size = 0x4, scoped, tag = 'scoped memory for mlp_forward.1']
    %12 = vsyncpa [#allocation4], 0
    %13 = vsyncpa [#allocation6], 0
    %14 = vsyncpa [#allocation9], 0
    // Predicated region
    $region2: #{mlp_forward.1} parent=1 // pred_check
      _
    $region3: #{mlp_forward.1} parent=1 // pred_check_branch
      %16 = sbr.rel (0) target = $region5
    $region4: #{mlp_forward.1} parent=1 // pred_region
      %s18 = ssub.s32 7040, 7040
      %19 = vsyncadd [#allocation4], %s18
      %s21 = sshll.u32 [#allocation3], 4
      %s22 = int_to_ptr.vmem [resolvable:$true] %s21
      %24 = dma.hbm_to_vmem [thread:$0]  %s0, 7040, %s22, [#allocation4]
    $region5: #{mlp_forward.1} parent=1 // pred_fallthru
      _
    // Predicated region
    $region6: #{mlp_forward.1} parent=1 // pred_check
      _
    $region7: #{mlp_forward.1} parent=1 // pred_check_branch
      %26 = sbr.rel (0) target = $region9
    $region8: #{mlp_forward.1} parent=1 // pred_region
      %s28 = ssub.s32 49280, 49280
      %29 = vsyncadd [#allocation6], %s28
      %s30 = sshll.u32 [#allocation5], 4
      %s31 = int_to_ptr.vmem [resolvable:$true] %s30
      %36 = dma.hbm_to_vmem [thread:$0]  %s1, 49280, %s31, [#allocation6], 7040, 7040, 440
    $region9: #{mlp_forward.1} parent=1 // pred_fallthru
      _
    // Predicated region
    $region10: #{mlp_forward.1} parent=1 // pred_check
      _
    $region11: #{mlp_forward.1} parent=1 // pred_check_branch
      %38 = sbr.rel (0) target = $region13
    $region12: #{mlp_forward.1} parent=1 // pred_region
      %s40 = ssub.s32 16, 16
      %41 = vsyncadd [#allocation6], %s40
      %s43 = sshll.u32 [#allocation7], 4
      %s44 = int_to_ptr.vmem [resolvable:$true] %s43
      %46 = dma.hbm_to_vmem [thread:$0]  %s2, 16, %s44, [#allocation6]
    $region13: #{mlp_forward.1} parent=1 // pred_fallthru
      _
    // Predicated region
    $region14: #{mlp_forward.1} parent=1 // pred_check
      _
    $region15: #{mlp_forward.1} parent=1 // pred_check_branch
      %48 = sbr.rel (0) target = $region17
    $region16: #{mlp_forward.1} parent=1 // pred_region
      %s50 = ssub.s32 16, 16
      %51 = vsyncadd [#allocation9], %s50
      %s53 = sshll.u32 [#allocation8], 4
      %s54 = int_to_ptr.vmem [resolvable:$true] %s53
      %56 = dma.hbm_to_vmem [thread:$0]  %s3, 16, %s54, [#allocation9]
    $region17: #{mlp_forward.1} parent=1 // pred_fallthru
      _
    // Predicated region
    $region18: #{mlp_forward.1} parent=1 // pred_check
      _
    $region19: #{mlp_forward.1} parent=1 // pred_check_branch
      %58 = sbr.rel (0) target = $region21
    $region20: #{mlp_forward.1} parent=1 // pred_region
      _
    $region21: #{mlp_forward.1} parent=1 // pred_fallthru
      _
    // Predicated region
    $region22: #{mlp_forward.1} parent=1 // pred_check
      _
    $region23: #{mlp_forward.1} parent=1 // pred_check_branch
      %60 = sbr.rel (0) target = $region25
    $region24: #{mlp_forward.1} parent=1 // pred_region
      %61 = dma.done [#allocation4], 7040
    $region25: #{mlp_forward.1} parent=1 // pred_fallthru
      _
    // Predicated region
    $region26: #{mlp_forward.1} parent=1 // pred_check
      _
    $region27: #{mlp_forward.1} parent=1 // pred_check_branch
      %63 = sbr.rel (0) target = $region29
    $region28: #{mlp_forward.1} parent=1 // pred_region
      %64 = dma.done [#allocation6], 49280
    $region29: #{mlp_forward.1} parent=1 // pred_fallthru
      _
    // Predicated region
    $region30: #{mlp_forward.1} parent=1 // pred_check
      _
    $region31: #{mlp_forward.1} parent=1 // pred_check_branch
      %66 = sbr.rel (0) target = $region33
    $region32: #{mlp_forward.1} parent=1 // pred_region
      %67 = dma.done [#allocation6], 16
    $region33: #{mlp_forward.1} parent=1 // pred_fallthru
      _
    // Predicated region
    $region34: #{mlp_forward.1} parent=1 // pred_check
      _
    $region35: #{mlp_forward.1} parent=1 // pred_check_branch
      %69 = sbr.rel (0) target = $region37
    $region36: #{mlp_forward.1} parent=1 // pred_region
      %70 = dma.done [#allocation9], 16
    $region37: #{mlp_forward.1} parent=1 // pred_fallthru
      _
    %v72 = vlaneseq
    %v73 = vand.u32 %v72, 127
    %v74 = vadd.s32 %v73, 128
    %v75 = vadd.s32 %v73, 256
    %v76 = vadd.s32 %v73, 384
    %v77 = vadd.s32 %v73, 512
    %v78 = vadd.s32 %v73, 640
    %v79 = vadd.s32 %v73, 768
    %v80 = vadd.s32 %v73, 896
    %v81 = vadd.s32 %v73, 1024
    %v82 = vadd.s32 %v73, 1152
    %v83 = vadd.s32 %v73, 1280
    %v84 = vadd.s32 %v73, 1408
    %v85 = vadd.s32 %v73, 1536
    %v86 = vadd.s32 %v73, 1664
    %v87 = vadd.s32 %v73, 1792
    %v88 = vadd.s32 %v73, 1920
    %v89 = vadd.s32 %v73, 2048
    %v90 = vadd.s32 %v73, 2176
    %v91 = vadd.s32 %v73, 2304
    %v92 = vadd.s32 %v73, 2432
    %v93 = vadd.s32 %v73, 2560
    %v94 = vadd.s32 %v73, 2688
    %v95 = vadd.s32 %v73, 2816
    %v96 = vadd.s32 %v73, 2944
    %v97 = vadd.s32 %v73, 3072
    %v98 = vadd.s32 %v73, 3200
    %v99 = vadd.s32 %v73, 3328
    %v100 = vadd.s32 %v73, 3456
    %v101 = vadd.s32 %v73, 3584
    %v102 = vadd.s32 %v73, 3712
    %v103 = vadd.s32 %v73, 3840
    %v104 = vadd.s32 %v73, 3968
    %v105 = vadd.s32 %v73, 4096
    %v106 = vadd.s32 %v73, 4224
    %v107 = vadd.s32 %v73, 4352
    %v108 = vadd.s32 %v73, 4480
    %v109 = vadd.s32 %v73, 4608
    %v110 = vadd.s32 %v73, 4736
    %v111 = vadd.s32 %v73, 4864
    %v112 = vadd.s32 %v73, 4992
    %v113 = vadd.s32 %v73, 5120
    %v114 = vadd.s32 %v73, 5248
    %v115 = vadd.s32 %v73, 5376
    %v116 = vadd.s32 %v73, 5504
    %v117 = vadd.s32 %v73, 5632
    %v118 = vadd.s32 %v73, 5760
    %v119 = vadd.s32 %v73, 5888
    %v120 = vadd.s32 %v73, 6016
    %v121 = vadd.s32 %v73, 6144
    %v122 = vadd.s32 %v73, 6272
    %v123 = vadd.s32 %v73, 6400
    %v124 = vadd.s32 %v73, 6528
    %v125 = vadd.s32 %v73, 6656
    %v126 = vadd.s32 %v73, 6784
    %v127 = vadd.s32 %v73, 6912
    %v128 = vadd.s32 %v73, 7040
    %v129 = vadd.s32 %v73, 7168
    %v130 = vadd.s32 %v73, 7296
    %v131 = vadd.s32 %v73, 7424
    %v132 = vadd.s32 %v73, 7552
    %v133 = vadd.s32 %v73, 7680
    %v134 = vadd.s32 %v73, 7808
    %v135 = vadd.s32 %v73, 7936
    %v136 = vadd.s32 %v73, 8064
    %v137 = vadd.s32 %v73, 8192
    %v138 = vadd.s32 %v73, 8320
    %v139 = vadd.s32 %v73, 8448
    %v140 = vadd.s32 %v73, 8576
    %v141 = vadd.s32 %v73, 8704
    %v142 = vadd.s32 %v73, 8832
    %v143 = vadd.s32 %v73, 8960
    %v144 = vadd.s32 %v73, 9088
    %v145 = vadd.s32 %v73, 9216
    %v146 = vadd.s32 %v73, 9344
    %v147 = vadd.s32 %v73, 9472
    %v148 = vadd.s32 %v73, 9600
    %v149 = vadd.s32 %v73, 9728
    %v150 = vadd.s32 %v73, 9856
    %v151 = vadd.s32 %v73, 9984
    %v152 = vadd.s32 %v73, 10112
    %v153 = vadd.s32 %v73, 10240
    %v154 = vadd.s32 %v73, 10368
    %v155 = vadd.s32 %v73, 10496
    %v156 = vadd.s32 %v73, 10624
    %v157 = vadd.s32 %v73, 10752
    %v158 = vadd.s32 %v73, 10880
    %v159 = vadd.s32 %v73, 11008
    %v160 = vadd.s32 %v73, 11136
    %v161 = vadd.s32 %v73, 11264
    %v162 = vadd.s32 %v73, 11392
    %v163 = vadd.s32 %v73, 11520
    %v164 = vadd.s32 %v73, 11648
    %v165 = vadd.s32 %v73, 11776
    %v166 = vadd.s32 %v73, 11904
    %v167 = vadd.s32 %v73, 12032
    %v168 = vadd.s32 %v73, 12160
    %v169 = vadd.s32 %v73, 12288
    %v170 = vadd.s32 %v73, 12416
    %v171 = vadd.s32 %v73, 12544
    %v172 = vadd.s32 %v73, 12672
    %v173 = vadd.s32 %v73, 12800
    %v174 = vadd.s32 %v73, 12928
    %v175 = vadd.s32 %v73, 13056
    %v176 = vadd.s32 %v73, 13184
    %v177 = vadd.s32 %v73, 13312
    %v178 = vadd.s32 %v73, 13440
    %v179 = vadd.s32 %v73, 13568
    %v180 = vadd.s32 %v73, 13696
    %v181 = vadd.s32 %v73, 13824
    %v182 = vadd.s32 %v73, 13952
    %vm183 = vcmp.lt.s32.totalorder %v73, 14009
    %vm184 = vcmp.lt.s32.totalorder %v74, 14009
    %vm185 = vcmp.lt.s32.totalorder %v75, 14009
    %vm186 = vcmp.lt.s32.totalorder %v76, 14009
    %vm187 = vcmp.lt.s32.totalorder %v77, 14009
    %vm188 = vcmp.lt.s32.totalorder %v78, 14009
    %vm189 = vcmp.lt.s32.totalorder %v79, 14009
    %vm190 = vcmp.lt.s32.totalorder %v80, 14009
    %vm191 = vcmp.lt.s32.totalorder %v81, 14009
    %vm192 = vcmp.lt.s32.totalorder %v82, 14009
    %vm193 = vcmp.lt.s32.totalorder %v83, 14009
    %vm194 = vcmp.lt.s32.totalorder %v84, 14009
    %vm195 = vcmp.lt.s32.totalorder %v85, 14009
    %vm196 = vcmp.lt.s32.totalorder %v86, 14009
    %vm197 = vcmp.lt.s32.totalorder %v87, 14009
    %vm198 = vcmp.lt.s32.totalorder %v88, 14009
    %vm199 = vcmp.lt.s32.totalorder %v89, 14009
    %vm200 = vcmp.lt.s32.totalorder %v90, 14009
    %vm201 = vcmp.lt.s32.totalorder %v91, 14009
    %vm202 = vcmp.lt.s32.totalorder %v92, 14009
    %vm203 = vcmp.lt.s32.totalorder %v93, 14009
    %vm204 = vcmp.lt.s32.totalorder %v94, 14009
    %vm205 = vcmp.lt.s32.totalorder %v95, 14009
    %vm206 = vcmp.lt.s32.totalorder %v96, 14009
    %vm207 = vcmp.lt.s32.totalorder %v97, 14009
    %vm208 = vcmp.lt.s32.totalorder %v98, 14009
    %vm209 = vcmp.lt.s32.totalorder %v99, 14009
    %vm210 = vcmp.lt.s32.totalorder %v100, 14009
    %vm211 = vcmp.lt.s32.totalorder %v101, 14009
    %vm212 = vcmp.lt.s32.totalorder %v102, 14009
    %vm213 = vcmp.lt.s32.totalorder %v103, 14009
    %vm214 = vcmp.lt.s32.totalorder %v104, 14009
    %vm215 = vcmp.lt.s32.totalorder %v105, 14009
    %vm216 = vcmp.lt.s32.totalorder %v106, 14009
    %vm217 = vcmp.lt.s32.totalorder %v107, 14009
    %vm218 = vcmp.lt.s32.totalorder %v108, 14009
    %vm219 = vcmp.lt.s32.totalorder %v109, 14009
    %vm220 = vcmp.lt.s32.totalorder %v110, 14009
    %vm221 = vcmp.lt.s32.totalorder %v111, 14009
    %vm222 = vcmp.lt.s32.totalorder %v112, 14009
    %vm223 = vcmp.lt.s32.totalorder %v113, 14009
    %vm224 = vcmp.lt.s32.totalorder %v114, 14009
    %vm225 = vcmp.lt.s32.totalorder %v115, 14009
    %vm226 = vcmp.lt.s32.totalorder %v116, 14009
    %vm227 = vcmp.lt.s32.totalorder %v117, 14009
    %vm228 = vcmp.lt.s32.totalorder %v118, 14009
    %vm229 = vcmp.lt.s32.totalorder %v119, 14009
    %vm230 = vcmp.lt.s32.totalorder %v120, 14009
    %vm231 = vcmp.lt.s32.totalorder %v121, 14009
    %vm232 = vcmp.lt.s32.totalorder %v122, 14009
    %vm233 = vcmp.lt.s32.totalorder %v123, 14009
    %vm234 = vcmp.lt.s32.totalorder %v124, 14009
    %vm235 = vcmp.lt.s32.totalorder %v125, 14009
    %vm236 = vcmp.lt.s32.totalorder %v126, 14009
    %vm237 = vcmp.lt.s32.totalorder %v127, 14009
    %vm238 = vcmp.lt.s32.totalorder %v128, 14009
    %vm239 = vcmp.lt.s32.totalorder %v129, 14009
    %vm240 = vcmp.lt.s32.totalorder %v130, 14009
    %vm241 = vcmp.lt.s32.totalorder %v131, 14009
    %vm242 = vcmp.lt.s32.totalorder %v132, 14009
    %vm243 = vcmp.lt.s32.totalorder %v133, 14009
    %vm244 = vcmp.lt.s32.totalorder %v134, 14009
    %vm245 = vcmp.lt.s32.totalorder %v135, 14009
    %vm246 = vcmp.lt.s32.totalorder %v136, 14009
    %vm247 = vcmp.lt.s32.totalorder %v137, 14009
    %vm248 = vcmp.lt.s32.totalorder %v138, 14009
    %vm249 = vcmp.lt.s32.totalorder %v139, 14009
    %vm250 = vcmp.lt.s32.totalorder %v140, 14009
    %vm251 = vcmp.lt.s32.totalorder %v141, 14009
    %vm252 = vcmp.lt.s32.totalorder %v142, 14009
    %vm253 = vcmp.lt.s32.totalorder %v143, 14009
    %vm254 = vcmp.lt.s32.totalorder %v144, 14009
    %vm255 = vcmp.lt.s32.totalorder %v145, 14009
    %vm256 = vcmp.lt.s32.totalorder %v146, 14009
    %vm257 = vcmp.lt.s32.totalorder %v147, 14009
    %vm258 = vcmp.lt.s32.totalorder %v148, 14009
    %vm259 = vcmp.lt.s32.totalorder %v149, 14009
    %vm260 = vcmp.lt.s32.totalorder %v150, 14009
    %vm261 = vcmp.lt.s32.totalorder %v151, 14009
    %vm262 = vcmp.lt.s32.totalorder %v152, 14009
    %vm263 = vcmp.lt.s32.totalorder %v153, 14009
    %vm264 = vcmp.lt.s32.totalorder %v154, 14009
    %vm265 = vcmp.lt.s32.totalorder %v155, 14009
    %vm266 = vcmp.lt.s32.totalorder %v156, 14009
    %vm267 = vcmp.lt.s32.totalorder %v157, 14009
    %vm268 = vcmp.lt.s32.totalorder %v158, 14009
    %vm269 = vcmp.lt.s32.totalorder %v159, 14009
    %vm270 = vcmp.lt.s32.totalorder %v160, 14009
    %vm271 = vcmp.lt.s32.totalorder %v161, 14009
    %vm272 = vcmp.lt.s32.totalorder %v162, 14009
    %vm273 = vcmp.lt.s32.totalorder %v163, 14009
    %vm274 = vcmp.lt.s32.totalorder %v164, 14009
    %vm275 = vcmp.lt.s32.totalorder %v165, 14009
    %vm276 = vcmp.lt.s32.totalorder %v166, 14009
    %vm277 = vcmp.lt.s32.totalorder %v167, 14009
    %vm278 = vcmp.lt.s32.totalorder %v168, 14009
    %vm279 = vcmp.lt.s32.totalorder %v169, 14009
    %vm280 = vcmp.lt.s32.totalorder %v170, 14009
    %vm281 = vcmp.lt.s32.totalorder %v171, 14009
    %vm282 = vcmp.lt.s32.totalorder %v172, 14009
    %vm283 = vcmp.lt.s32.totalorder %v173, 14009
    %vm284 = vcmp.lt.s32.totalorder %v174, 14009
    %vm285 = vcmp.lt.s32.totalorder %v175, 14009
    %vm286 = vcmp.lt.s32.totalorder %v176, 14009
    %vm287 = vcmp.lt.s32.totalorder %v177, 14009
    %vm288 = vcmp.lt.s32.totalorder %v178, 14009
    %vm289 = vcmp.lt.s32.totalorder %v179, 14009
    %vm290 = vcmp.lt.s32.totalorder %v180, 14009
    %vm291 = vcmp.lt.s32.totalorder %v181, 14009
    %vm292 = vcmp.lt.s32.totalorder %v182, 14009
    %v293 = vld [vmem:[#allocation3] sm:$0xff]
    %v294 = vld [vmem:[#allocation3 + $0x8] sm:$0xff]
    %v295 = vld [vmem:[#allocation3 + $0x10] sm:$0xff]
    %v296 = vld [vmem:[#allocation3 + $0x18] sm:$0xff]
    %v297 = vld [vmem:[#allocation3 + $0x20] sm:$0xff]
    %v298 = vld [vmem:[#allocation3 + $0x28] sm:$0xff]
    %v299 = vld [vmem:[#allocation3 + $0x30] sm:$0xff]
    %v300 = vld [vmem:[#allocation3 + $0x38] sm:$0xff]
    %v301 = vld [vmem:[#allocation3 + $0x40] sm:$0xff]
    %v302 = vld [vmem:[#allocation3 + $0x48] sm:$0xff]
    %v303 = vld [vmem:[#allocation3 + $0x50] sm:$0xff]
    %v304 = vld [vmem:[#allocation3 + $0x58] sm:$0xff]
    %v305 = vld [vmem:[#allocation3 + $0x60] sm:$0xff]
    %v306 = vld [vmem:[#allocation3 + $0x68] sm:$0xff]
    %v307 = vld [vmem:[#allocation3 + $0x70] sm:$0xff]
    %v308 = vld [vmem:[#allocation3 + $0x78] sm:$0xff]
    %v309 = vld [vmem:[#allocation3 + $0x80] sm:$0xff]
    %v310 = vld [vmem:[#allocation3 + $0x88] sm:$0xff]
    %v311 = vld [vmem:[#allocation3 + $0x90] sm:$0xff]
    %v312 = vld [vmem:[#allocation3 + $0x98] sm:$0xff]
    %v313 = vld [vmem:[#allocation3 + $0xa0] sm:$0xff]
    %v314 = vld [vmem:[#allocation3 + $0xa8] sm:$0xff]
    %v315 = vld [vmem:[#allocation3 + $0xb0] sm:$0xff]
    %v316 = vld [vmem:[#allocation3 + $0xb8] sm:$0xff]
    %v317 = vld [vmem:[#allocation3 + $0xc0] sm:$0xff]
    %v318 = vld [vmem:[#allocation3 + $0xc8] sm:$0xff]
    %v319 = vld [vmem:[#allocation3 + $0xd0] sm:$0xff]
    %v320 = vld [vmem:[#allocation3 + $0xd8] sm:$0xff]
    %v321 = vld [vmem:[#allocation3 + $0xe0] sm:$0xff]
    %v322 = vld [vmem:[#allocation3 + $0xe8] sm:$0xff]
    %v323 = vld [vmem:[#allocation3 + $0xf0] sm:$0xff]
    %v324 = vld [vmem:[#allocation3 + $0xf8] sm:$0xff]
    %v325 = vld [vmem:[#allocation3 + $0x100] sm:$0xff]
    %v326 = vld [vmem:[#allocation3 + $0x108] sm:$0xff]
    %v327 = vld [vmem:[#allocation3 + $0x110] sm:$0xff]
    %v328 = vld [vmem:[#allocation3 + $0x118] sm:$0xff]
    %v329 = vld [vmem:[#allocation3 + $0x120] sm:$0xff]
    %v330 = vld [vmem:[#allocation3 + $0x128] sm:$0xff]
    %v331 = vld [vmem:[#allocation3 + $0x130] sm:$0xff]
    %v332 = vld [vmem:[#allocation3 + $0x138] sm:$0xff]
    %v333 = vld [vmem:[#allocation3 + $0x140] sm:$0xff]
    %v334 = vld [vmem:[#allocation3 + $0x148] sm:$0xff]
    %v335 = vld [vmem:[#allocation3 + $0x150] sm:$0xff]
    %v336 = vld [vmem:[#allocation3 + $0x158] sm:$0xff]
    %v337 = vld [vmem:[#allocation3 + $0x160] sm:$0xff]
    %v338 = vld [vmem:[#allocation3 + $0x168] sm:$0xff]
    %v339 = vld [vmem:[#allocation3 + $0x170] sm:$0xff]
    %v340 = vld [vmem:[#allocation3 + $0x178] sm:$0xff]
    %v341 = vld [vmem:[#allocation3 + $0x180] sm:$0xff]
    %v342 = vld [vmem:[#allocation3 + $0x188] sm:$0xff]
    %v343 = vld [vmem:[#allocation3 + $0x190] sm:$0xff]
    %v344 = vld [vmem:[#allocation3 + $0x198] sm:$0xff]
    %v345 = vld [vmem:[#allocation3 + $0x1a0] sm:$0xff]
    %v346 = vld [vmem:[#allocation3 + $0x1a8] sm:$0xff]
    %v347 = vld [vmem:[#allocation3 + $0x1b0] sm:$0xff]
    %v403 = vcombine.high %v293, %v293
    %v404 = vcombine.high %v294, %v294
    %v405 = vcombine.high %v295, %v295
    %v406 = vcombine.high %v296, %v296
    %v407 = vcombine.high %v297, %v297
    %v408 = vcombine.high %v298, %v298
    %v409 = vcombine.high %v299, %v299
    %v410 = vcombine.high %v300, %v300
    %v411 = vcombine.high %v301, %v301
    %v412 = vcombine.high %v302, %v302
    %v413 = vcombine.high %v303, %v303
    %v414 = vcombine.high %v304, %v304
    %v415 = vcombine.high %v305, %v305
    %v416 = vcombine.high %v306, %v306
    %v417 = vcombine.high %v307, %v307
    %v418 = vcombine.high %v308, %v308
    %v419 = vcombine.high %v309, %v309
    %v420 = vcombine.high %v310, %v310
    %v421 = vcombine.high %v311, %v311
    %v422 = vcombine.high %v312, %v312
    %v423 = vcombine.high %v313, %v313
    %v424 = vcombine.high %v314, %v314
    %v425 = vcombine.high %v315, %v315
    %v426 = vcombine.high %v316, %v316
    %v427 = vcombine.high %v317, %v317
    %v428 = vcombine.high %v318, %v318
    %v429 = vcombine.high %v319, %v319
    %v430 = vcombine.high %v320, %v320
    %v431 = vcombine.high %v321, %v321
    %v432 = vcombine.high %v322, %v322
    %v433 = vcombine.high %v323, %v323
    %v434 = vcombine.high %v324, %v324
    %v435 = vcombine.high %v325, %v325
    %v436 = vcombine.high %v326, %v326
    %v437 = vcombine.high %v327, %v327
    %v438 = vcombine.high %v328, %v328
    %v439 = vcombine.high %v329, %v329
    %v440 = vcombine.high %v330, %v330
    %v441 = vcombine.high %v331, %v331
    %v442 = vcombine.high %v332, %v332
    %v443 = vcombine.high %v333, %v333
    %v444 = vcombine.high %v334, %v334
    %v445 = vcombine.high %v335, %v335
    %v446 = vcombine.high %v336, %v336
    %v447 = vcombine.high %v337, %v337
    %v448 = vcombine.high %v338, %v338
    %v449 = vcombine.high %v339, %v339
    %v450 = vcombine.high %v340, %v340
    %v451 = vcombine.high %v341, %v341
    %v452 = vcombine.high %v342, %v342
    %v453 = vcombine.high %v343, %v343
    %v454 = vcombine.high %v344, %v344
    %v455 = vcombine.high %v345, %v345
    %v456 = vcombine.high %v346, %v346
    %v457 = vcombine.high %v347, %v347
    %v513 = vsel %vm183, %v293, 0.0
    %v514 = vsel %vm184, %v403, 0.0
    %v515 = vsel %vm185, %v294, 0.0
    %v516 = vsel %vm186, %v404, 0.0
    %v517 = vsel %vm187, %v295, 0.0
    %v518 = vsel %vm188, %v405, 0.0
    %v519 = vsel %vm189, %v296, 0.0
    %v520 = vsel %vm190, %v406, 0.0
    %v521 = vsel %vm191, %v297, 0.0
    %v522 = vsel %vm192, %v407, 0.0
    %v523 = vsel %vm193, %v298, 0.0
    %v524 = vsel %vm194, %v408, 0.0
    %v525 = vsel %vm195, %v299, 0.0
    %v526 = vsel %vm196, %v409, 0.0
    %v527 = vsel %vm197, %v300, 0.0
    %v528 = vsel %vm198, %v410, 0.0
    %v529 = vsel %vm199, %v301, 0.0
    %v530 = vsel %vm200, %v411, 0.0
    %v531 = vsel %vm201, %v302, 0.0
    %v532 = vsel %vm202, %v412, 0.0
    %v533 = vsel %vm203, %v303, 0.0
    %v534 = vsel %vm204, %v413, 0.0
    %v535 = vsel %vm205, %v304, 0.0
    %v536 = vsel %vm206, %v414, 0.0
    %v537 = vsel %vm207, %v305, 0.0
    %v538 = vsel %vm208, %v415, 0.0
    %v539 = vsel %vm209, %v306, 0.0
    %v540 = vsel %vm210, %v416, 0.0
    %v541 = vsel %vm211, %v307, 0.0
    %v542 = vsel %vm212, %v417, 0.0
    %v543 = vsel %vm213, %v308, 0.0
    %v544 = vsel %vm214, %v418, 0.0
    %v545 = vsel %vm215, %v309, 0.0
    %v546 = vsel %vm216, %v419, 0.0
    %v547 = vsel %vm217, %v310, 0.0
    %v548 = vsel %vm218, %v420, 0.0
    %v549 = vsel %vm219, %v311, 0.0
    %v550 = vsel %vm220, %v421, 0.0
    %v551 = vsel %vm221, %v312, 0.0
    %v552 = vsel %vm222, %v422, 0.0
    %v553 = vsel %vm223, %v313, 0.0
    %v554 = vsel %vm224, %v423, 0.0
    %v555 = vsel %vm225, %v314, 0.0
    %v556 = vsel %vm226, %v424, 0.0
    %v557 = vsel %vm227, %v315, 0.0
    %v558 = vsel %vm228, %v425, 0.0
    %v559 = vsel %vm229, %v316, 0.0
    %v560 = vsel %vm230, %v426, 0.0
    %v561 = vsel %vm231, %v317, 0.0
    %v562 = vsel %vm232, %v427, 0.0
    %v563 = vsel %vm233, %v318, 0.0
    %v564 = vsel %vm234, %v428, 0.0
    %v565 = vsel %vm235, %v319, 0.0
    %v566 = vsel %vm236, %v429, 0.0
    %v567 = vsel %vm237, %v320, 0.0
    %v568 = vsel %vm238, %v430, 0.0
    %v569 = vsel %vm239, %v321, 0.0
    %v570 = vsel %vm240, %v431, 0.0
    %v571 = vsel %vm241, %v322, 0.0
    %v572 = vsel %vm242, %v432, 0.0
    %v573 = vsel %vm243, %v323, 0.0
    %v574 = vsel %vm244, %v433, 0.0
    %v575 = vsel %vm245, %v324, 0.0
    %v576 = vsel %vm246, %v434, 0.0
    %v577 = vsel %vm247, %v325, 0.0
    %v578 = vsel %vm248, %v435, 0.0
    %v579 = vsel %vm249, %v326, 0.0
    %v580 = vsel %vm250, %v436, 0.0
    %v581 = vsel %vm251, %v327, 0.0
    %v582 = vsel %vm252, %v437, 0.0
    %v583 = vsel %vm253, %v328, 0.0
    %v584 = vsel %vm254, %v438, 0.0
    %v585 = vsel %vm255, %v329, 0.0
    %v586 = vsel %vm256, %v439, 0.0
    %v587 = vsel %vm257, %v330, 0.0
    %v588 = vsel %vm258, %v440, 0.0
    %v589 = vsel %vm259, %v331, 0.0
    %v590 = vsel %vm260, %v441, 0.0
    %v591 = vsel %vm261, %v332, 0.0
    %v592 = vsel %vm262, %v442, 0.0
    %v593 = vsel %vm263, %v333, 0.0
    %v594 = vsel %vm264, %v443, 0.0
    %v595 = vsel %vm265, %v334, 0.0
    %v596 = vsel %vm266, %v444, 0.0
    %v597 = vsel %vm267, %v335, 0.0
    %v598 = vsel %vm268, %v445, 0.0
    %v599 = vsel %vm269, %v336, 0.0
    %v600 = vsel %vm270, %v446, 0.0
    %v601 = vsel %vm271, %v337, 0.0
    %v602 = vsel %vm272, %v447, 0.0
    %v603 = vsel %vm273, %v338, 0.0
    %v604 = vsel %vm274, %v448, 0.0
    %v605 = vsel %vm275, %v339, 0.0
    %v606 = vsel %vm276, %v449, 0.0
    %v607 = vsel %vm277, %v340, 0.0
    %v608 = vsel %vm278, %v450, 0.0
    %v609 = vsel %vm279, %v341, 0.0
    %v610 = vsel %vm280, %v451, 0.0
    %v611 = vsel %vm281, %v342, 0.0
    %v612 = vsel %vm282, %v452, 0.0
    %v613 = vsel %vm283, %v343, 0.0
    %v614 = vsel %vm284, %v453, 0.0
    %v615 = vsel %vm285, %v344, 0.0
    %v616 = vsel %vm286, %v454, 0.0
    %v617 = vsel %vm287, %v345, 0.0
    %v618 = vsel %vm288, %v455, 0.0
    %v619 = vsel %vm289, %v346, 0.0
    %v620 = vsel %vm290, %v456, 0.0
    %v621 = vsel %vm291, %v347, 0.0
    %v622 = vsel %vm292, %v457, 0.0
    %v623 = vpack.c.bf16 %v513, %v513
    %v624 = vpack.c.bf16 %v514, %v514
    %v625 = vpack.c.bf16 %v515, %v515
    %v626 = vpack.c.bf16 %v516, %v516
    %v627 = vpack.c.bf16 %v517, %v517
    %v628 = vpack.c.bf16 %v518, %v518
    %v629 = vpack.c.bf16 %v519, %v519
    %v630 = vpack.c.bf16 %v520, %v520
    %v631 = vpack.c.bf16 %v521, %v521
    %v632 = vpack.c.bf16 %v522, %v522
    %v633 = vpack.c.bf16 %v523, %v523
    %v634 = vpack.c.bf16 %v524, %v524
    %v635 = vpack.c.bf16 %v525, %v525
    %v636 = vpack.c.bf16 %v526, %v526
    %v637 = vpack.c.bf16 %v527, %v527
    %v638 = vpack.c.bf16 %v528, %v528
    %v639 = vpack.c.bf16 %v529, %v529
    %v640 = vpack.c.bf16 %v530, %v530
    %v641 = vpack.c.bf16 %v531, %v531
    %v642 = vpack.c.bf16 %v532, %v532
    %v643 = vpack.c.bf16 %v533, %v533
    %v644 = vpack.c.bf16 %v534, %v534
    %v645 = vpack.c.bf16 %v535, %v535
    %v646 = vpack.c.bf16 %v536, %v536
    %v647 = vpack.c.bf16 %v537, %v537
    %v648 = vpack.c.bf16 %v538, %v538
    %v649 = vpack.c.bf16 %v539, %v539
    %v650 = vpack.c.bf16 %v540, %v540
    %v651 = vpack.c.bf16 %v541, %v541
    %v652 = vpack.c.bf16 %v542, %v542
    %v653 = vpack.c.bf16 %v543, %v543
    %v654 = vpack.c.bf16 %v544, %v544
    %v655 = vpack.c.bf16 %v545, %v545
    %v656 = vpack.c.bf16 %v546, %v546
    %v657 = vpack.c.bf16 %v547, %v547
    %v658 = vpack.c.bf16 %v548, %v548
    %v659 = vpack.c.bf16 %v549, %v549
    %v660 = vpack.c.bf16 %v550, %v550
    %v661 = vpack.c.bf16 %v551, %v551
    %v662 = vpack.c.bf16 %v552, %v552
    %v663 = vpack.c.bf16 %v553, %v553
    %v664 = vpack.c.bf16 %v554, %v554
    %v665 = vpack.c.bf16 %v555, %v555
    %v666 = vpack.c.bf16 %v556, %v556
    %v667 = vpack.c.bf16 %v557, %v557
    %v668 = vpack.c.bf16 %v558, %v558
    %v669 = vpack.c.bf16 %v559, %v559
    %v670 = vpack.c.bf16 %v560, %v560
    %v671 = vpack.c.bf16 %v561, %v561
    %v672 = vpack.c.bf16 %v562, %v562
    %v673 = vpack.c.bf16 %v563, %v563
    %v674 = vpack.c.bf16 %v564, %v564
    %v675 = vpack.c.bf16 %v565, %v565
    %v676 = vpack.c.bf16 %v566, %v566
    %v677 = vpack.c.bf16 %v567, %v567
    %v678 = vpack.c.bf16 %v568, %v568
    %v679 = vpack.c.bf16 %v569, %v569
    %v680 = vpack.c.bf16 %v570, %v570
    %v681 = vpack.c.bf16 %v571, %v571
    %v682 = vpack.c.bf16 %v572, %v572
    %v683 = vpack.c.bf16 %v573, %v573
    %v684 = vpack.c.bf16 %v574, %v574
    %v685 = vpack.c.bf16 %v575, %v575
    %v686 = vpack.c.bf16 %v576, %v576
    %v687 = vpack.c.bf16 %v577, %v577
    %v688 = vpack.c.bf16 %v578, %v578
    %v689 = vpack.c.bf16 %v579, %v579
    %v690 = vpack.c.bf16 %v580, %v580
    %v691 = vpack.c.bf16 %v581, %v581
    %v692 = vpack.c.bf16 %v582, %v582
    %v693 = vpack.c.bf16 %v583, %v583
    %v694 = vpack.c.bf16 %v584, %v584
    %v695 = vpack.c.bf16 %v585, %v585
    %v696 = vpack.c.bf16 %v586, %v586
    %v697 = vpack.c.bf16 %v587, %v587
    %v698 = vpack.c.bf16 %v588, %v588
    %v699 = vpack.c.bf16 %v589, %v589
    %v700 = vpack.c.bf16 %v590, %v590
    %v701 = vpack.c.bf16 %v591, %v591
    %v702 = vpack.c.bf16 %v592, %v592
    %v703 = vpack.c.bf16 %v593, %v593
    %v704 = vpack.c.bf16 %v594, %v594
    %v705 = vpack.c.bf16 %v595, %v595
    %v706 = vpack.c.bf16 %v596, %v596
    %v707 = vpack.c.bf16 %v597, %v597
    %v708 = vpack.c.bf16 %v598, %v598
    %v709 = vpack.c.bf16 %v599, %v599
    %v710 = vpack.c.bf16 %v600, %v600
    %v711 = vpack.c.bf16 %v601, %v601
    %v712 = vpack.c.bf16 %v602, %v602
    %v713 = vpack.c.bf16 %v603, %v603
    %v714 = vpack.c.bf16 %v604, %v604
    %v715 = vpack.c.bf16 %v605, %v605
    %v716 = vpack.c.bf16 %v606, %v606
    %v717 = vpack.c.bf16 %v607, %v607
    %v718 = vpack.c.bf16 %v608, %v608
    %v719 = vpack.c.bf16 %v609, %v609
    %v720 = vpack.c.bf16 %v610, %v610
    %v721 = vpack.c.bf16 %v611, %v611
    %v722 = vpack.c.bf16 %v612, %v612
    %v723 = vpack.c.bf16 %v613, %v613
    %v724 = vpack.c.bf16 %v614, %v614
    %v725 = vpack.c.bf16 %v615, %v615
    %v726 = vpack.c.bf16 %v616, %v616
    %v727 = vpack.c.bf16 %v617, %v617
    %v728 = vpack.c.bf16 %v618, %v618
    %v729 = vpack.c.bf16 %v619, %v619
    %v730 = vpack.c.bf16 %v620, %v620
    %v731 = vpack.c.bf16 %v621, %v621
    %v732 = vpack.c.bf16 %v622, %v622
    %v733 = vld [vmem:[#allocation5] sm:$0xff]
    %v734 = vld [vmem:[#allocation5 + $0x8] sm:$0xff]
    %v735 = vld [vmem:[#allocation5 + $0x10] sm:$0xff]
    %v736 = vld [vmem:[#allocation5 + $0x18] sm:$0xff]
    %v737 = vld [vmem:[#allocation5 + $0x20] sm:$0xff]
    %v738 = vld [vmem:[#allocation5 + $0x28] sm:$0xff]
    %v739 = vld [vmem:[#allocation5 + $0x30] sm:$0xff]
    %v740 = vld [vmem:[#allocation5 + $0x38] sm:$0xff]
    %v741 = vld [vmem:[#allocation5 + $0x40] sm:$0xff]
    %v742 = vld [vmem:[#allocation5 + $0x48] sm:$0xff]
    %v743 = vld [vmem:[#allocation5 + $0x50] sm:$0xff]
    %v744 = vld [vmem:[#allocation5 + $0x58] sm:$0xff]
    %v745 = vld [vmem:[#allocation5 + $0x60] sm:$0xff]
    %v746 = vld [vmem:[#allocation5 + $0x68] sm:$0xff]
    %v747 = vld [vmem:[#allocation5 + $0x70] sm:$0xff]
    %v748 = vld [vmem:[#allocation5 + $0x78] sm:$0xff]
    %v749 = vld [vmem:[#allocation5 + $0x80] sm:$0xff]
    %v750 = vld [vmem:[#allocation5 + $0x88] sm:$0xff]
    %v751 = vld [vmem:[#allocation5 + $0x90] sm:$0xff]
    %v752 = vld [vmem:[#allocation5 + $0x98] sm:$0xff]
    %v753 = vld [vmem:[#allocation5 + $0xa0] sm:$0xff]
    %v754 = vld [vmem:[#allocation5 + $0xa8] sm:$0xff]
    %v755 = vld [vmem:[#allocation5 + $0xb0] sm:$0xff]
    %v756 = vld [vmem:[#allocation5 + $0xb8] sm:$0xff]
    %v757 = vld [vmem:[#allocation5 + $0xc0] sm:$0xff]
    %v758 = vld [vmem:[#allocation5 + $0xc8] sm:$0xff]
    %v759 = vld [vmem:[#allocation5 + $0xd0] sm:$0xff]
    %v760 = vld [vmem:[#allocation5 + $0xd8] sm:$0xff]
    %v761 = vld [vmem:[#allocation5 + $0xe0] sm:$0xff]
    %v762 = vld [vmem:[#allocation5 + $0xe8] sm:$0xff]
    %v763 = vld [vmem:[#allocation5 + $0xf0] sm:$0xff]
    %v764 = vld [vmem:[#allocation5 + $0xf8] sm:$0xff]
    %v765 = vld [vmem:[#allocation5 + $0x100] sm:$0xff]
    %v766 = vld [vmem:[#allocation5 + $0x108] sm:$0xff]
    %v767 = vld [vmem:[#allocation5 + $0x110] sm:$0xff]
    %v768 = vld [vmem:[#allocation5 + $0x118] sm:$0xff]
    %v769 = vld [vmem:[#allocation5 + $0x120] sm:$0xff]
    %v770 = vld [vmem:[#allocation5 + $0x128] sm:$0xff]
    %v771 = vld [vmem:[#allocation5 + $0x130] sm:$0xff]
    %v772 = vld [vmem:[#allocation5 + $0x138] sm:$0xff]
    %v773 = vld [vmem:[#allocation5 + $0x140] sm:$0xff]
    %v774 = vld [vmem:[#allocation5 + $0x148] sm:$0xff]
    %v775 = vld [vmem:[#allocation5 + $0x150] sm:$0xff]
    %v776 = vld [vmem:[#allocation5 + $0x158] sm:$0xff]
    %v777 = vld [vmem:[#allocation5 + $0x160] sm:$0xff]
    %v778 = vld [vmem:[#allocation5 + $0x168] sm:$0xff]
    %v779 = vld [vmem:[#allocation5 + $0x170] sm:$0xff]
    %v780 = vld [vmem:[#allocation5 + $0x178] sm:$0xff]
    %v781 = vld [vmem:[#allocation5 + $0x180] sm:$0xff]
    %v782 = vld [vmem:[#allocation5 + $0x188] sm:$0xff]
    %v783 = vld [vmem:[#allocation5 + $0x190] sm:$0xff]
    %v784 = vld [vmem:[#allocation5 + $0x198] sm:$0xff]
    %v785 = vld [vmem:[#allocation5 + $0x1a0] sm:$0xff]
    %v786 = vld [vmem:[#allocation5 + $0x1a8] sm:$0xff]
    %v787 = vld [vmem:[#allocation5 + $0x1b0] sm:$0xff]
    %v788 = vld [vmem:[#allocation5 + $0x1b8] sm:$0xff]
    %v789 = vld [vmem:[#allocation5 + $0x1c0] sm:$0xff]
    %v790 = vld [vmem:[#allocation5 + $0x1c8] sm:$0xff]
    %v791 = vld [vmem:[#allocation5 + $0x1d0] sm:$0xff]
    %v792 = vld [vmem:[#allocation5 + $0x1d8] sm:$0xff]
    %v793 = vld [vmem:[#allocation5 + $0x1e0] sm:$0xff]
    %v794 = vld [vmem:[#allocation5 + $0x1e8] sm:$0xff]
    %v795 = vld [vmem:[#allocation5 + $0x1f0] sm:$0xff]
    %v796 = vld [vmem:[#allocation5 + $0x1f8] sm:$0xff]
    %v797 = vld [vmem:[#allocation5 + $0x200] sm:$0xff]
    %v798 = vld [vmem:[#allocation5 + $0x208] sm:$0xff]
    %v799 = vld [vmem:[#allocation5 + $0x210] sm:$0xff]
    %v800 = vld [vmem:[#allocation5 + $0x218] sm:$0xff]
    %v801 = vld [vmem:[#allocation5 + $0x220] sm:$0xff]
    %v802 = vld [vmem:[#allocation5 + $0x228] sm:$0xff]
    %v803 = vld [vmem:[#allocation5 + $0x230] sm:$0xff]
    %v804 = vld [vmem:[#allocation5 + $0x238] sm:$0xff]
    %v805 = vld [vmem:[#allocation5 + $0x240] sm:$0xff]
    %v806 = vld [vmem:[#allocation5 + $0x248] sm:$0xff]
    %v807 = vld [vmem:[#allocation5 + $0x250] sm:$0xff]
    %v808 = vld [vmem:[#allocation5 + $0x258] sm:$0xff]
    %v809 = vld [vmem:[#allocation5 + $0x260] sm:$0xff]
    %v810 = vld [vmem:[#allocation5 + $0x268] sm:$0xff]
    %v811 = vld [vmem:[#allocation5 + $0x270] sm:$0xff]
    %v812 = vld [vmem:[#allocation5 + $0x278] sm:$0xff]
    %v813 = vld [vmem:[#allocation5 + $0x280] sm:$0xff]
    %v814 = vld [vmem:[#allocation5 + $0x288] sm:$0xff]
    %v815 = vld [vmem:[#allocation5 + $0x290] sm:$0xff]
    %v816 = vld [vmem:[#allocation5 + $0x298] sm:$0xff]
    %v817 = vld [vmem:[#allocation5 + $0x2a0] sm:$0xff]
    %v818 = vld [vmem:[#allocation5 + $0x2a8] sm:$0xff]
    %v819 = vld [vmem:[#allocation5 + $0x2b0] sm:$0xff]
    %v820 = vld [vmem:[#allocation5 + $0x2b8] sm:$0xff]
    %v821 = vld [vmem:[#allocation5 + $0x2c0] sm:$0xff]
    %v822 = vld [vmem:[#allocation5 + $0x2c8] sm:$0xff]
    %v823 = vld [vmem:[#allocation5 + $0x2d0] sm:$0xff]
    %v824 = vld [vmem:[#allocation5 + $0x2d8] sm:$0xff]
    %v825 = vld [vmem:[#allocation5 + $0x2e0] sm:$0xff]
    %v826 = vld [vmem:[#allocation5 + $0x2e8] sm:$0xff]
    %v827 = vld [vmem:[#allocation5 + $0x2f0] sm:$0xff]
    %v828 = vld [vmem:[#allocation5 + $0x2f8] sm:$0xff]
    %v829 = vld [vmem:[#allocation5 + $0x300] sm:$0xff]
    %v830 = vld [vmem:[#allocation5 + $0x308] sm:$0xff]
    %v831 = vld [vmem:[#allocation5 + $0x310] sm:$0xff]
    %v832 = vld [vmem:[#allocation5 + $0x318] sm:$0xff]
    %v833 = vld [vmem:[#allocation5 + $0x320] sm:$0xff]
    %v834 = vld [vmem:[#allocation5 + $0x328] sm:$0xff]
    %v835 = vld [vmem:[#allocation5 + $0x330] sm:$0xff]
    %v836 = vld [vmem:[#allocation5 + $0x338] sm:$0xff]
    %v837 = vld [vmem:[#allocation5 + $0x340] sm:$0xff]
    %v838 = vld [vmem:[#allocation5 + $0x348] sm:$0xff]
    %v839 = vld [vmem:[#allocation5 + $0x350] sm:$0xff]
    %v840 = vld [vmem:[#allocation5 + $0x358] sm:$0xff]
    %v841 = vld [vmem:[#allocation5 + $0x360] sm:$0xff]
    %v842 = vld [vmem:[#allocation5 + $0x368] sm:$0xff]
    %v843 = vld [vmem:[#allocation5 + $0x370] sm:$0xff]
    %v844 = vld [vmem:[#allocation5 + $0x378] sm:$0xff]
    %v845 = vld [vmem:[#allocation5 + $0x380] sm:$0xff]
    %v846 = vld [vmem:[#allocation5 + $0x388] sm:$0xff]
    %v847 = vld [vmem:[#allocation5 + $0x390] sm:$0xff]
    %v848 = vld [vmem:[#allocation5 + $0x398] sm:$0xff]
    %v849 = vld [vmem:[#allocation5 + $0x3a0] sm:$0xff]
    %v850 = vld [vmem:[#allocation5 + $0x3a8] sm:$0xff]
    %v851 = vld [vmem:[#allocation5 + $0x3b0] sm:$0xff]
    %v852 = vld [vmem:[#allocation5 + $0x3b8] sm:$0xff]
    %v853 = vld [vmem:[#allocation5 + $0x3c0] sm:$0xff]
    %v854 = vld [vmem:[#allocation5 + $0x3c8] sm:$0xff]
    %v855 = vld [vmem:[#allocation5 + $0x3d0] sm:$0xff]
    %v856 = vld [vmem:[#allocation5 + $0x3d8] sm:$0xff]
    %v857 = vld [vmem:[#allocation5 + $0x3e0] sm:$0xff]
    %v858 = vld [vmem:[#allocation5 + $0x3e8] sm:$0xff]
    %v859 = vld [vmem:[#allocation5 + $0x3f0] sm:$0xff]
    %v860 = vld [vmem:[#allocation5 + $0x3f8] sm:$0xff]
    %v861 = vld [vmem:[#allocation5 + $0x400] sm:$0xff]
    %v862 = vld [vmem:[#allocation5 + $0x408] sm:$0xff]
    %v863 = vld [vmem:[#allocation5 + $0x410] sm:$0xff]
    %v864 = vld [vmem:[#allocation5 + $0x418] sm:$0xff]
    %v865 = vld [vmem:[#allocation5 + $0x420] sm:$0xff]
    %v866 = vld [vmem:[#allocation5 + $0x428] sm:$0xff]
    %v867 = vld [vmem:[#allocation5 + $0x430] sm:$0xff]
    %v868 = vld [vmem:[#allocation5 + $0x438] sm:$0xff]
    %v869 = vld [vmem:[#allocation5 + $0x440] sm:$0xff]
    %v870 = vld [vmem:[#allocation5 + $0x448] sm:$0xff]
    %v871 = vld [vmem:[#allocation5 + $0x450] sm:$0xff]
    %v872 = vld [vmem:[#allocation5 + $0x458] sm:$0xff]
    %v873 = vld [vmem:[#allocation5 + $0x460] sm:$0xff]
    %v874 = vld [vmem:[#allocation5 + $0x468] sm:$0xff]
    %v875 = vld [vmem:[#allocation5 + $0x470] sm:$0xff]
    %v876 = vld [vmem:[#allocation5 + $0x478] sm:$0xff]
    %v877 = vld [vmem:[#allocation5 + $0x480] sm:$0xff]
    %v878 = vld [vmem:[#allocation5 + $0x488] sm:$0xff]
    %v879 = vld [vmem:[#allocation5 + $0x490] sm:$0xff]
    %v880 = vld [vmem:[#allocation5 + $0x498] sm:$0xff]
    %v881 = vld [vmem:[#allocation5 + $0x4a0] sm:$0xff]
    %v882 = vld [vmem:[#allocation5 + $0x4a8] sm:$0xff]
    %v883 = vld [vmem:[#allocation5 + $0x4b0] sm:$0xff]
    %v884 = vld [vmem:[#allocation5 + $0x4b8] sm:$0xff]
    %v885 = vld [vmem:[#allocation5 + $0x4c0] sm:$0xff]
    %v886 = vld [vmem:[#allocation5 + $0x4c8] sm:$0xff]
    %v887 = vld [vmem:[#allocation5 + $0x4d0] sm:$0xff]
    %v888 = vld [vmem:[#allocation5 + $0x4d8] sm:$0xff]
    %v889 = vld [vmem:[#allocation5 + $0x4e0] sm:$0xff]
    %v890 = vld [vmem:[#allocation5 + $0x4e8] sm:$0xff]
    %v891 = vld [vmem:[#allocation5 + $0x4f0] sm:$0xff]
    %v892 = vld [vmem:[#allocation5 + $0x4f8] sm:$0xff]
    %v893 = vld [vmem:[#allocation5 + $0x500] sm:$0xff]
    %v894 = vld [vmem:[#allocation5 + $0x508] sm:$0xff]
    %v895 = vld [vmem:[#allocation5 + $0x510] sm:$0xff]
    %v896 = vld [vmem:[#allocation5 + $0x518] sm:$0xff]
    %v897 = vld [vmem:[#allocation5 + $0x520] sm:$0xff]
    %v898 = vld [vmem:[#allocation5 + $0x528] sm:$0xff]
    %v899 = vld [vmem:[#allocation5 + $0x530] sm:$0xff]
    %v900 = vld [vmem:[#allocation5 + $0x538] sm:$0xff]
    %v901 = vld [vmem:[#allocation5 + $0x540] sm:$0xff]
    %v902 = vld [vmem:[#allocation5 + $0x548] sm:$0xff]
    %v903 = vld [vmem:[#allocation5 + $0x550] sm:$0xff]
    %v904 = vld [vmem:[#allocation5 + $0x558] sm:$0xff]
    %v905 = vld [vmem:[#allocation5 + $0x560] sm:$0xff]
    %v906 = vld [vmem:[#allocation5 + $0x568] sm:$0xff]
    %v907 = vld [vmem:[#allocation5 + $0x570] sm:$0xff]
    %v908 = vld [vmem:[#allocation5 + $0x578] sm:$0xff]
    %v909 = vld [vmem:[#allocation5 + $0x580] sm:$0xff]
    %v910 = vld [vmem:[#allocation5 + $0x588] sm:$0xff]
    %v911 = vld [vmem:[#allocation5 + $0x590] sm:$0xff]
    %v912 = vld [vmem:[#allocation5 + $0x598] sm:$0xff]
    %v913 = vld [vmem:[#allocation5 + $0x5a0] sm:$0xff]
    %v914 = vld [vmem:[#allocation5 + $0x5a8] sm:$0xff]
    %v915 = vld [vmem:[#allocation5 + $0x5b0] sm:$0xff]
    %v916 = vld [vmem:[#allocation5 + $0x5b8] sm:$0xff]
    %v917 = vld [vmem:[#allocation5 + $0x5c0] sm:$0xff]
    %v918 = vld [vmem:[#allocation5 + $0x5c8] sm:$0xff]
    %v919 = vld [vmem:[#allocation5 + $0x5d0] sm:$0xff]
    %v920 = vld [vmem:[#allocation5 + $0x5d8] sm:$0xff]
    %v921 = vld [vmem:[#allocation5 + $0x5e0] sm:$0xff]
    %v922 = vld [vmem:[#allocation5 + $0x5e8] sm:$0xff]
    %v923 = vld [vmem:[#allocation5 + $0x5f0] sm:$0xff]
    %v924 = vld [vmem:[#allocation5 + $0x5f8] sm:$0xff]
    %v925 = vld [vmem:[#allocation5 + $0x600] sm:$0xff]
    %v926 = vld [vmem:[#allocation5 + $0x608] sm:$0xff]
    %v927 = vld [vmem:[#allocation5 + $0x610] sm:$0xff]
    %v928 = vld [vmem:[#allocation5 + $0x618] sm:$0xff]
    %v929 = vld [vmem:[#allocation5 + $0x620] sm:$0xff]
    %v930 = vld [vmem:[#allocation5 + $0x628] sm:$0xff]
    %v931 = vld [vmem:[#allocation5 + $0x630] sm:$0xff]
    %v932 = vld [vmem:[#allocation5 + $0x638] sm:$0xff]
    %v933 = vld [vmem:[#allocation5 + $0x640] sm:$0xff]
    %v934 = vld [vmem:[#allocation5 + $0x648] sm:$0xff]
    %v935 = vld [vmem:[#allocation5 + $0x650] sm:$0xff]
    %v936 = vld [vmem:[#allocation5 + $0x658] sm:$0xff]
    %v937 = vld [vmem:[#allocation5 + $0x660] sm:$0xff]
    %v938 = vld [vmem:[#allocation5 + $0x668] sm:$0xff]
    %v939 = vld [vmem:[#allocation5 + $0x670] sm:$0xff]
    %v940 = vld [vmem:[#allocation5 + $0x678] sm:$0xff]
    %v941 = vld [vmem:[#allocation5 + $0x680] sm:$0xff]
    %v942 = vld [vmem:[#allocation5 + $0x688] sm:$0xff]
    %v943 = vld [vmem:[#allocation5 + $0x690] sm:$0xff]
    %v944 = vld [vmem:[#allocation5 + $0x698] sm:$0xff]
    %v945 = vld [vmem:[#allocation5 + $0x6a0] sm:$0xff]
    %v946 = vld [vmem:[#allocation5 + $0x6a8] sm:$0xff]
    %v947 = vld [vmem:[#allocation5 + $0x6b0] sm:$0xff]
    %v948 = vld [vmem:[#allocation5 + $0x6b8] sm:$0xff]
    %v949 = vld [vmem:[#allocation5 + $0x6c0] sm:$0xff]
    %v950 = vld [vmem:[#allocation5 + $0x6c8] sm:$0xff]
    %v951 = vld [vmem:[#allocation5 + $0x6d0] sm:$0xff]
    %v952 = vld [vmem:[#allocation5 + $0x6d8] sm:$0xff]
    %v953 = vld [vmem:[#allocation5 + $0x6e0] sm:$0xff]
    %v954 = vld [vmem:[#allocation5 + $0x6e8] sm:$0xff]
    %v955 = vld [vmem:[#allocation5 + $0x6f0] sm:$0xff]
    %v956 = vld [vmem:[#allocation5 + $0x6f8] sm:$0xff]
    %v957 = vld [vmem:[#allocation5 + $0x700] sm:$0xff]
    %v958 = vld [vmem:[#allocation5 + $0x708] sm:$0xff]
    %v959 = vld [vmem:[#allocation5 + $0x710] sm:$0xff]
    %v960 = vld [vmem:[#allocation5 + $0x718] sm:$0xff]
    %v961 = vld [vmem:[#allocation5 + $0x720] sm:$0xff]
    %v962 = vld [vmem:[#allocation5 + $0x728] sm:$0xff]
    %v963 = vld [vmem:[#allocation5 + $0x730] sm:$0xff]
    %v964 = vld [vmem:[#allocation5 + $0x738] sm:$0xff]
    %v965 = vld [vmem:[#allocation5 + $0x740] sm:$0xff]
    %v966 = vld [vmem:[#allocation5 + $0x748] sm:$0xff]
    %v967 = vld [vmem:[#allocation5 + $0x750] sm:$0xff]
    %v968 = vld [vmem:[#allocation5 + $0x758] sm:$0xff]
    %v969 = vld [vmem:[#allocation5 + $0x760] sm:$0xff]
    %v970 = vld [vmem:[#allocation5 + $0x768] sm:$0xff]
    %v971 = vld [vmem:[#allocation5 + $0x770] sm:$0xff]
    %v972 = vld [vmem:[#allocation5 + $0x778] sm:$0xff]
    %v973 = vld [vmem:[#allocation5 + $0x780] sm:$0xff]
    %v974 = vld [vmem:[#allocation5 + $0x788] sm:$0xff]
    %v975 = vld [vmem:[#allocation5 + $0x790] sm:$0xff]
    %v976 = vld [vmem:[#allocation5 + $0x798] sm:$0xff]
    %v977 = vld [vmem:[#allocation5 + $0x7a0] sm:$0xff]
    %v978 = vld [vmem:[#allocation5 + $0x7a8] sm:$0xff]
    %v979 = vld [vmem:[#allocation5 + $0x7b0] sm:$0xff]
    %v980 = vld [vmem:[#allocation5 + $0x7b8] sm:$0xff]
    %v981 = vld [vmem:[#allocation5 + $0x7c0] sm:$0xff]
    %v982 = vld [vmem:[#allocation5 + $0x7c8] sm:$0xff]
    %v983 = vld [vmem:[#allocation5 + $0x7d0] sm:$0xff]
    %v984 = vld [vmem:[#allocation5 + $0x7d8] sm:$0xff]
    %v985 = vld [vmem:[#allocation5 + $0x7e0] sm:$0xff]
    %v986 = vld [vmem:[#allocation5 + $0x7e8] sm:$0xff]
    %v987 = vld [vmem:[#allocation5 + $0x7f0] sm:$0xff]
    %v988 = vld [vmem:[#allocation5 + $0x7f8] sm:$0xff]
    %v989 = vld [vmem:[#allocation5 + $0x800] sm:$0xff]
    %v990 = vld [vmem:[#allocation5 + $0x808] sm:$0xff]
    %v991 = vld [vmem:[#allocation5 + $0x810] sm:$0xff]
    %v992 = vld [vmem:[#allocation5 + $0x818] sm:$0xff]
    %v993 = vld [vmem:[#allocation5 + $0x820] sm:$0xff]
    %v994 = vld [vmem:[#allocation5 + $0x828] sm:$0xff]
    %v995 = vld [vmem:[#allocation5 + $0x830] sm:$0xff]
    %v996 = vld [vmem:[#allocation5 + $0x838] sm:$0xff]
    %v997 = vld [vmem:[#allocation5 + $0x840] sm:$0xff]
    %v998 = vld [vmem:[#allocation5 + $0x848] sm:$0xff]
    %v999 = vld [vmem:[#allocation5 + $0x850] sm:$0xff]
    %v1000 = vld [vmem:[#allocation5 + $0x858] sm:$0xff]
    %v1001 = vld [vmem:[#allocation5 + $0x860] sm:$0xff]
    %v1002 = vld [vmem:[#allocation5 + $0x868] sm:$0xff]
    %v1003 = vld [vmem:[#allocation5 + $0x870] sm:$0xff]
    %v1004 = vld [vmem:[#allocation5 + $0x878] sm:$0xff]
    %v1005 = vld [vmem:[#allocation5 + $0x880] sm:$0xff]
    %v1006 = vld [vmem:[#allocation5 + $0x888] sm:$0xff]
    %v1007 = vld [vmem:[#allocation5 + $0x890] sm:$0xff]
    %v1008 = vld [vmem:[#allocation5 + $0x898] sm:$0xff]
    %v1009 = vld [vmem:[#allocation5 + $0x8a0] sm:$0xff]
    %v1010 = vld [vmem:[#allocation5 + $0x8a8] sm:$0xff]
    %v1011 = vld [vmem:[#allocation5 + $0x8b0] sm:$0xff]
    %v1012 = vld [vmem:[#allocation5 + $0x8b8] sm:$0xff]
    %v1013 = vld [vmem:[#allocation5 + $0x8c0] sm:$0xff]
    %v1014 = vld [vmem:[#allocation5 + $0x8c8] sm:$0xff]
    %v1015 = vld [vmem:[#allocation5 + $0x8d0] sm:$0xff]
    %v1016 = vld [vmem:[#allocation5 + $0x8d8] sm:$0xff]
    %v1017 = vld [vmem:[#allocation5 + $0x8e0] sm:$0xff]
    %v1018 = vld [vmem:[#allocation5 + $0x8e8] sm:$0xff]
    %v1019 = vld [vmem:[#allocation5 + $0x8f0] sm:$0xff]
    %v1020 = vld [vmem:[#allocation5 + $0x8f8] sm:$0xff]
    %v1021 = vld [vmem:[#allocation5 + $0x900] sm:$0xff]
    %v1022 = vld [vmem:[#allocation5 + $0x908] sm:$0xff]
    %v1023 = vld [vmem:[#allocation5 + $0x910] sm:$0xff]
    %v1024 = vld [vmem:[#allocation5 + $0x918] sm:$0xff]
    %v1025 = vld [vmem:[#allocation5 + $0x920] sm:$0xff]
    %v1026 = vld [vmem:[#allocation5 + $0x928] sm:$0xff]
    %v1027 = vld [vmem:[#allocation5 + $0x930] sm:$0xff]
    %v1028 = vld [vmem:[#allocation5 + $0x938] sm:$0xff]
    %v1029 = vld [vmem:[#allocation5 + $0x940] sm:$0xff]
    %v1030 = vld [vmem:[#allocation5 + $0x948] sm:$0xff]
    %v1031 = vld [vmem:[#allocation5 + $0x950] sm:$0xff]
    %v1032 = vld [vmem:[#allocation5 + $0x958] sm:$0xff]
    %v1033 = vld [vmem:[#allocation5 + $0x960] sm:$0xff]
    %v1034 = vld [vmem:[#allocation5 + $0x968] sm:$0xff]
    %v1035 = vld [vmem:[#allocation5 + $0x970] sm:$0xff]
    %v1036 = vld [vmem:[#allocation5 + $0x978] sm:$0xff]
    %v1037 = vld [vmem:[#allocation5 + $0x980] sm:$0xff]
    %v1038 = vld [vmem:[#allocation5 + $0x988] sm:$0xff]
    %v1039 = vld [vmem:[#allocation5 + $0x990] sm:$0xff]
    %v1040 = vld [vmem:[#allocation5 + $0x998] sm:$0xff]
    %v1041 = vld [vmem:[#allocation5 + $0x9a0] sm:$0xff]
    %v1042 = vld [vmem:[#allocation5 + $0x9a8] sm:$0xff]
    %v1043 = vld [vmem:[#allocation5 + $0x9b0] sm:$0xff]
    %v1044 = vld [vmem:[#allocation5 + $0x9b8] sm:$0xff]
    %v1045 = vld [vmem:[#allocation5 + $0x9c0] sm:$0xff]
    %v1046 = vld [vmem:[#allocation5 + $0x9c8] sm:$0xff]
    %v1047 = vld [vmem:[#allocation5 + $0x9d0] sm:$0xff]
    %v1048 = vld [vmem:[#allocation5 + $0x9d8] sm:$0xff]
    %v1049 = vld [vmem:[#allocation5 + $0x9e0] sm:$0xff]
    %v1050 = vld [vmem:[#allocation5 + $0x9e8] sm:$0xff]
    %v1051 = vld [vmem:[#allocation5 + $0x9f0] sm:$0xff]
    %v1052 = vld [vmem:[#allocation5 + $0x9f8] sm:$0xff]
    %v1053 = vld [vmem:[#allocation5 + $0xa00] sm:$0xff]
    %v1054 = vld [vmem:[#allocation5 + $0xa08] sm:$0xff]
    %v1055 = vld [vmem:[#allocation5 + $0xa10] sm:$0xff]
    %v1056 = vld [vmem:[#allocation5 + $0xa18] sm:$0xff]
    %v1057 = vld [vmem:[#allocation5 + $0xa20] sm:$0xff]
    %v1058 = vld [vmem:[#allocation5 + $0xa28] sm:$0xff]
    %v1059 = vld [vmem:[#allocation5 + $0xa30] sm:$0xff]
    %v1060 = vld [vmem:[#allocation5 + $0xa38] sm:$0xff]
    %v1061 = vld [vmem:[#allocation5 + $0xa40] sm:$0xff]
    %v1062 = vld [vmem:[#allocation5 + $0xa48] sm:$0xff]
    %v1063 = vld [vmem:[#allocation5 + $0xa50] sm:$0x11]
    %v1064 = vld [vmem:[#allocation5 + $0xa58] sm:$0x11]
    %v1065 = vld [vmem:[#allocation5 + $0xa60] sm:$0x11]
    %v1066 = vld [vmem:[#allocation5 + $0xa68] sm:$0x11]
    %v1067 = vld [vmem:[#allocation5 + $0xa70] sm:$0x11]
    %v1068 = vld [vmem:[#allocation5 + $0xa78] sm:$0x11]
    %v1069 = vld [vmem:[#allocation5 + $0xa80] sm:$0x11]
    %v1070 = vld [vmem:[#allocation5 + $0xa88] sm:$0x11]
    %v1071 = vld [vmem:[#allocation5 + $0xa90] sm:$0x11]
    %v1072 = vld [vmem:[#allocation5 + $0xa98] sm:$0x11]
    %v1073 = vld [vmem:[#allocation5 + $0xaa0] sm:$0x11]
    %v1074 = vld [vmem:[#allocation5 + $0xaa8] sm:$0x11]
    %v1075 = vld [vmem:[#allocation5 + $0xab0] sm:$0x11]
    %v1076 = vld [vmem:[#allocation5 + $0xab8] sm:$0x11]
    %v1077 = vld [vmem:[#allocation5 + $0xac0] sm:$0x11]
    %v1078 = vld [vmem:[#allocation5 + $0xac8] sm:$0x11]
    %v1079 = vld [vmem:[#allocation5 + $0xad0] sm:$0x11]
    %v1080 = vld [vmem:[#allocation5 + $0xad8] sm:$0x11]
    %v1081 = vld [vmem:[#allocation5 + $0xae0] sm:$0x11]
    %v1082 = vld [vmem:[#allocation5 + $0xae8] sm:$0x11]
    %v1083 = vld [vmem:[#allocation5 + $0xaf0] sm:$0x11]
    %v1084 = vld [vmem:[#allocation5 + $0xaf8] sm:$0x11]
    %v1085 = vld [vmem:[#allocation5 + $0xb00] sm:$0x11]
    %v1086 = vld [vmem:[#allocation5 + $0xb08] sm:$0x11]
    %v1087 = vld [vmem:[#allocation5 + $0xb10] sm:$0x11]
    %v1088 = vld [vmem:[#allocation5 + $0xb18] sm:$0x11]
    %v1089 = vld [vmem:[#allocation5 + $0xb20] sm:$0x11]
    %v1090 = vld [vmem:[#allocation5 + $0xb28] sm:$0x11]
    %v1091 = vld [vmem:[#allocation5 + $0xb30] sm:$0x11]
    %v1092 = vld [vmem:[#allocation5 + $0xb38] sm:$0x11]
    %v1093 = vld [vmem:[#allocation5 + $0xb40] sm:$0x11]
    %v1094 = vld [vmem:[#allocation5 + $0xb48] sm:$0x11]
    %v1095 = vld [vmem:[#allocation5 + $0xb50] sm:$0x11]
    %v1096 = vld [vmem:[#allocation5 + $0xb58] sm:$0x11]
    %v1097 = vld [vmem:[#allocation5 + $0xb60] sm:$0x11]
    %v1098 = vld [vmem:[#allocation5 + $0xb68] sm:$0x11]
    %v1099 = vld [vmem:[#allocation5 + $0xb70] sm:$0x11]
    %v1100 = vld [vmem:[#allocation5 + $0xb78] sm:$0x11]
    %v1101 = vld [vmem:[#allocation5 + $0xb80] sm:$0x11]
    %v1102 = vld [vmem:[#allocation5 + $0xb88] sm:$0x11]
    %v1103 = vld [vmem:[#allocation5 + $0xb90] sm:$0x11]
    %v1104 = vld [vmem:[#allocation5 + $0xb98] sm:$0x11]
    %v1105 = vld [vmem:[#allocation5 + $0xba0] sm:$0x11]
    %v1106 = vld [vmem:[#allocation5 + $0xba8] sm:$0x11]
    %v1107 = vld [vmem:[#allocation5 + $0xbb0] sm:$0x11]
    %v1108 = vld [vmem:[#allocation5 + $0xbb8] sm:$0x11]
    %v1109 = vld [vmem:[#allocation5 + $0xbc0] sm:$0x11]
    %v1110 = vld [vmem:[#allocation5 + $0xbc8] sm:$0x11]
    %v1111 = vld [vmem:[#allocation5 + $0xbd0] sm:$0x11]
    %v1112 = vld [vmem:[#allocation5 + $0xbd8] sm:$0x11]
    %v1113 = vld [vmem:[#allocation5 + $0xbe0] sm:$0x11]
    %v1114 = vld [vmem:[#allocation5 + $0xbe8] sm:$0x11]
    %v1115 = vld [vmem:[#allocation5 + $0xbf0] sm:$0x11]
    %v1116 = vld [vmem:[#allocation5 + $0xbf8] sm:$0x11]
    %v1117 = vld [vmem:[#allocation5 + $0xc00] sm:$0x11]
    %v1118 = vld [vmem:[#allocation7] sm:$0x1]
    %v1120 = vlaneseq
    %v1121 = vshrl.u32 %v1120, 7
    %v1122 = vsub.s32 0, %v1121
    %v1123 = vrot.slane %v1118, %v1122
    %v1510 = vunpack.c.l.b16 %v733
    %v1511 = vunpack.c.h.b16 %v733
    %v1512 = vunpack.c.l.b16 %v734
    %v1513 = vunpack.c.h.b16 %v734
    %v1514 = vunpack.c.l.b16 %v735
    %v1515 = vunpack.c.h.b16 %v735
    %v1516 = vunpack.c.l.b16 %v736
    %v1517 = vunpack.c.h.b16 %v736
    %v1518 = vunpack.c.l.b16 %v737
    %v1519 = vunpack.c.h.b16 %v737
    %v1520 = vunpack.c.l.b16 %v738
    %v1521 = vunpack.c.h.b16 %v738
    %v1522 = vunpack.c.l.b16 %v739
    %v1523 = vunpack.c.h.b16 %v739
    %v1524 = vunpack.c.l.b16 %v740
    %v1525 = vunpack.c.h.b16 %v740
    %v1526 = vunpack.c.l.b16 %v741
    %v1527 = vunpack.c.h.b16 %v741
    %v1528 = vunpack.c.l.b16 %v742
    %v1529 = vunpack.c.h.b16 %v742
    %v1530 = vunpack.c.l.b16 %v743
    %v1531 = vunpack.c.h.b16 %v743
    %v1532 = vunpack.c.l.b16 %v744
    %v1533 = vunpack.c.h.b16 %v744
    %v1534 = vunpack.c.l.b16 %v745
    %v1535 = vunpack.c.h.b16 %v745
    %v1536 = vunpack.c.l.b16 %v746
    %v1537 = vunpack.c.h.b16 %v746
    %v1538 = vunpack.c.l.b16 %v747
    %v1539 = vunpack.c.h.b16 %v747
    %v1540 = vunpack.c.l.b16 %v748
    %v1541 = vunpack.c.h.b16 %v748
    %v1542 = vunpack.c.l.b16 %v749
    %v1543 = vunpack.c.h.b16 %v749
    %v1544 = vunpack.c.l.b16 %v750
    %v1545 = vunpack.c.h.b16 %v750
    %v1546 = vunpack.c.l.b16 %v751
    %v1547 = vunpack.c.h.b16 %v751
    %v1548 = vunpack.c.l.b16 %v752
    %v1549 = vunpack.c.h.b16 %v752
    %v1550 = vunpack.c.l.b16 %v753
    %v1551 = vunpack.c.h.b16 %v753
    %v1552 = vunpack.c.l.b16 %v754
    %v1553 = vunpack.c.h.b16 %v754
    %v1554 = vunpack.c.l.b16 %v755
    %v1555 = vunpack.c.h.b16 %v755
    %v1556 = vunpack.c.l.b16 %v756
    %v1557 = vunpack.c.h.b16 %v756
    %v1558 = vunpack.c.l.b16 %v757
    %v1559 = vunpack.c.h.b16 %v757
    %v1560 = vunpack.c.l.b16 %v758
    %v1561 = vunpack.c.h.b16 %v758
    %v1562 = vunpack.c.l.b16 %v759
    %v1563 = vunpack.c.h.b16 %v759
    %v1564 = vunpack.c.l.b16 %v760
    %v1565 = vunpack.c.h.b16 %v760
    %v1566 = vunpack.c.l.b16 %v761
    %v1567 = vunpack.c.h.b16 %v761
    %v1568 = vunpack.c.l.b16 %v762
    %v1569 = vunpack.c.h.b16 %v762
    %v1570 = vunpack.c.l.b16 %v763
    %v1571 = vunpack.c.h.b16 %v763
    %v1572 = vunpack.c.l.b16 %v764
    %v1573 = vunpack.c.h.b16 %v764
    %v1574 = vunpack.c.l.b16 %v765
    %v1575 = vunpack.c.h.b16 %v765
    %v1576 = vunpack.c.l.b16 %v766
    %v1577 = vunpack.c.h.b16 %v766
    %v1578 = vunpack.c.l.b16 %v767
    %v1579 = vunpack.c.h.b16 %v767
    %v1580 = vunpack.c.l.b16 %v768
    %v1581 = vunpack.c.h.b16 %v768
    %v1582 = vunpack.c.l.b16 %v769
    %v1583 = vunpack.c.h.b16 %v769
    %v1584 = vunpack.c.l.b16 %v770
    %v1585 = vunpack.c.h.b16 %v770
    %v1586 = vunpack.c.l.b16 %v771
    %v1587 = vunpack.c.h.b16 %v771
    %v1588 = vunpack.c.l.b16 %v772
    %v1589 = vunpack.c.h.b16 %v772
    %v1590 = vunpack.c.l.b16 %v773
    %v1591 = vunpack.c.h.b16 %v773
    %v1592 = vunpack.c.l.b16 %v774
    %v1593 = vunpack.c.h.b16 %v774
    %v1594 = vunpack.c.l.b16 %v775
    %v1595 = vunpack.c.h.b16 %v775
    %v1596 = vunpack.c.l.b16 %v776
    %v1597 = vunpack.c.h.b16 %v776
    %v1598 = vunpack.c.l.b16 %v777
    %v1599 = vunpack.c.h.b16 %v777
    %v1600 = vunpack.c.l.b16 %v778
    %v1601 = vunpack.c.h.b16 %v778
    %v1602 = vunpack.c.l.b16 %v779
    %v1603 = vunpack.c.h.b16 %v779
    %v1604 = vunpack.c.l.b16 %v780
    %v1605 = vunpack.c.h.b16 %v780
    %v1606 = vunpack.c.l.b16 %v781
    %v1607 = vunpack.c.h.b16 %v781
    %v1608 = vunpack.c.l.b16 %v782
    %v1609 = vunpack.c.h.b16 %v782
    %v1610 = vunpack.c.l.b16 %v783
    %v1611 = vunpack.c.h.b16 %v783
    %v1612 = vunpack.c.l.b16 %v784
    %v1613 = vunpack.c.h.b16 %v784
    %v1614 = vunpack.c.l.b16 %v785
    %v1615 = vunpack.c.h.b16 %v785
    %v1616 = vunpack.c.l.b16 %v786
    %v1617 = vunpack.c.h.b16 %v786
    %v1618 = vunpack.c.l.b16 %v787
    %v1619 = vunpack.c.h.b16 %v787
    %v1620 = vunpack.c.l.b16 %v788
    %v1621 = vunpack.c.h.b16 %v788
    %v1622 = vunpack.c.l.b16 %v789
    %v1623 = vunpack.c.h.b16 %v789
    %v1624 = vunpack.c.l.b16 %v790
    %v1625 = vunpack.c.h.b16 %v790
    %v1626 = vunpack.c.l.b16 %v791
    %v1627 = vunpack.c.h.b16 %v791
    %v1628 = vunpack.c.l.b16 %v792
    %v1629 = vunpack.c.h.b16 %v792
    %v1630 = vunpack.c.l.b16 %v793
    %v1631 = vunpack.c.h.b16 %v793
    %v1632 = vunpack.c.l.b16 %v794
    %v1633 = vunpack.c.h.b16 %v794
    %v1634 = vunpack.c.l.b16 %v795
    %v1635 = vunpack.c.h.b16 %v795
    %v1636 = vunpack.c.l.b16 %v796
    %v1637 = vunpack.c.h.b16 %v796
    %v1638 = vunpack.c.l.b16 %v797
    %v1639 = vunpack.c.h.b16 %v797
    %v1640 = vunpack.c.l.b16 %v798
    %v1641 = vunpack.c.h.b16 %v798
    %v1642 = vunpack.c.l.b16 %v799
    %v1643 = vunpack.c.h.b16 %v799
    %v1644 = vunpack.c.l.b16 %v800
    %v1645 = vunpack.c.h.b16 %v800
    %v1646 = vunpack.c.l.b16 %v801
    %v1647 = vunpack.c.h.b16 %v801
    %v1648 = vunpack.c.l.b16 %v802
    %v1649 = vunpack.c.h.b16 %v802
    %v1650 = vunpack.c.l.b16 %v803
    %v1651 = vunpack.c.h.b16 %v803
    %v1652 = vunpack.c.l.b16 %v804
    %v1653 = vunpack.c.h.b16 %v804
    %v1654 = vunpack.c.l.b16 %v805
    %v1655 = vunpack.c.h.b16 %v805
    %v1656 = vunpack.c.l.b16 %v806
    %v1657 = vunpack.c.h.b16 %v806
    %v1658 = vunpack.c.l.b16 %v807
    %v1659 = vunpack.c.h.b16 %v807
    %v1660 = vunpack.c.l.b16 %v808
    %v1661 = vunpack.c.h.b16 %v808
    %v1662 = vunpack.c.l.b16 %v809
    %v1663 = vunpack.c.h.b16 %v809
    %v1664 = vunpack.c.l.b16 %v810
    %v1665 = vunpack.c.h.b16 %v810
    %v1666 = vunpack.c.l.b16 %v811
    %v1667 = vunpack.c.h.b16 %v811
    %v1668 = vunpack.c.l.b16 %v812
    %v1669 = vunpack.c.h.b16 %v812
    %v1670 = vunpack.c.l.b16 %v813
    %v1671 = vunpack.c.h.b16 %v813
    %v1672 = vunpack.c.l.b16 %v814
    %v1673 = vunpack.c.h.b16 %v814
    %v1674 = vunpack.c.l.b16 %v815
    %v1675 = vunpack.c.h.b16 %v815
    %v1676 = vunpack.c.l.b16 %v816
    %v1677 = vunpack.c.h.b16 %v816
    %v1678 = vunpack.c.l.b16 %v817
    %v1679 = vunpack.c.h.b16 %v817
    %v1680 = vunpack.c.l.b16 %v818
    %v1681 = vunpack.c.h.b16 %v818
    %v1682 = vunpack.c.l.b16 %v819
    %v1683 = vunpack.c.h.b16 %v819
    %v1684 = vunpack.c.l.b16 %v820
    %v1685 = vunpack.c.h.b16 %v820
    %v1686 = vunpack.c.l.b16 %v821
    %v1687 = vunpack.c.h.b16 %v821
    %v1688 = vunpack.c.l.b16 %v822
    %v1689 = vunpack.c.h.b16 %v822
    %v1690 = vunpack.c.l.b16 %v823
    %v1691 = vunpack.c.h.b16 %v823
    %v1692 = vunpack.c.l.b16 %v824
    %v1693 = vunpack.c.h.b16 %v824
    %v1694 = vunpack.c.l.b16 %v825
    %v1695 = vunpack.c.h.b16 %v825
    %v1696 = vunpack.c.l.b16 %v826
    %v1697 = vunpack.c.h.b16 %v826
    %v1698 = vunpack.c.l.b16 %v827
    %v1699 = vunpack.c.h.b16 %v827
    %v1700 = vunpack.c.l.b16 %v828
    %v1701 = vunpack.c.h.b16 %v828
    %v1702 = vunpack.c.l.b16 %v829
    %v1703 = vunpack.c.h.b16 %v829
    %v1704 = vunpack.c.l.b16 %v830
    %v1705 = vunpack.c.h.b16 %v830
    %v1706 = vunpack.c.l.b16 %v831
    %v1707 = vunpack.c.h.b16 %v831
    %v1708 = vunpack.c.l.b16 %v832
    %v1709 = vunpack.c.h.b16 %v832
    %v1710 = vunpack.c.l.b16 %v833
    %v1711 = vunpack.c.h.b16 %v833
    %v1712 = vunpack.c.l.b16 %v834
    %v1713 = vunpack.c.h.b16 %v834
    %v1714 = vunpack.c.l.b16 %v835
    %v1715 = vunpack.c.h.b16 %v835
    %v1716 = vunpack.c.l.b16 %v836
    %v1717 = vunpack.c.h.b16 %v836
    %v1718 = vunpack.c.l.b16 %v837
    %v1719 = vunpack.c.h.b16 %v837
    %v1720 = vunpack.c.l.b16 %v838
    %v1721 = vunpack.c.h.b16 %v838
    %v1722 = vunpack.c.l.b16 %v839
    %v1723 = vunpack.c.h.b16 %v839
    %v1724 = vunpack.c.l.b16 %v840
    %v1725 = vunpack.c.h.b16 %v840
    %v1726 = vunpack.c.l.b16 %v841
    %v1727 = vunpack.c.h.b16 %v841
    %v1728 = vunpack.c.l.b16 %v842
    %v1729 = vunpack.c.h.b16 %v842
    %v1730 = vunpack.c.l.b16 %v843
    %v1731 = vunpack.c.h.b16 %v843
    %v1732 = vunpack.c.l.b16 %v844
    %v1733 = vunpack.c.h.b16 %v844
    %v1734 = vunpack.c.l.b16 %v845
    %v1735 = vunpack.c.h.b16 %v845
    %v1736 = vunpack.c.l.b16 %v846
    %v1737 = vunpack.c.h.b16 %v846
    %v1738 = vunpack.c.l.b16 %v847
    %v1739 = vunpack.c.h.b16 %v847
    %v1740 = vunpack.c.l.b16 %v848
    %v1741 = vunpack.c.h.b16 %v848
    %v1742 = vunpack.c.l.b16 %v849
    %v1743 = vunpack.c.h.b16 %v849
    %v1744 = vunpack.c.l.b16 %v850
    %v1745 = vunpack.c.h.b16 %v850
    %v1746 = vunpack.c.l.b16 %v851
    %v1747 = vunpack.c.h.b16 %v851
    %v1748 = vunpack.c.l.b16 %v852
    %v1749 = vunpack.c.h.b16 %v852
    %v1750 = vunpack.c.l.b16 %v853
    %v1751 = vunpack.c.h.b16 %v853
    %v1752 = vunpack.c.l.b16 %v854
    %v1753 = vunpack.c.h.b16 %v854
    %v1754 = vunpack.c.l.b16 %v855
    %v1755 = vunpack.c.h.b16 %v855
    %v1756 = vunpack.c.l.b16 %v856
    %v1757 = vunpack.c.h.b16 %v856
    %v1758 = vunpack.c.l.b16 %v857
    %v1759 = vunpack.c.h.b16 %v857
    %v1760 = vunpack.c.l.b16 %v858
    %v1761 = vunpack.c.h.b16 %v858
    %v1762 = vunpack.c.l.b16 %v859
    %v1763 = vunpack.c.h.b16 %v859
    %v1764 = vunpack.c.l.b16 %v860
    %v1765 = vunpack.c.h.b16 %v860
    %v1766 = vunpack.c.l.b16 %v861
    %v1767 = vunpack.c.h.b16 %v861
    %v1768 = vunpack.c.l.b16 %v862
    %v1769 = vunpack.c.h.b16 %v862
    %v1770 = vunpack.c.l.b16 %v863
    %v1771 = vunpack.c.h.b16 %v863
    %v1772 = vunpack.c.l.b16 %v864
    %v1773 = vunpack.c.h.b16 %v864
    %v1774 = vunpack.c.l.b16 %v865
    %v1775 = vunpack.c.h.b16 %v865
    %v1776 = vunpack.c.l.b16 %v866
    %v1777 = vunpack.c.h.b16 %v866
    %v1778 = vunpack.c.l.b16 %v867
    %v1779 = vunpack.c.h.b16 %v867
    %v1780 = vunpack.c.l.b16 %v868
    %v1781 = vunpack.c.h.b16 %v868
    %v1782 = vunpack.c.l.b16 %v869
    %v1783 = vunpack.c.h.b16 %v869
    %v1784 = vunpack.c.l.b16 %v870
    %v1785 = vunpack.c.h.b16 %v870
    %v1786 = vunpack.c.l.b16 %v871
    %v1787 = vunpack.c.h.b16 %v871
    %v1788 = vunpack.c.l.b16 %v872
    %v1789 = vunpack.c.h.b16 %v872
    %v1790 = vunpack.c.l.b16 %v873
    %v1791 = vunpack.c.h.b16 %v873
    %v1792 = vunpack.c.l.b16 %v874
    %v1793 = vunpack.c.h.b16 %v874
    %v1794 = vunpack.c.l.b16 %v875
    %v1795 = vunpack.c.h.b16 %v875
    %v1796 = vunpack.c.l.b16 %v876
    %v1797 = vunpack.c.h.b16 %v876
    %v1798 = vunpack.c.l.b16 %v877
    %v1799 = vunpack.c.h.b16 %v877
    %v1800 = vunpack.c.l.b16 %v878
    %v1801 = vunpack.c.h.b16 %v878
    %v1802 = vunpack.c.l.b16 %v879
    %v1803 = vunpack.c.h.b16 %v879
    %v1804 = vunpack.c.l.b16 %v880
    %v1805 = vunpack.c.h.b16 %v880
    %v1806 = vunpack.c.l.b16 %v881
    %v1807 = vunpack.c.h.b16 %v881
    %v1808 = vunpack.c.l.b16 %v882
    %v1809 = vunpack.c.h.b16 %v882
    %v1810 = vunpack.c.l.b16 %v883
    %v1811 = vunpack.c.h.b16 %v883
    %v1812 = vunpack.c.l.b16 %v884
    %v1813 = vunpack.c.h.b16 %v884
    %v1814 = vunpack.c.l.b16 %v885
    %v1815 = vunpack.c.h.b16 %v885
    %v1816 = vunpack.c.l.b16 %v886
    %v1817 = vunpack.c.h.b16 %v886
    %v1818 = vunpack.c.l.b16 %v887
    %v1819 = vunpack.c.h.b16 %v887
    %v1820 = vunpack.c.l.b16 %v888
    %v1821 = vunpack.c.h.b16 %v888
    %v1822 = vunpack.c.l.b16 %v889
    %v1823 = vunpack.c.h.b16 %v889
    %v1824 = vunpack.c.l.b16 %v890
    %v1825 = vunpack.c.h.b16 %v890
    %v1826 = vunpack.c.l.b16 %v891
    %v1827 = vunpack.c.h.b16 %v891
    %v1828 = vunpack.c.l.b16 %v892
    %v1829 = vunpack.c.h.b16 %v892
    %v1830 = vunpack.c.l.b16 %v893
    %v1831 = vunpack.c.h.b16 %v893
    %v1832 = vunpack.c.l.b16 %v894
    %v1833 = vunpack.c.h.b16 %v894
    %v1834 = vunpack.c.l.b16 %v895
    %v1835 = vunpack.c.h.b16 %v895
    %v1836 = vunpack.c.l.b16 %v896
    %v1837 = vunpack.c.h.b16 %v896
    %v1838 = vunpack.c.l.b16 %v897
    %v1839 = vunpack.c.h.b16 %v897
    %v1840 = vunpack.c.l.b16 %v898
    %v1841 = vunpack.c.h.b16 %v898
    %v1842 = vunpack.c.l.b16 %v899
    %v1843 = vunpack.c.h.b16 %v899
    %v1844 = vunpack.c.l.b16 %v900
    %v1845 = vunpack.c.h.b16 %v900
    %v1846 = vunpack.c.l.b16 %v901
    %v1847 = vunpack.c.h.b16 %v901
    %v1848 = vunpack.c.l.b16 %v902
    %v1849 = vunpack.c.h.b16 %v902
    %v1850 = vunpack.c.l.b16 %v903
    %v1851 = vunpack.c.h.b16 %v903
    %v1852 = vunpack.c.l.b16 %v904
    %v1853 = vunpack.c.h.b16 %v904
    %v1854 = vunpack.c.l.b16 %v905
    %v1855 = vunpack.c.h.b16 %v905
    %v1856 = vunpack.c.l.b16 %v906
    %v1857 = vunpack.c.h.b16 %v906
    %v1858 = vunpack.c.l.b16 %v907
    %v1859 = vunpack.c.h.b16 %v907
    %v1860 = vunpack.c.l.b16 %v908
    %v1861 = vunpack.c.h.b16 %v908
    %v1862 = vunpack.c.l.b16 %v909
    %v1863 = vunpack.c.h.b16 %v909
    %v1864 = vunpack.c.l.b16 %v910
    %v1865 = vunpack.c.h.b16 %v910
    %v1866 = vunpack.c.l.b16 %v911
    %v1867 = vunpack.c.h.b16 %v911
    %v1868 = vunpack.c.l.b16 %v912
    %v1869 = vunpack.c.h.b16 %v912
    %v1870 = vunpack.c.l.b16 %v913
    %v1871 = vunpack.c.h.b16 %v913
    %v1872 = vunpack.c.l.b16 %v914
    %v1873 = vunpack.c.h.b16 %v914
    %v1874 = vunpack.c.l.b16 %v915
    %v1875 = vunpack.c.h.b16 %v915
    %v1876 = vunpack.c.l.b16 %v916
    %v1877 = vunpack.c.h.b16 %v916
    %v1878 = vunpack.c.l.b16 %v917
    %v1879 = vunpack.c.h.b16 %v917
    %v1880 = vunpack.c.l.b16 %v918
    %v1881 = vunpack.c.h.b16 %v918
    %v1882 = vunpack.c.l.b16 %v919
    %v1883 = vunpack.c.h.b16 %v919
    %v1884 = vunpack.c.l.b16 %v920
    %v1885 = vunpack.c.h.b16 %v920
    %v1886 = vunpack.c.l.b16 %v921
    %v1887 = vunpack.c.h.b16 %v921
    %v1888 = vunpack.c.l.b16 %v922
    %v1889 = vunpack.c.h.b16 %v922
    %v1890 = vunpack.c.l.b16 %v923
    %v1891 = vunpack.c.h.b16 %v923
    %v1892 = vunpack.c.l.b16 %v924
    %v1893 = vunpack.c.h.b16 %v924
    %v1894 = vunpack.c.l.b16 %v925
    %v1895 = vunpack.c.h.b16 %v925
    %v1896 = vunpack.c.l.b16 %v926
    %v1897 = vunpack.c.h.b16 %v926
    %v1898 = vunpack.c.l.b16 %v927
    %v1899 = vunpack.c.h.b16 %v927
    %v1900 = vunpack.c.l.b16 %v928
    %v1901 = vunpack.c.h.b16 %v928
    %v1902 = vunpack.c.l.b16 %v929
    %v1903 = vunpack.c.h.b16 %v929
    %v1904 = vunpack.c.l.b16 %v930
    %v1905 = vunpack.c.h.b16 %v930
    %v1906 = vunpack.c.l.b16 %v931
    %v1907 = vunpack.c.h.b16 %v931
    %v1908 = vunpack.c.l.b16 %v932
    %v1909 = vunpack.c.h.b16 %v932
    %v1910 = vunpack.c.l.b16 %v933
    %v1911 = vunpack.c.h.b16 %v933
    %v1912 = vunpack.c.l.b16 %v934
    %v1913 = vunpack.c.h.b16 %v934
    %v1914 = vunpack.c.l.b16 %v935
    %v1915 = vunpack.c.h.b16 %v935
    %v1916 = vunpack.c.l.b16 %v936
    %v1917 = vunpack.c.h.b16 %v936
    %v1918 = vunpack.c.l.b16 %v937
    %v1919 = vunpack.c.h.b16 %v937
    %v1920 = vunpack.c.l.b16 %v938
    %v1921 = vunpack.c.h.b16 %v938
    %v1922 = vunpack.c.l.b16 %v939
    %v1923 = vunpack.c.h.b16 %v939
    %v1924 = vunpack.c.l.b16 %v940
    %v1925 = vunpack.c.h.b16 %v940
    %v1926 = vunpack.c.l.b16 %v941
    %v1927 = vunpack.c.h.b16 %v941
    %v1928 = vunpack.c.l.b16 %v942
    %v1929 = vunpack.c.h.b16 %v942
    %v1930 = vunpack.c.l.b16 %v943
    %v1931 = vunpack.c.h.b16 %v943
    %v1932 = vunpack.c.l.b16 %v944
    %v1933 = vunpack.c.h.b16 %v944
    %v1934 = vunpack.c.l.b16 %v945
    %v1935 = vunpack.c.h.b16 %v945
    %v1936 = vunpack.c.l.b16 %v946
    %v1937 = vunpack.c.h.b16 %v946
    %v1938 = vunpack.c.l.b16 %v947
    %v1939 = vunpack.c.h.b16 %v947
    %v1940 = vunpack.c.l.b16 %v948
    %v1941 = vunpack.c.h.b16 %v948
    %v1942 = vunpack.c.l.b16 %v949
    %v1943 = vunpack.c.h.b16 %v949
    %v1944 = vunpack.c.l.b16 %v950
    %v1945 = vunpack.c.h.b16 %v950
    %v1946 = vunpack.c.l.b16 %v951
    %v1947 = vunpack.c.h.b16 %v951
    %v1948 = vunpack.c.l.b16 %v952
    %v1949 = vunpack.c.h.b16 %v952
    %v1950 = vunpack.c.l.b16 %v953
    %v1951 = vunpack.c.h.b16 %v953
    %v1952 = vunpack.c.l.b16 %v954
    %v1953 = vunpack.c.h.b16 %v954
    %v1954 = vunpack.c.l.b16 %v955
    %v1955 = vunpack.c.h.b16 %v955
    %v1956 = vunpack.c.l.b16 %v956
    %v1957 = vunpack.c.h.b16 %v956
    %v1958 = vunpack.c.l.b16 %v957
    %v1959 = vunpack.c.h.b16 %v957
    %v1960 = vunpack.c.l.b16 %v958
    %v1961 = vunpack.c.h.b16 %v958
    %v1962 = vunpack.c.l.b16 %v959
    %v1963 = vunpack.c.h.b16 %v959
    %v1964 = vunpack.c.l.b16 %v960
    %v1965 = vunpack.c.h.b16 %v960
    %v1966 = vunpack.c.l.b16 %v961
    %v1967 = vunpack.c.h.b16 %v961
    %v1968 = vunpack.c.l.b16 %v962
    %v1969 = vunpack.c.h.b16 %v962
    %v1970 = vunpack.c.l.b16 %v963
    %v1971 = vunpack.c.h.b16 %v963
    %v1972 = vunpack.c.l.b16 %v964
    %v1973 = vunpack.c.h.b16 %v964
    %v1974 = vunpack.c.l.b16 %v965
    %v1975 = vunpack.c.h.b16 %v965
    %v1976 = vunpack.c.l.b16 %v966
    %v1977 = vunpack.c.h.b16 %v966
    %v1978 = vunpack.c.l.b16 %v967
    %v1979 = vunpack.c.h.b16 %v967
    %v1980 = vunpack.c.l.b16 %v968
    %v1981 = vunpack.c.h.b16 %v968
    %v1982 = vunpack.c.l.b16 %v969
    %v1983 = vunpack.c.h.b16 %v969
    %v1984 = vunpack.c.l.b16 %v970
    %v1985 = vunpack.c.h.b16 %v970
    %v1986 = vunpack.c.l.b16 %v971
    %v1987 = vunpack.c.h.b16 %v971
    %v1988 = vunpack.c.l.b16 %v972
    %v1989 = vunpack.c.h.b16 %v972
    %v1990 = vunpack.c.l.b16 %v973
    %v1991 = vunpack.c.h.b16 %v973
    %v1992 = vunpack.c.l.b16 %v974
    %v1993 = vunpack.c.h.b16 %v974
    %v1994 = vunpack.c.l.b16 %v975
    %v1995 = vunpack.c.h.b16 %v975
    %v1996 = vunpack.c.l.b16 %v976
    %v1997 = vunpack.c.h.b16 %v976
    %v1998 = vunpack.c.l.b16 %v977
    %v1999 = vunpack.c.h.b16 %v977
    %v2000 = vunpack.c.l.b16 %v978
    %v2001 = vunpack.c.h.b16 %v978
    %v2002 = vunpack.c.l.b16 %v979
    %v2003 = vunpack.c.h.b16 %v979
    %v2004 = vunpack.c.l.b16 %v980
    %v2005 = vunpack.c.h.b16 %v980
    %v2006 = vunpack.c.l.b16 %v981
    %v2007 = vunpack.c.h.b16 %v981
    %v2008 = vunpack.c.l.b16 %v982
    %v2009 = vunpack.c.h.b16 %v982
    %v2010 = vunpack.c.l.b16 %v983
    %v2011 = vunpack.c.h.b16 %v983
    %v2012 = vunpack.c.l.b16 %v984
    %v2013 = vunpack.c.h.b16 %v984
    %v2014 = vunpack.c.l.b16 %v985
    %v2015 = vunpack.c.h.b16 %v985
    %v2016 = vunpack.c.l.b16 %v986
    %v2017 = vunpack.c.h.b16 %v986
    %v2018 = vunpack.c.l.b16 %v987
    %v2019 = vunpack.c.h.b16 %v987
    %v2020 = vunpack.c.l.b16 %v988
    %v2021 = vunpack.c.h.b16 %v988
    %v2022 = vunpack.c.l.b16 %v989
    %v2023 = vunpack.c.h.b16 %v989
    %v2024 = vunpack.c.l.b16 %v990
    %v2025 = vunpack.c.h.b16 %v990
    %v2026 = vunpack.c.l.b16 %v991
    %v2027 = vunpack.c.h.b16 %v991
    %v2028 = vunpack.c.l.b16 %v992
    %v2029 = vunpack.c.h.b16 %v992
    %v2030 = vunpack.c.l.b16 %v993
    %v2031 = vunpack.c.h.b16 %v993
    %v2032 = vunpack.c.l.b16 %v994
    %v2033 = vunpack.c.h.b16 %v994
    %v2034 = vunpack.c.l.b16 %v995
    %v2035 = vunpack.c.h.b16 %v995
    %v2036 = vunpack.c.l.b16 %v996
    %v2037 = vunpack.c.h.b16 %v996
    %v2038 = vunpack.c.l.b16 %v997
    %v2039 = vunpack.c.h.b16 %v997
    %v2040 = vunpack.c.l.b16 %v998
    %v2041 = vunpack.c.h.b16 %v998
    %v2042 = vunpack.c.l.b16 %v999
    %v2043 = vunpack.c.h.b16 %v999
    %v2044 = vunpack.c.l.b16 %v1000
    %v2045 = vunpack.c.h.b16 %v1000
    %v2046 = vunpack.c.l.b16 %v1001
    %v2047 = vunpack.c.h.b16 %v1001
    %v2048 = vunpack.c.l.b16 %v1002
    %v2049 = vunpack.c.h.b16 %v1002
    %v2050 = vunpack.c.l.b16 %v1003
    %v2051 = vunpack.c.h.b16 %v1003
    %v2052 = vunpack.c.l.b16 %v1004
    %v2053 = vunpack.c.h.b16 %v1004
    %v2054 = vunpack.c.l.b16 %v1005
    %v2055 = vunpack.c.h.b16 %v1005
    %v2056 = vunpack.c.l.b16 %v1006
    %v2057 = vunpack.c.h.b16 %v1006
    %v2058 = vunpack.c.l.b16 %v1007
    %v2059 = vunpack.c.h.b16 %v1007
    %v2060 = vunpack.c.l.b16 %v1008
    %v2061 = vunpack.c.h.b16 %v1008
    %v2062 = vunpack.c.l.b16 %v1009
    %v2063 = vunpack.c.h.b16 %v1009
    %v2064 = vunpack.c.l.b16 %v1010
    %v2065 = vunpack.c.h.b16 %v1010
    %v2066 = vunpack.c.l.b16 %v1011
    %v2067 = vunpack.c.h.b16 %v1011
    %v2068 = vunpack.c.l.b16 %v1012
    %v2069 = vunpack.c.h.b16 %v1012
    %v2070 = vunpack.c.l.b16 %v1013
    %v2071 = vunpack.c.h.b16 %v1013
    %v2072 = vunpack.c.l.b16 %v1014
    %v2073 = vunpack.c.h.b16 %v1014
    %v2074 = vunpack.c.l.b16 %v1015
    %v2075 = vunpack.c.h.b16 %v1015
    %v2076 = vunpack.c.l.b16 %v1016
    %v2077 = vunpack.c.h.b16 %v1016
    %v2078 = vunpack.c.l.b16 %v1017
    %v2079 = vunpack.c.h.b16 %v1017
    %v2080 = vunpack.c.l.b16 %v1018
    %v2081 = vunpack.c.h.b16 %v1018
    %v2082 = vunpack.c.l.b16 %v1019
    %v2083 = vunpack.c.h.b16 %v1019
    %v2084 = vunpack.c.l.b16 %v1020
    %v2085 = vunpack.c.h.b16 %v1020
    %v2086 = vunpack.c.l.b16 %v1021
    %v2087 = vunpack.c.h.b16 %v1021
    %v2088 = vunpack.c.l.b16 %v1022
    %v2089 = vunpack.c.h.b16 %v1022
    %v2090 = vunpack.c.l.b16 %v1023
    %v2091 = vunpack.c.h.b16 %v1023
    %v2092 = vunpack.c.l.b16 %v1024
    %v2093 = vunpack.c.h.b16 %v1024
    %v2094 = vunpack.c.l.b16 %v1025
    %v2095 = vunpack.c.h.b16 %v1025
    %v2096 = vunpack.c.l.b16 %v1026
    %v2097 = vunpack.c.h.b16 %v1026
    %v2098 = vunpack.c.l.b16 %v1027
    %v2099 = vunpack.c.h.b16 %v1027
    %v2100 = vunpack.c.l.b16 %v1028
    %v2101 = vunpack.c.h.b16 %v1028
    %v2102 = vunpack.c.l.b16 %v1029
    %v2103 = vunpack.c.h.b16 %v1029
    %v2104 = vunpack.c.l.b16 %v1030
    %v2105 = vunpack.c.h.b16 %v1030
    %v2106 = vunpack.c.l.b16 %v1031
    %v2107 = vunpack.c.h.b16 %v1031
    %v2108 = vunpack.c.l.b16 %v1032
    %v2109 = vunpack.c.h.b16 %v1032
    %v2110 = vunpack.c.l.b16 %v1033
    %v2111 = vunpack.c.h.b16 %v1033
    %v2112 = vunpack.c.l.b16 %v1034
    %v2113 = vunpack.c.h.b16 %v1034
    %v2114 = vunpack.c.l.b16 %v1035
    %v2115 = vunpack.c.h.b16 %v1035
    %v2116 = vunpack.c.l.b16 %v1036
    %v2117 = vunpack.c.h.b16 %v1036
    %v2118 = vunpack.c.l.b16 %v1037
    %v2119 = vunpack.c.h.b16 %v1037
    %v2120 = vunpack.c.l.b16 %v1038
    %v2121 = vunpack.c.h.b16 %v1038
    %v2122 = vunpack.c.l.b16 %v1039
    %v2123 = vunpack.c.h.b16 %v1039
    %v2124 = vunpack.c.l.b16 %v1040
    %v2125 = vunpack.c.h.b16 %v1040
    %v2126 = vunpack.c.l.b16 %v1041
    %v2127 = vunpack.c.h.b16 %v1041
    %v2128 = vunpack.c.l.b16 %v1042
    %v2129 = vunpack.c.h.b16 %v1042
    %v2130 = vunpack.c.l.b16 %v1043
    %v2131 = vunpack.c.h.b16 %v1043
    %v2132 = vunpack.c.l.b16 %v1044
    %v2133 = vunpack.c.h.b16 %v1044
    %v2134 = vunpack.c.l.b16 %v1045
    %v2135 = vunpack.c.h.b16 %v1045
    %v2136 = vunpack.c.l.b16 %v1046
    %v2137 = vunpack.c.h.b16 %v1046
    %v2138 = vunpack.c.l.b16 %v1047
    %v2139 = vunpack.c.h.b16 %v1047
    %v2140 = vunpack.c.l.b16 %v1048
    %v2141 = vunpack.c.h.b16 %v1048
    %v2142 = vunpack.c.l.b16 %v1049
    %v2143 = vunpack.c.h.b16 %v1049
    %v2144 = vunpack.c.l.b16 %v1050
    %v2145 = vunpack.c.h.b16 %v1050
    %v2146 = vunpack.c.l.b16 %v1051
    %v2147 = vunpack.c.h.b16 %v1051
    %v2148 = vunpack.c.l.b16 %v1052
    %v2149 = vunpack.c.h.b16 %v1052
    %v2150 = vunpack.c.l.b16 %v1053
    %v2151 = vunpack.c.h.b16 %v1053
    %v2152 = vunpack.c.l.b16 %v1054
    %v2153 = vunpack.c.h.b16 %v1054
    %v2154 = vunpack.c.l.b16 %v1055
    %v2155 = vunpack.c.h.b16 %v1055
    %v2156 = vunpack.c.l.b16 %v1056
    %v2157 = vunpack.c.h.b16 %v1056
    %v2158 = vunpack.c.l.b16 %v1057
    %v2159 = vunpack.c.h.b16 %v1057
    %v2160 = vunpack.c.l.b16 %v1058
    %v2161 = vunpack.c.h.b16 %v1058
    %v2162 = vunpack.c.l.b16 %v1059
    %v2163 = vunpack.c.h.b16 %v1059
    %v2164 = vunpack.c.l.b16 %v1060
    %v2165 = vunpack.c.h.b16 %v1060
    %v2166 = vunpack.c.l.b16 %v1061
    %v2167 = vunpack.c.h.b16 %v1061
    %v2168 = vunpack.c.l.b16 %v1062
    %v2169 = vunpack.c.h.b16 %v1062
    %v2170 = vunpack.c.l.b16 %v1063
    %v2171 = vunpack.c.h.b16 %v1063
    %v2172 = vunpack.c.l.b16 %v1064
    %v2173 = vunpack.c.h.b16 %v1064
    %v2174 = vunpack.c.l.b16 %v1065
    %v2175 = vunpack.c.h.b16 %v1065
    %v2176 = vunpack.c.l.b16 %v1066
    %v2177 = vunpack.c.h.b16 %v1066
    %v2178 = vunpack.c.l.b16 %v1067
    %v2179 = vunpack.c.h.b16 %v1067
    %v2180 = vunpack.c.l.b16 %v1068
    %v2181 = vunpack.c.h.b16 %v1068
    %v2182 = vunpack.c.l.b16 %v1069
    %v2183 = vunpack.c.h.b16 %v1069
    %v2184 = vunpack.c.l.b16 %v1070
    %v2185 = vunpack.c.h.b16 %v1070
    %v2186 = vunpack.c.l.b16 %v1071
    %v2187 = vunpack.c.h.b16 %v1071
    %v2188 = vunpack.c.l.b16 %v1072
    %v2189 = vunpack.c.h.b16 %v1072
    %v2190 = vunpack.c.l.b16 %v1073
    %v2191 = vunpack.c.h.b16 %v1073
    %v2192 = vunpack.c.l.b16 %v1074
    %v2193 = vunpack.c.h.b16 %v1074
    %v2194 = vunpack.c.l.b16 %v1075
    %v2195 = vunpack.c.h.b16 %v1075
    %v2196 = vunpack.c.l.b16 %v1076
    %v2197 = vunpack.c.h.b16 %v1076
    %v2198 = vunpack.c.l.b16 %v1077
    %v2199 = vunpack.c.h.b16 %v1077
    %v2200 = vunpack.c.l.b16 %v1078
    %v2201 = vunpack.c.h.b16 %v1078
    %v2202 = vunpack.c.l.b16 %v1079
    %v2203 = vunpack.c.h.b16 %v1079
    %v2204 = vunpack.c.l.b16 %v1080
    %v2205 = vunpack.c.h.b16 %v1080
    %v2206 = vunpack.c.l.b16 %v1081
    %v2207 = vunpack.c.h.b16 %v1081
    %v2208 = vunpack.c.l.b16 %v1082
    %v2209 = vunpack.c.h.b16 %v1082
    %v2210 = vunpack.c.l.b16 %v1083
    %v2211 = vunpack.c.h.b16 %v1083
    %v2212 = vunpack.c.l.b16 %v1084
    %v2213 = vunpack.c.h.b16 %v1084
    %v2214 = vunpack.c.l.b16 %v1085
    %v2215 = vunpack.c.h.b16 %v1085
    %v2216 = vunpack.c.l.b16 %v1086
    %v2217 = vunpack.c.h.b16 %v1086
    %v2218 = vunpack.c.l.b16 %v1087
    %v2219 = vunpack.c.h.b16 %v1087
    %v2220 = vunpack.c.l.b16 %v1088
    %v2221 = vunpack.c.h.b16 %v1088
    %v2222 = vunpack.c.l.b16 %v1089
    %v2223 = vunpack.c.h.b16 %v1089
    %v2224 = vunpack.c.l.b16 %v1090
    %v2225 = vunpack.c.h.b16 %v1090
    %v2226 = vunpack.c.l.b16 %v1091
    %v2227 = vunpack.c.h.b16 %v1091
    %v2228 = vunpack.c.l.b16 %v1092
    %v2229 = vunpack.c.h.b16 %v1092
    %v2230 = vunpack.c.l.b16 %v1093
    %v2231 = vunpack.c.h.b16 %v1093
    %v2232 = vunpack.c.l.b16 %v1094
    %v2233 = vunpack.c.h.b16 %v1094
    %v2234 = vunpack.c.l.b16 %v1095
    %v2235 = vunpack.c.h.b16 %v1095
    %v2236 = vunpack.c.l.b16 %v1096
    %v2237 = vunpack.c.h.b16 %v1096
    %v2238 = vunpack.c.l.b16 %v1097
    %v2239 = vunpack.c.h.b16 %v1097
    %v2240 = vunpack.c.l.b16 %v1098
    %v2241 = vunpack.c.h.b16 %v1098
    %v2242 = vunpack.c.l.b16 %v1099
    %v2243 = vunpack.c.h.b16 %v1099
    %v2244 = vunpack.c.l.b16 %v1100
    %v2245 = vunpack.c.h.b16 %v1100
    %v2246 = vunpack.c.l.b16 %v1101
    %v2247 = vunpack.c.h.b16 %v1101
    %v2248 = vunpack.c.l.b16 %v1102
    %v2249 = vunpack.c.h.b16 %v1102
    %v2250 = vunpack.c.l.b16 %v1103
    %v2251 = vunpack.c.h.b16 %v1103
    %v2252 = vunpack.c.l.b16 %v1104
    %v2253 = vunpack.c.h.b16 %v1104
    %v2254 = vunpack.c.l.b16 %v1105
    %v2255 = vunpack.c.h.b16 %v1105
    %v2256 = vunpack.c.l.b16 %v1106
    %v2257 = vunpack.c.h.b16 %v1106
    %v2258 = vunpack.c.l.b16 %v1107
    %v2259 = vunpack.c.h.b16 %v1107
    %v2260 = vunpack.c.l.b16 %v1108
    %v2261 = vunpack.c.h.b16 %v1108
    %v2262 = vunpack.c.l.b16 %v1109
    %v2263 = vunpack.c.h.b16 %v1109
    %v2264 = vunpack.c.l.b16 %v1110
    %v2265 = vunpack.c.h.b16 %v1110
    %v2266 = vunpack.c.l.b16 %v1111
    %v2267 = vunpack.c.h.b16 %v1111
    %v2268 = vunpack.c.l.b16 %v1112
    %v2269 = vunpack.c.h.b16 %v1112
    %v2270 = vunpack.c.l.b16 %v1113
    %v2271 = vunpack.c.h.b16 %v1113
    %v2272 = vunpack.c.l.b16 %v1114
    %v2273 = vunpack.c.h.b16 %v1114
    %v2274 = vunpack.c.l.b16 %v1115
    %v2275 = vunpack.c.h.b16 %v1115
    %v2276 = vunpack.c.l.b16 %v1116
    %v2277 = vunpack.c.h.b16 %v1116
    %v2278 = vunpack.c.l.b16 %v1117
    %v2279 = vunpack.c.h.b16 %v1117
    %v2280 = vpack.c.b16 %v1620, %v1510
    %v2281 = vpack.c.b16 %v1621, %v1511
    %v2282 = vpack.c.b16 %v1622, %v1512
    %v2283 = vpack.c.b16 %v1623, %v1513
    %v2284 = vpack.c.b16 %v1624, %v1514
    %v2285 = vpack.c.b16 %v1625, %v1515
    %v2286 = vpack.c.b16 %v1626, %v1516
    %v2287 = vpack.c.b16 %v1627, %v1517
    %v2288 = vpack.c.b16 %v1628, %v1518
    %v2289 = vpack.c.b16 %v1629, %v1519
    %v2290 = vpack.c.b16 %v1630, %v1520
    %v2291 = vpack.c.b16 %v1631, %v1521
    %v2292 = vpack.c.b16 %v1632, %v1522
    %v2293 = vpack.c.b16 %v1633, %v1523
    %v2294 = vpack.c.b16 %v1634, %v1524
    %v2295 = vpack.c.b16 %v1635, %v1525
    %v2296 = vpack.c.b16 %v1636, %v1526
    %v2297 = vpack.c.b16 %v1637, %v1527
    %v2298 = vpack.c.b16 %v1638, %v1528
    %v2299 = vpack.c.b16 %v1639, %v1529
    %v2300 = vpack.c.b16 %v1640, %v1530
    %v2301 = vpack.c.b16 %v1641, %v1531
    %v2302 = vpack.c.b16 %v1642, %v1532
    %v2303 = vpack.c.b16 %v1643, %v1533
    %v2304 = vpack.c.b16 %v1644, %v1534
    %v2305 = vpack.c.b16 %v1645, %v1535
    %v2306 = vpack.c.b16 %v1646, %v1536
    %v2307 = vpack.c.b16 %v1647, %v1537
    %v2308 = vpack.c.b16 %v1648, %v1538
    %v2309 = vpack.c.b16 %v1649, %v1539
    %v2310 = vpack.c.b16 %v1650, %v1540
    %v2311 = vpack.c.b16 %v1651, %v1541
    %v2312 = vpack.c.b16 %v1652, %v1542
    %v2313 = vpack.c.b16 %v1653, %v1543
    %v2314 = vpack.c.b16 %v1654, %v1544
    %v2315 = vpack.c.b16 %v1655, %v1545
    %v2316 = vpack.c.b16 %v1656, %v1546
    %v2317 = vpack.c.b16 %v1657, %v1547
    %v2318 = vpack.c.b16 %v1658, %v1548
    %v2319 = vpack.c.b16 %v1659, %v1549
    %v2320 = vpack.c.b16 %v1660, %v1550
    %v2321 = vpack.c.b16 %v1661, %v1551
    %v2322 = vpack.c.b16 %v1662, %v1552
    %v2323 = vpack.c.b16 %v1663, %v1553
    %v2324 = vpack.c.b16 %v1664, %v1554
    %v2325 = vpack.c.b16 %v1665, %v1555
    %v2326 = vpack.c.b16 %v1666, %v1556
    %v2327 = vpack.c.b16 %v1667, %v1557
    %v2328 = vpack.c.b16 %v1668, %v1558
    %v2329 = vpack.c.b16 %v1669, %v1559
    %v2330 = vpack.c.b16 %v1670, %v1560
    %v2331 = vpack.c.b16 %v1671, %v1561
    %v2332 = vpack.c.b16 %v1672, %v1562
    %v2333 = vpack.c.b16 %v1673, %v1563
    %v2334 = vpack.c.b16 %v1674, %v1564
    %v2335 = vpack.c.b16 %v1675, %v1565
    %v2336 = vpack.c.b16 %v1676, %v1566
    %v2337 = vpack.c.b16 %v1677, %v1567
    %v2338 = vpack.c.b16 %v1678, %v1568
    %v2339 = vpack.c.b16 %v1679, %v1569
    %v2340 = vpack.c.b16 %v1680, %v1570
    %v2341 = vpack.c.b16 %v1681, %v1571
    %v2342 = vpack.c.b16 %v1682, %v1572
    %v2343 = vpack.c.b16 %v1683, %v1573
    %v2344 = vpack.c.b16 %v1684, %v1574
    %v2345 = vpack.c.b16 %v1685, %v1575
    %v2346 = vpack.c.b16 %v1686, %v1576
    %v2347 = vpack.c.b16 %v1687, %v1577
    %v2348 = vpack.c.b16 %v1688, %v1578
    %v2349 = vpack.c.b16 %v1689, %v1579
    %v2350 = vpack.c.b16 %v1690, %v1580
    %v2351 = vpack.c.b16 %v1691, %v1581
    %v2352 = vpack.c.b16 %v1692, %v1582
    %v2353 = vpack.c.b16 %v1693, %v1583
    %v2354 = vpack.c.b16 %v1694, %v1584
    %v2355 = vpack.c.b16 %v1695, %v1585
    %v2356 = vpack.c.b16 %v1696, %v1586
    %v2357 = vpack.c.b16 %v1697, %v1587
    %v2358 = vpack.c.b16 %v1698, %v1588
    %v2359 = vpack.c.b16 %v1699, %v1589
    %v2360 = vpack.c.b16 %v1700, %v1590
    %v2361 = vpack.c.b16 %v1701, %v1591
    %v2362 = vpack.c.b16 %v1702, %v1592
    %v2363 = vpack.c.b16 %v1703, %v1593
    %v2364 = vpack.c.b16 %v1704, %v1594
    %v2365 = vpack.c.b16 %v1705, %v1595
    %v2366 = vpack.c.b16 %v1706, %v1596
    %v2367 = vpack.c.b16 %v1707, %v1597
    %v2368 = vpack.c.b16 %v1708, %v1598
    %v2369 = vpack.c.b16 %v1709, %v1599
    %v2370 = vpack.c.b16 %v1710, %v1600
    %v2371 = vpack.c.b16 %v1711, %v1601
    %v2372 = vpack.c.b16 %v1712, %v1602
    %v2373 = vpack.c.b16 %v1713, %v1603
    %v2374 = vpack.c.b16 %v1714, %v1604
    %v2375 = vpack.c.b16 %v1715, %v1605
    %v2376 = vpack.c.b16 %v1716, %v1606
    %v2377 = vpack.c.b16 %v1717, %v1607
    %v2378 = vpack.c.b16 %v1718, %v1608
    %v2379 = vpack.c.b16 %v1719, %v1609
    %v2380 = vpack.c.b16 %v1720, %v1610
    %v2381 = vpack.c.b16 %v1721, %v1611
    %v2382 = vpack.c.b16 %v1722, %v1612
    %v2383 = vpack.c.b16 %v1723, %v1613
    %v2384 = vpack.c.b16 %v1724, %v1614
    %v2385 = vpack.c.b16 %v1725, %v1615
    %v2386 = vpack.c.b16 %v1726, %v1616
    %v2387 = vpack.c.b16 %v1727, %v1617
    %v2388 = vpack.c.b16 %v1728, %v1618
    %v2389 = vpack.c.b16 %v1729, %v1619
    %v2390 = vpack.c.b16 %v1840, %v1730
    %v2391 = vpack.c.b16 %v1841, %v1731
    %v2392 = vpack.c.b16 %v1842, %v1732
    %v2393 = vpack.c.b16 %v1843, %v1733
    %v2394 = vpack.c.b16 %v1844, %v1734
    %v2395 = vpack.c.b16 %v1845, %v1735
    %v2396 = vpack.c.b16 %v1846, %v1736
    %v2397 = vpack.c.b16 %v1847, %v1737
    %v2398 = vpack.c.b16 %v1848, %v1738
    %v2399 = vpack.c.b16 %v1849, %v1739
    %v2400 = vpack.c.b16 %v1850, %v1740
    %v2401 = vpack.c.b16 %v1851, %v1741
    %v2402 = vpack.c.b16 %v1852, %v1742
    %v2403 = vpack.c.b16 %v1853, %v1743
    %v2404 = vpack.c.b16 %v1854, %v1744
    %v2405 = vpack.c.b16 %v1855, %v1745
    %v2406 = vpack.c.b16 %v1856, %v1746
    %v2407 = vpack.c.b16 %v1857, %v1747
    %v2408 = vpack.c.b16 %v1858, %v1748
    %v2409 = vpack.c.b16 %v1859, %v1749
    %v2410 = vpack.c.b16 %v1860, %v1750
    %v2411 = vpack.c.b16 %v1861, %v1751
    %v2412 = vpack.c.b16 %v1862, %v1752
    %v2413 = vpack.c.b16 %v1863, %v1753
    %v2414 = vpack.c.b16 %v1864, %v1754
    %v2415 = vpack.c.b16 %v1865, %v1755
    %v2416 = vpack.c.b16 %v1866, %v1756
    %v2417 = vpack.c.b16 %v1867, %v1757
    %v2418 = vpack.c.b16 %v1868, %v1758
    %v2419 = vpack.c.b16 %v1869, %v1759
    %v2420 = vpack.c.b16 %v1870, %v1760
    %v2421 = vpack.c.b16 %v1871, %v1761
    %v2422 = vpack.c.b16 %v1872, %v1762
    %v2423 = vpack.c.b16 %v1873, %v1763
    %v2424 = vpack.c.b16 %v1874, %v1764
    %v2425 = vpack.c.b16 %v1875, %v1765
    %v2426 = vpack.c.b16 %v1876, %v1766
    %v2427 = vpack.c.b16 %v1877, %v1767
    %v2428 = vpack.c.b16 %v1878, %v1768
    %v2429 = vpack.c.b16 %v1879, %v1769
    %v2430 = vpack.c.b16 %v1880, %v1770
    %v2431 = vpack.c.b16 %v1881, %v1771
    %v2432 = vpack.c.b16 %v1882, %v1772
    %v2433 = vpack.c.b16 %v1883, %v1773
    %v2434 = vpack.c.b16 %v1884, %v1774
    %v2435 = vpack.c.b16 %v1885, %v1775
    %v2436 = vpack.c.b16 %v1886, %v1776
    %v2437 = vpack.c.b16 %v1887, %v1777
    %v2438 = vpack.c.b16 %v1888, %v1778
    %v2439 = vpack.c.b16 %v1889, %v1779
    %v2440 = vpack.c.b16 %v1890, %v1780
    %v2441 = vpack.c.b16 %v1891, %v1781
    %v2442 = vpack.c.b16 %v1892, %v1782
    %v2443 = vpack.c.b16 %v1893, %v1783
    %v2444 = vpack.c.b16 %v1894, %v1784
    %v2445 = vpack.c.b16 %v1895, %v1785
    %v2446 = vpack.c.b16 %v1896, %v1786
    %v2447 = vpack.c.b16 %v1897, %v1787
    %v2448 = vpack.c.b16 %v1898, %v1788
    %v2449 = vpack.c.b16 %v1899, %v1789
    %v2450 = vpack.c.b16 %v1900, %v1790
    %v2451 = vpack.c.b16 %v1901, %v1791
    %v2452 = vpack.c.b16 %v1902, %v1792
    %v2453 = vpack.c.b16 %v1903, %v1793
    %v2454 = vpack.c.b16 %v1904, %v1794
    %v2455 = vpack.c.b16 %v1905, %v1795
    %v2456 = vpack.c.b16 %v1906, %v1796
    %v2457 = vpack.c.b16 %v1907, %v1797
    %v2458 = vpack.c.b16 %v1908, %v1798
    %v2459 = vpack.c.b16 %v1909, %v1799
    %v2460 = vpack.c.b16 %v1910, %v1800
    %v2461 = vpack.c.b16 %v1911, %v1801
    %v2462 = vpack.c.b16 %v1912, %v1802
    %v2463 = vpack.c.b16 %v1913, %v1803
    %v2464 = vpack.c.b16 %v1914, %v1804
    %v2465 = vpack.c.b16 %v1915, %v1805
    %v2466 = vpack.c.b16 %v1916, %v1806
    %v2467 = vpack.c.b16 %v1917, %v1807
    %v2468 = vpack.c.b16 %v1918, %v1808
    %v2469 = vpack.c.b16 %v1919, %v1809
    %v2470 = vpack.c.b16 %v1920, %v1810
    %v2471 = vpack.c.b16 %v1921, %v1811
    %v2472 = vpack.c.b16 %v1922, %v1812
    %v2473 = vpack.c.b16 %v1923, %v1813
    %v2474 = vpack.c.b16 %v1924, %v1814
    %v2475 = vpack.c.b16 %v1925, %v1815
    %v2476 = vpack.c.b16 %v1926, %v1816
    %v2477 = vpack.c.b16 %v1927, %v1817
    %v2478 = vpack.c.b16 %v1928, %v1818
    %v2479 = vpack.c.b16 %v1929, %v1819
    %v2480 = vpack.c.b16 %v1930, %v1820
    %v2481 = vpack.c.b16 %v1931, %v1821
    %v2482 = vpack.c.b16 %v1932, %v1822
    %v2483 = vpack.c.b16 %v1933, %v1823
    %v2484 = vpack.c.b16 %v1934, %v1824
    %v2485 = vpack.c.b16 %v1935, %v1825
    %v2486 = vpack.c.b16 %v1936, %v1826
    %v2487 = vpack.c.b16 %v1937, %v1827
    %v2488 = vpack.c.b16 %v1938, %v1828
    %v2489 = vpack.c.b16 %v1939, %v1829
    %v2490 = vpack.c.b16 %v1940, %v1830
    %v2491 = vpack.c.b16 %v1941, %v1831
    %v2492 = vpack.c.b16 %v1942, %v1832
    %v2493 = vpack.c.b16 %v1943, %v1833
    %v2494 = vpack.c.b16 %v1944, %v1834
    %v2495 = vpack.c.b16 %v1945, %v1835
    %v2496 = vpack.c.b16 %v1946, %v1836
    %v2497 = vpack.c.b16 %v1947, %v1837
    %v2498 = vpack.c.b16 %v1948, %v1838
    %v2499 = vpack.c.b16 %v1949, %v1839
    %v2500 = vpack.c.b16 %v2060, %v1950
    %v2501 = vpack.c.b16 %v2061, %v1951
    %v2502 = vpack.c.b16 %v2062, %v1952
    %v2503 = vpack.c.b16 %v2063, %v1953
    %v2504 = vpack.c.b16 %v2064, %v1954
    %v2505 = vpack.c.b16 %v2065, %v1955
    %v2506 = vpack.c.b16 %v2066, %v1956
    %v2507 = vpack.c.b16 %v2067, %v1957
    %v2508 = vpack.c.b16 %v2068, %v1958
    %v2509 = vpack.c.b16 %v2069, %v1959
    %v2510 = vpack.c.b16 %v2070, %v1960
    %v2511 = vpack.c.b16 %v2071, %v1961
    %v2512 = vpack.c.b16 %v2072, %v1962
    %v2513 = vpack.c.b16 %v2073, %v1963
    %v2514 = vpack.c.b16 %v2074, %v1964
    %v2515 = vpack.c.b16 %v2075, %v1965
    %v2516 = vpack.c.b16 %v2076, %v1966
    %v2517 = vpack.c.b16 %v2077, %v1967
    %v2518 = vpack.c.b16 %v2078, %v1968
    %v2519 = vpack.c.b16 %v2079, %v1969
    %v2520 = vpack.c.b16 %v2080, %v1970
    %v2521 = vpack.c.b16 %v2081, %v1971
    %v2522 = vpack.c.b16 %v2082, %v1972
    %v2523 = vpack.c.b16 %v2083, %v1973
    %v2524 = vpack.c.b16 %v2084, %v1974
    %v2525 = vpack.c.b16 %v2085, %v1975
    %v2526 = vpack.c.b16 %v2086, %v1976
    %v2527 = vpack.c.b16 %v2087, %v1977
    %v2528 = vpack.c.b16 %v2088, %v1978
    %v2529 = vpack.c.b16 %v2089, %v1979
    %v2530 = vpack.c.b16 %v2090, %v1980
    %v2531 = vpack.c.b16 %v2091, %v1981
    %v2532 = vpack.c.b16 %v2092, %v1982
    %v2533 = vpack.c.b16 %v2093, %v1983
    %v2534 = vpack.c.b16 %v2094, %v1984
    %v2535 = vpack.c.b16 %v2095, %v1985
    %v2536 = vpack.c.b16 %v2096, %v1986
    %v2537 = vpack.c.b16 %v2097, %v1987
    %v2538 = vpack.c.b16 %v2098, %v1988
    %v2539 = vpack.c.b16 %v2099, %v1989
    %v2540 = vpack.c.b16 %v2100, %v1990
    %v2541 = vpack.c.b16 %v2101, %v1991
    %v2542 = vpack.c.b16 %v2102, %v1992
    %v2543 = vpack.c.b16 %v2103, %v1993
    %v2544 = vpack.c.b16 %v2104, %v1994
    %v2545 = vpack.c.b16 %v2105, %v1995
    %v2546 = vpack.c.b16 %v2106, %v1996
    %v2547 = vpack.c.b16 %v2107, %v1997
    %v2548 = vpack.c.b16 %v2108, %v1998
    %v2549 = vpack.c.b16 %v2109, %v1999
    %v2550 = vpack.c.b16 %v2110, %v2000
    %v2551 = vpack.c.b16 %v2111, %v2001
    %v2552 = vpack.c.b16 %v2112, %v2002
    %v2553 = vpack.c.b16 %v2113, %v2003
    %v2554 = vpack.c.b16 %v2114, %v2004
    %v2555 = vpack.c.b16 %v2115, %v2005
    %v2556 = vpack.c.b16 %v2116, %v2006
    %v2557 = vpack.c.b16 %v2117, %v2007
    %v2558 = vpack.c.b16 %v2118, %v2008
    %v2559 = vpack.c.b16 %v2119, %v2009
    %v2560 = vpack.c.b16 %v2120, %v2010
    %v2561 = vpack.c.b16 %v2121, %v2011
    %v2562 = vpack.c.b16 %v2122, %v2012
    %v2563 = vpack.c.b16 %v2123, %v2013
    %v2564 = vpack.c.b16 %v2124, %v2014
    %v2565 = vpack.c.b16 %v2125, %v2015
    %v2566 = vpack.c.b16 %v2126, %v2016
    %v2567 = vpack.c.b16 %v2127, %v2017
    %v2568 = vpack.c.b16 %v2128, %v2018
    %v2569 = vpack.c.b16 %v2129, %v2019
    %v2570 = vpack.c.b16 %v2130, %v2020
    %v2571 = vpack.c.b16 %v2131, %v2021
    %v2572 = vpack.c.b16 %v2132, %v2022
    %v2573 = vpack.c.b16 %v2133, %v2023
    %v2574 = vpack.c.b16 %v2134, %v2024
    %v2575 = vpack.c.b16 %v2135, %v2025
    %v2576 = vpack.c.b16 %v2136, %v2026
    %v2577 = vpack.c.b16 %v2137, %v2027
    %v2578 = vpack.c.b16 %v2138, %v2028
    %v2579 = vpack.c.b16 %v2139, %v2029
    %v2580 = vpack.c.b16 %v2140, %v2030
    %v2581 = vpack.c.b16 %v2141, %v2031
    %v2582 = vpack.c.b16 %v2142, %v2032
    %v2583 = vpack.c.b16 %v2143, %v2033
    %v2584 = vpack.c.b16 %v2144, %v2034
    %v2585 = vpack.c.b16 %v2145, %v2035
    %v2586 = vpack.c.b16 %v2146, %v2036
    %v2587 = vpack.c.b16 %v2147, %v2037
    %v2588 = vpack.c.b16 %v2148, %v2038
    %v2589 = vpack.c.b16 %v2149, %v2039
    %v2590 = vpack.c.b16 %v2150, %v2040
    %v2591 = vpack.c.b16 %v2151, %v2041
    %v2592 = vpack.c.b16 %v2152, %v2042
    %v2593 = vpack.c.b16 %v2153, %v2043
    %v2594 = vpack.c.b16 %v2154, %v2044
    %v2595 = vpack.c.b16 %v2155, %v2045
    %v2596 = vpack.c.b16 %v2156, %v2046
    %v2597 = vpack.c.b16 %v2157, %v2047
    %v2598 = vpack.c.b16 %v2158, %v2048
    %v2599 = vpack.c.b16 %v2159, %v2049
    %v2600 = vpack.c.b16 %v2160, %v2050
    %v2601 = vpack.c.b16 %v2161, %v2051
    %v2602 = vpack.c.b16 %v2162, %v2052
    %v2603 = vpack.c.b16 %v2163, %v2053
    %v2604 = vpack.c.b16 %v2164, %v2054
    %v2605 = vpack.c.b16 %v2165, %v2055
    %v2606 = vpack.c.b16 %v2166, %v2056
    %v2607 = vpack.c.b16 %v2167, %v2057
    %v2608 = vpack.c.b16 %v2168, %v2058
    %v2609 = vpack.c.b16 %v2169, %v2059
    %v2610 = vpack.c.b16 %v2170, %v2170
    %v2611 = vpack.c.b16 %v2171, %v2171
    %v2612 = vpack.c.b16 %v2172, %v2172
    %v2613 = vpack.c.b16 %v2173, %v2173
    %v2614 = vpack.c.b16 %v2174, %v2174
    %v2615 = vpack.c.b16 %v2175, %v2175
    %v2616 = vpack.c.b16 %v2176, %v2176
    %v2617 = vpack.c.b16 %v2177, %v2177
    %v2618 = vpack.c.b16 %v2178, %v2178
    %v2619 = vpack.c.b16 %v2179, %v2179
    %v2620 = vpack.c.b16 %v2180, %v2180
    %v2621 = vpack.c.b16 %v2181, %v2181
    %v2622 = vpack.c.b16 %v2182, %v2182
    %v2623 = vpack.c.b16 %v2183, %v2183
    %v2624 = vpack.c.b16 %v2184, %v2184
    %v2625 = vpack.c.b16 %v2185, %v2185
    %v2626 = vpack.c.b16 %v2186, %v2186
    %v2627 = vpack.c.b16 %v2187, %v2187
    %v2628 = vpack.c.b16 %v2188, %v2188
    %v2629 = vpack.c.b16 %v2189, %v2189
    %v2630 = vpack.c.b16 %v2190, %v2190
    %v2631 = vpack.c.b16 %v2191, %v2191
    %v2632 = vpack.c.b16 %v2192, %v2192
    %v2633 = vpack.c.b16 %v2193, %v2193
    %v2634 = vpack.c.b16 %v2194, %v2194
    %v2635 = vpack.c.b16 %v2195, %v2195
    %v2636 = vpack.c.b16 %v2196, %v2196
    %v2637 = vpack.c.b16 %v2197, %v2197
    %v2638 = vpack.c.b16 %v2198, %v2198
    %v2639 = vpack.c.b16 %v2199, %v2199
    %v2640 = vpack.c.b16 %v2200, %v2200
    %v2641 = vpack.c.b16 %v2201, %v2201
    %v2642 = vpack.c.b16 %v2202, %v2202
    %v2643 = vpack.c.b16 %v2203, %v2203
    %v2644 = vpack.c.b16 %v2204, %v2204
    %v2645 = vpack.c.b16 %v2205, %v2205
    %v2646 = vpack.c.b16 %v2206, %v2206
    %v2647 = vpack.c.b16 %v2207, %v2207
    %v2648 = vpack.c.b16 %v2208, %v2208
    %v2649 = vpack.c.b16 %v2209, %v2209
    %v2650 = vpack.c.b16 %v2210, %v2210
    %v2651 = vpack.c.b16 %v2211, %v2211
    %v2652 = vpack.c.b16 %v2212, %v2212
    %v2653 = vpack.c.b16 %v2213, %v2213
    %v2654 = vpack.c.b16 %v2214, %v2214
    %v2655 = vpack.c.b16 %v2215, %v2215
    %v2656 = vpack.c.b16 %v2216, %v2216
    %v2657 = vpack.c.b16 %v2217, %v2217
    %v2658 = vpack.c.b16 %v2218, %v2218
    %v2659 = vpack.c.b16 %v2219, %v2219
    %v2660 = vpack.c.b16 %v2220, %v2220
    %v2661 = vpack.c.b16 %v2221, %v2221
    %v2662 = vpack.c.b16 %v2222, %v2222
    %v2663 = vpack.c.b16 %v2223, %v2223
    %v2664 = vpack.c.b16 %v2224, %v2224
    %v2665 = vpack.c.b16 %v2225, %v2225
    %v2666 = vpack.c.b16 %v2226, %v2226
    %v2667 = vpack.c.b16 %v2227, %v2227
    %v2668 = vpack.c.b16 %v2228, %v2228
    %v2669 = vpack.c.b16 %v2229, %v2229
    %v2670 = vpack.c.b16 %v2230, %v2230
    %v2671 = vpack.c.b16 %v2231, %v2231
    %v2672 = vpack.c.b16 %v2232, %v2232
    %v2673 = vpack.c.b16 %v2233, %v2233
    %v2674 = vpack.c.b16 %v2234, %v2234
    %v2675 = vpack.c.b16 %v2235, %v2235
    %v2676 = vpack.c.b16 %v2236, %v2236
    %v2677 = vpack.c.b16 %v2237, %v2237
    %v2678 = vpack.c.b16 %v2238, %v2238
    %v2679 = vpack.c.b16 %v2239, %v2239
    %v2680 = vpack.c.b16 %v2240, %v2240
    %v2681 = vpack.c.b16 %v2241, %v2241
    %v2682 = vpack.c.b16 %v2242, %v2242
    %v2683 = vpack.c.b16 %v2243, %v2243
    %v2684 = vpack.c.b16 %v2244, %v2244
    %v2685 = vpack.c.b16 %v2245, %v2245
    %v2686 = vpack.c.b16 %v2246, %v2246
    %v2687 = vpack.c.b16 %v2247, %v2247
    %v2688 = vpack.c.b16 %v2248, %v2248
    %v2689 = vpack.c.b16 %v2249, %v2249
    %v2690 = vpack.c.b16 %v2250, %v2250
    %v2691 = vpack.c.b16 %v2251, %v2251
    %v2692 = vpack.c.b16 %v2252, %v2252
    %v2693 = vpack.c.b16 %v2253, %v2253
    %v2694 = vpack.c.b16 %v2254, %v2254
    %v2695 = vpack.c.b16 %v2255, %v2255
    %v2696 = vpack.c.b16 %v2256, %v2256
    %v2697 = vpack.c.b16 %v2257, %v2257
    %v2698 = vpack.c.b16 %v2258, %v2258
    %v2699 = vpack.c.b16 %v2259, %v2259
    %v2700 = vpack.c.b16 %v2260, %v2260
    %v2701 = vpack.c.b16 %v2261, %v2261
    %v2702 = vpack.c.b16 %v2262, %v2262
    %v2703 = vpack.c.b16 %v2263, %v2263
    %v2704 = vpack.c.b16 %v2264, %v2264
    %v2705 = vpack.c.b16 %v2265, %v2265
    %v2706 = vpack.c.b16 %v2266, %v2266
    %v2707 = vpack.c.b16 %v2267, %v2267
    %v2708 = vpack.c.b16 %v2268, %v2268
    %v2709 = vpack.c.b16 %v2269, %v2269
    %v2710 = vpack.c.b16 %v2270, %v2270
    %v2711 = vpack.c.b16 %v2271, %v2271
    %v2712 = vpack.c.b16 %v2272, %v2272
    %v2713 = vpack.c.b16 %v2273, %v2273
    %v2714 = vpack.c.b16 %v2274, %v2274
    %v2715 = vpack.c.b16 %v2275, %v2275
    %v2716 = vpack.c.b16 %v2276, %v2276
    %v2717 = vpack.c.b16 %v2277, %v2277
    %v2718 = vpack.c.b16 %v2278, %v2278
    %v2719 = vpack.c.b16 %v2279, %v2279
    %3160 = vmatprep.subr.bf16.mxu0 0
    %3161 = vmatpush1.bf16.xpose.msra.mxu0 0
    %3162 = vmatprep.subr.bf16.mxu0 0
    %3163 = vmatpush1.bf16.xpose.msra.mxu0 0
    %3164 = vmatprep.subr.bf16.mxu0 0
    %3165 = vmatpush1.bf16.xpose.msra.mxu0 0
    %3166 = vmatprep.subr.bf16.mxu0 0
    %3167 = vmatpush1.bf16.xpose.msra.mxu0 0
    %3168 = vmatprep.subr.bf16.mxu0 %v2611
    %3169 = vmatpush1.bf16.xpose.msra.mxu0 %v2610
    %3170 = vmatprep.subr.bf16.mxu0 %v2501
    %3171 = vmatpush1.bf16.xpose.msra.mxu0 %v2500
    %3172 = vmatprep.subr.bf16.mxu0 %v2391
    %3173 = vmatpush1.bf16.xpose.msra.mxu0 %v2390
    %3174 = vmatprep.subr.bf16.mxu0 %v2281
    %3175 = vmatpush1.bf16.xpose.msra.mxu0 %v2280
    %3176 = vmatprep.subr.bf16.mxu0 0
    %3177 = vmatpush2.bf16.xpose.msra.mxu0 0
    %3178 = vmatprep.subr.bf16.mxu0 0
    %3179 = vmatpush2.bf16.xpose.msra.mxu0 0
    %3180 = vmatprep.subr.bf16.mxu0 0
    %3181 = vmatpush2.bf16.xpose.msra.mxu0 0
    %3182 = vmatprep.subr.bf16.mxu0 0
    %3183 = vmatpush2.bf16.xpose.msra.mxu0 0
    %3184 = vmatprep.subr.bf16.mxu0 0
    %3185 = vmatpush2.bf16.xpose.msra.mxu0 0
    %3186 = vmatprep.subr.bf16.mxu0 0
    %3187 = vmatpush2.bf16.xpose.msra.mxu0 0
    %3188 = vmatprep.subr.bf16.mxu0 0
    %3189 = vmatpush2.bf16.xpose.msra.mxu0 0
    %3190 = vmatprep.subr.bf16.mxu0 0
    %3191 = vmatpush2.bf16.xpose.msra.mxu0 0
    %3192 = vmatprep.mubr.bf16.mxu0 %v624
    %3193 = vmatmul.mubr.bf16.gmra.mxu0 %v623
    %v3194 = vpop.f32.mrf.mxu0
    %v3195 = vadd.f32 %v1123, %v3194
    %v3196 = vpop.f32.mrf.mxu0
    %v3197 = vpop.f32.mrf.mxu0
    %v3198 = vpop.f32.mrf.mxu0
    %3199 = vdwg.mxu0
    %3200 = vmatprep.subr.bf16.mxu0 0
    %3201 = vmatpush1.bf16.xpose.msra.mxu0 0
    %3202 = vmatprep.subr.bf16.mxu0 0
    %3203 = vmatpush1.bf16.xpose.msra.mxu0 0
    %3204 = vmatprep.subr.bf16.mxu0 0
    %3205 = vmatpush1.bf16.xpose.msra.mxu0 0
    %3206 = vmatprep.subr.bf16.mxu0 0
    %3207 = vmatpush1.bf16.xpose.msra.mxu0 0
    %3208 = vmatprep.subr.bf16.mxu0 %v2613
    %3209 = vmatpush1.bf16.xpose.msra.mxu0 %v2612
    %3210 = vmatprep.subr.bf16.mxu0 %v2503
    %3211 = vmatpush1.bf16.xpose.msra.mxu0 %v2502
    %3212 = vmatprep.subr.bf16.mxu0 %v2393
    %3213 = vmatpush1.bf16.xpose.msra.mxu0 %v2392
    %3214 = vmatprep.subr.bf16.mxu0 %v2283
    %3215 = vmatpush1.bf16.xpose.msra.mxu0 %v2282
    %3216 = vmatprep.subr.bf16.mxu0 0
    %3217 = vmatpush2.bf16.xpose.msra.mxu0 0
    %3218 = vmatprep.subr.bf16.mxu0 0
    %3219 = vmatpush2.bf16.xpose.msra.mxu0 0
    %3220 = vmatprep.subr.bf16.mxu0 0
    %3221 = vmatpush2.bf16.xpose.msra.mxu0 0
    %3222 = vmatprep.subr.bf16.mxu0 0
    %3223 = vmatpush2.bf16.xpose.msra.mxu0 0
    %3224 = vmatprep.subr.bf16.mxu0 0
    %3225 = vmatpush2.bf16.xpose.msra.mxu0 0
    %3226 = vmatprep.subr.bf16.mxu0 0
    %3227 = vmatpush2.bf16.xpose.msra.mxu0 0
    %3228 = vmatprep.subr.bf16.mxu0 0
    %3229 = vmatpush2.bf16.xpose.msra.mxu0 0
    %3230 = vmatprep.subr.bf16.mxu0 0
    %3231 = vmatpush2.bf16.xpose.msra.mxu0 0
    %3232 = vmatprep.mubr.bf16.mxu0 %v626
    %3233 = vmatmul.mubr.bf16.gmra.mxu0 %v625
    %v3234 = vpop.f32.mrf.mxu0
    %v3235 = vadd.f32 %v3195, %v3234
    %v3236 = vpop.f32.mrf.mxu0
    %v3237 = vpop.f32.mrf.mxu0
    %v3238 = vpop.f32.mrf.mxu0
    %3239 = vdwg.mxu0
    %3240 = vmatprep.subr.bf16.mxu0 0
    %3241 = vmatpush1.bf16.xpose.msra.mxu0 0
    %3242 = vmatprep.subr.bf16.mxu0 0
    %3243 = vmatpush1.bf16.xpose.msra.mxu0 0
    %3244 = vmatprep.subr.bf16.mxu0 0
    %3245 = vmatpush1.bf16.xpose.msra.mxu0 0
    %3246 = vmatprep.subr.bf16.mxu0 0
    %3247 = vmatpush1.bf16.xpose.msra.mxu0 0
    %3248 = vmatprep.subr.bf16.mxu0 %v2615
    %3249 = vmatpush1.bf16.xpose.msra.mxu0 %v2614
    %3250 = vmatprep.subr.bf16.mxu0 %v2505
    %3251 = vmatpush1.bf16.xpose.msra.mxu0 %v2504
    %3252 = vmatprep.subr.bf16.mxu0 %v2395
    %3253 = vmatpush1.bf16.xpose.msra.mxu0 %v2394
    %3254 = vmatprep.subr.bf16.mxu0 %v2285
    %3255 = vmatpush1.bf16.xpose.msra.mxu0 %v2284
    %3256 = vmatprep.subr.bf16.mxu0 0
    %3257 = vmatpush2.bf16.xpose.msra.mxu0 0
    %3258 = vmatprep.subr.bf16.mxu0 0
    %3259 = vmatpush2.bf16.xpose.msra.mxu0 0
    %3260 = vmatprep.subr.bf16.mxu0 0
    %3261 = vmatpush2.bf16.xpose.msra.mxu0 0
    %3262 = vmatprep.subr.bf16.mxu0 0
    %3263 = vmatpush2.bf16.xpose.msra.mxu0 0
    %3264 = vmatprep.subr.bf16.mxu0 0
    %3265 = vmatpush2.bf16.xpose.msra.mxu0 0
    %3266 = vmatprep.subr.bf16.mxu0 0
    %3267 = vmatpush2.bf16.xpose.msra.mxu0 0
    %3268 = vmatprep.subr.bf16.mxu0 0
    %3269 = vmatpush2.bf16.xpose.msra.mxu0 0
    %3270 = vmatprep.subr.bf16.mxu0 0
    %3271 = vmatpush2.bf16.xpose.msra.mxu0 0
    %3272 = vmatprep.mubr.bf16.mxu0 %v628
    %3273 = vmatmul.mubr.bf16.gmra.mxu0 %v627
    %v3274 = vpop.f32.mrf.mxu0
    %v3275 = vadd.f32 %v3235, %v3274
    %v3276 = vpop.f32.mrf.mxu0
    %v3277 = vpop.f32.mrf.mxu0
    %v3278 = vpop.f32.mrf.mxu0
    %3279 = vdwg.mxu0
    %3280 = vmatprep.subr.bf16.mxu0 0
    %3281 = vmatpush1.bf16.xpose.msra.mxu0 0
    %3282 = vmatprep.subr.bf16.mxu0 0
    %3283 = vmatpush1.bf16.xpose.msra.mxu0 0
    %3284 = vmatprep.subr.bf16.mxu0 0
    %3285 = vmatpush1.bf16.xpose.msra.mxu0 0
    %3286 = vmatprep.subr.bf16.mxu0 0
    %3287 = vmatpush1.bf16.xpose.msra.mxu0 0
    %3288 = vmatprep.subr.bf16.mxu0 %v2617
    %3289 = vmatpush1.bf16.xpose.msra.mxu0 %v2616
    %3290 = vmatprep.subr.bf16.mxu0 %v2507
    %3291 = vmatpush1.bf16.xpose.msra.mxu0 %v2506
    %3292 = vmatprep.subr.bf16.mxu0 %v2397
    %3293 = vmatpush1.bf16.xpose.msra.mxu0 %v2396
    %3294 = vmatprep.subr.bf16.mxu0 %v2287
    %3295 = vmatpush1.bf16.xpose.msra.mxu0 %v2286
    %3296 = vmatprep.subr.bf16.mxu0 0
    %3297 = vmatpush2.bf16.xpose.msra.mxu0 0
    %3298 = vmatprep.subr.bf16.mxu0 0
    %3299 = vmatpush2.bf16.xpose.msra.mxu0 0
    %3300 = vmatprep.subr.bf16.mxu0 0
    %3301 = vmatpush2.bf16.xpose.msra.mxu0 0
    %3302 = vmatprep.subr.bf16.mxu0 0
    %3303 = vmatpush2.bf16.xpose.msra.mxu0 0
    %3304 = vmatprep.subr.bf16.mxu0 0
    %3305 = vmatpush2.bf16.xpose.msra.mxu0 0
    %3306 = vmatprep.subr.bf16.mxu0 0
    %3307 = vmatpush2.bf16.xpose.msra.mxu0 0
    %3308 = vmatprep.subr.bf16.mxu0 0
    %3309 = vmatpush2.bf16.xpose.msra.mxu0 0
    %3310 = vmatprep.subr.bf16.mxu0 0
    %3311 = vmatpush2.bf16.xpose.msra.mxu0 0
    %3312 = vmatprep.mubr.bf16.mxu0 %v630
    %3313 = vmatmul.mubr.bf16.gmra.mxu0 %v629
    %v3314 = vpop.f32.mrf.mxu0
    %v3315 = vadd.f32 %v3275, %v3314
    %v3316 = vpop.f32.mrf.mxu0
    %v3317 = vpop.f32.mrf.mxu0
    %v3318 = vpop.f32.mrf.mxu0
    %3319 = vdwg.mxu0
    %3320 = vmatprep.subr.bf16.mxu0 0
    %3321 = vmatpush1.bf16.xpose.msra.mxu0 0
    %3322 = vmatprep.subr.bf16.mxu0 0
    %3323 = vmatpush1.bf16.xpose.msra.mxu0 0
    %3324 = vmatprep.subr.bf16.mxu0 0
    %3325 = vmatpush1.bf16.xpose.msra.mxu0 0
    %3326 = vmatprep.subr.bf16.mxu0 0
    %3327 = vmatpush1.bf16.xpose.msra.mxu0 0
    %3328 = vmatprep.subr.bf16.mxu0 %v2619
    %3329 = vmatpush1.bf16.xpose.msra.mxu0 %v2618
    %3330 = vmatprep.subr.bf16.mxu0 %v2509
    %3331 = vmatpush1.bf16.xpose.msra.mxu0 %v2508
    %3332 = vmatprep.subr.bf16.mxu0 %v2399
    %3333 = vmatpush1.bf16.xpose.msra.mxu0 %v2398
    %3334 = vmatprep.subr.bf16.mxu0 %v2289
    %3335 = vmatpush1.bf16.xpose.msra.mxu0 %v2288
    %3336 = vmatprep.subr.bf16.mxu0 0
    %3337 = vmatpush2.bf16.xpose.msra.mxu0 0
    %3338 = vmatprep.subr.bf16.mxu0 0
    %3339 = vmatpush2.bf16.xpose.msra.mxu0 0
    %3340 = vmatprep.subr.bf16.mxu0 0
    %3341 = vmatpush2.bf16.xpose.msra.mxu0 0
    %3342 = vmatprep.subr.bf16.mxu0 0
    %3343 = vmatpush2.bf16.xpose.msra.mxu0 0
    %3344 = vmatprep.subr.bf16.mxu0 0
    %3345 = vmatpush2.bf16.xpose.msra.mxu0 0
    %3346 = vmatprep.subr.bf16.mxu0 0
    %3347 = vmatpush2.bf16.xpose.msra.mxu0 0
    %3348 = vmatprep.subr.bf16.mxu0 0
    %3349 = vmatpush2.bf16.xpose.msra.mxu0 0
    %3350 = vmatprep.subr.bf16.mxu0 0
    %3351 = vmatpush2.bf16.xpose.msra.mxu0 0
    %3352 = vmatprep.mubr.bf16.mxu0 %v632
    %3353 = vmatmul.mubr.bf16.gmra.mxu0 %v631
    %v3354 = vpop.f32.mrf.mxu0
    %v3355 = vadd.f32 %v3315, %v3354
    %v3356 = vpop.f32.mrf.mxu0
    %v3357 = vpop.f32.mrf.mxu0
    %v3358 = vpop.f32.mrf.mxu0
    %3359 = vdwg.mxu0
    %3360 = vmatprep.subr.bf16.mxu0 0
    %3361 = vmatpush1.bf16.xpose.msra.mxu0 0
    %3362 = vmatprep.subr.bf16.mxu0 0
    %3363 = vmatpush1.bf16.xpose.msra.mxu0 0
    %3364 = vmatprep.subr.bf16.mxu0 0
    %3365 = vmatpush1.bf16.xpose.msra.mxu0 0
    %3366 = vmatprep.subr.bf16.mxu0 0
    %3367 = vmatpush1.bf16.xpose.msra.mxu0 0
    %3368 = vmatprep.subr.bf16.mxu0 %v2621
    %3369 = vmatpush1.bf16.xpose.msra.mxu0 %v2620
    %3370 = vmatprep.subr.bf16.mxu0 %v2511
    %3371 = vmatpush1.bf16.xpose.msra.mxu0 %v2510
    %3372 = vmatprep.subr.bf16.mxu0 %v2401
    %3373 = vmatpush1.bf16.xpose.msra.mxu0 %v2400
    %3374 = vmatprep.subr.bf16.mxu0 %v2291
    %3375 = vmatpush1.bf16.xpose.msra.mxu0 %v2290
    %3376 = vmatprep.subr.bf16.mxu0 0
    %3377 = vmatpush2.bf16.xpose.msra.mxu0 0
    %3378 = vmatprep.subr.bf16.mxu0 0
    %3379 = vmatpush2.bf16.xpose.msra.mxu0 0
    %3380 = vmatprep.subr.bf16.mxu0 0
    %3381 = vmatpush2.bf16.xpose.msra.mxu0 0
    %3382 = vmatprep.subr.bf16.mxu0 0
    %3383 = vmatpush2.bf16.xpose.msra.mxu0 0
    %3384 = vmatprep.subr.bf16.mxu0 0
    %3385 = vmatpush2.bf16.xpose.msra.mxu0 0
    %3386 = vmatprep.subr.bf16.mxu0 0
    %3387 = vmatpush2.bf16.xpose.msra.mxu0 0
    %3388 = vmatprep.subr.bf16.mxu0 0
    %3389 = vmatpush2.bf16.xpose.msra.mxu0 0
    %3390 = vmatprep.subr.bf16.mxu0 0
    %3391 = vmatpush2.bf16.xpose.msra.mxu0 0
    %3392 = vmatprep.mubr.bf16.mxu0 %v634
    %3393 = vmatmul.mubr.bf16.gmra.mxu0 %v633
    %v3394 = vpop.f32.mrf.mxu0
    %v3395 = vadd.f32 %v3355, %v3394
    %v3396 = vpop.f32.mrf.mxu0
    %v3397 = vpop.f32.mrf.mxu0
    %v3398 = vpop.f32.mrf.mxu0
    %3399 = vdwg.mxu0
    %3400 = vmatprep.subr.bf16.mxu0 0
    %3401 = vmatpush1.bf16.xpose.msra.mxu0 0
    %3402 = vmatprep.subr.bf16.mxu0 0
    %3403 = vmatpush1.bf16.xpose.msra.mxu0 0
    %3404 = vmatprep.subr.bf16.mxu0 0
    %3405 = vmatpush1.bf16.xpose.msra.mxu0 0
    %3406 = vmatprep.subr.bf16.mxu0 0
    %3407 = vmatpush1.bf16.xpose.msra.mxu0 0
    %3408 = vmatprep.subr.bf16.mxu0 %v2623
    %3409 = vmatpush1.bf16.xpose.msra.mxu0 %v2622
    %3410 = vmatprep.subr.bf16.mxu0 %v2513
    %3411 = vmatpush1.bf16.xpose.msra.mxu0 %v2512
    %3412 = vmatprep.subr.bf16.mxu0 %v2403
    %3413 = vmatpush1.bf16.xpose.msra.mxu0 %v2402
    %3414 = vmatprep.subr.bf16.mxu0 %v2293
    %3415 = vmatpush1.bf16.xpose.msra.mxu0 %v2292
    %3416 = vmatprep.subr.bf16.mxu0 0
    %3417 = vmatpush2.bf16.xpose.msra.mxu0 0
    %3418 = vmatprep.subr.bf16.mxu0 0
    %3419 = vmatpush2.bf16.xpose.msra.mxu0 0
    %3420 = vmatprep.subr.bf16.mxu0 0
    %3421 = vmatpush2.bf16.xpose.msra.mxu0 0
    %3422 = vmatprep.subr.bf16.mxu0 0
    %3423 = vmatpush2.bf16.xpose.msra.mxu0 0
    %3424 = vmatprep.subr.bf16.mxu0 0
    %3425 = vmatpush2.bf16.xpose.msra.mxu0 0
    %3426 = vmatprep.subr.bf16.mxu0 0
    %3427 = vmatpush2.bf16.xpose.msra.mxu0 0
    %3428 = vmatprep.subr.bf16.mxu0 0
    %3429 = vmatpush2.bf16.xpose.msra.mxu0 0
    %3430 = vmatprep.subr.bf16.mxu0 0
    %3431 = vmatpush2.bf16.xpose.msra.mxu0 0
    %3432 = vmatprep.mubr.bf16.mxu0 %v636
    %3433 = vmatmul.mubr.bf16.gmra.mxu0 %v635
    %v3434 = vpop.f32.mrf.mxu0
    %v3435 = vadd.f32 %v3395, %v3434
    %v3436 = vpop.f32.mrf.mxu0
    %v3437 = vpop.f32.mrf.mxu0
    %v3438 = vpop.f32.mrf.mxu0
    %3439 = vdwg.mxu0
    %3440 = vmatprep.subr.bf16.mxu0 0
    %3441 = vmatpush1.bf16.xpose.msra.mxu0 0
    %3442 = vmatprep.subr.bf16.mxu0 0
    %3443 = vmatpush1.bf16.xpose.msra.mxu0 0
    %3444 = vmatprep.subr.bf16.mxu0 0
    %3445 = vmatpush1.bf16.xpose.msra.mxu0 0
    %3446 = vmatprep.subr.bf16.mxu0 0
    %3447 = vmatpush1.bf16.xpose.msra.mxu0 0
    %3448 = vmatprep.subr.bf16.mxu0 %v2625
    %3449 = vmatpush1.bf16.xpose.msra.mxu0 %v2624
    %3450 = vmatprep.subr.bf16.mxu0 %v2515
    %3451 = vmatpush1.bf16.xpose.msra.mxu0 %v2514
    %3452 = vmatprep.subr.bf16.mxu0 %v2405
    %3453 = vmatpush1.bf16.xpose.msra.mxu0 %v2404
    %3454 = vmatprep.subr.bf16.mxu0 %v2295
    %3455 = vmatpush1.bf16.xpose.msra.mxu0 %v2294
    %3456 = vmatprep.subr.bf16.mxu0 0
    %3457 = vmatpush2.bf16.xpose.msra.mxu0 0
    %3458 = vmatprep.subr.bf16.mxu0 0
    %3459 = vmatpush2.bf16.xpose.msra.mxu0 0
    %3460 = vmatprep.subr.bf16.mxu0 0
    %3461 = vmatpush2.bf16.xpose.msra.mxu0 0
    %3462 = vmatprep.subr.bf16.mxu0 0
    %3463 = vmatpush2.bf16.xpose.msra.mxu0 0
    %3464 = vmatprep.subr.bf16.mxu0 0
    %3465 = vmatpush2.bf16.xpose.msra.mxu0 0
    %3466 = vmatprep.subr.bf16.mxu0 0
    %3467 = vmatpush2.bf16.xpose.msra.mxu0 0
    %3468 = vmatprep.subr.bf16.mxu0 0
    %3469 = vmatpush2.bf16.xpose.msra.mxu0 0
    %3470 = vmatprep.subr.bf16.mxu0 0
    %3471 = vmatpush2.bf16.xpose.msra.mxu0 0
    %3472 = vmatprep.mubr.bf16.mxu0 %v638
    %3473 = vmatmul.mubr.bf16.gmra.mxu0 %v637
    %v3474 = vpop.f32.mrf.mxu0
    %v3475 = vadd.f32 %v3435, %v3474
    %v3476 = vpop.f32.mrf.mxu0
    %v3477 = vpop.f32.mrf.mxu0
    %v3478 = vpop.f32.mrf.mxu0
    %3479 = vdwg.mxu0
    %3480 = vmatprep.subr.bf16.mxu0 0
    %3481 = vmatpush1.bf16.xpose.msra.mxu0 0
    %3482 = vmatprep.subr.bf16.mxu0 0
    %3483 = vmatpush1.bf16.xpose.msra.mxu0 0
    %3484 = vmatprep.subr.bf16.mxu0 0
    %3485 = vmatpush1.bf16.xpose.msra.mxu0 0
    %3486 = vmatprep.subr.bf16.mxu0 0
    %3487 = vmatpush1.bf16.xpose.msra.mxu0 0
    %3488 = vmatprep.subr.bf16.mxu0 %v2627
    %3489 = vmatpush1.bf16.xpose.msra.mxu0 %v2626
    %3490 = vmatprep.subr.bf16.mxu0 %v2517
    %3491 = vmatpush1.bf16.xpose.msra.mxu0 %v2516
    %3492 = vmatprep.subr.bf16.mxu0 %v2407
    %3493 = vmatpush1.bf16.xpose.msra.mxu0 %v2406
    %3494 = vmatprep.subr.bf16.mxu0 %v2297
    %3495 = vmatpush1.bf16.xpose.msra.mxu0 %v2296
    %3496 = vmatprep.subr.bf16.mxu0 0
    %3497 = vmatpush2.bf16.xpose.msra.mxu0 0
    %3498 = vmatprep.subr.bf16.mxu0 0
    %3499 = vmatpush2.bf16.xpose.msra.mxu0 0
    %3500 = vmatprep.subr.bf16.mxu0 0
    %3501 = vmatpush2.bf16.xpose.msra.mxu0 0
    %3502 = vmatprep.subr.bf16.mxu0 0
    %3503 = vmatpush2.bf16.xpose.msra.mxu0 0
    %3504 = vmatprep.subr.bf16.mxu0 0
    %3505 = vmatpush2.bf16.xpose.msra.mxu0 0
    %3506 = vmatprep.subr.bf16.mxu0 0
    %3507 = vmatpush2.bf16.xpose.msra.mxu0 0
    %3508 = vmatprep.subr.bf16.mxu0 0
    %3509 = vmatpush2.bf16.xpose.msra.mxu0 0
    %3510 = vmatprep.subr.bf16.mxu0 0
    %3511 = vmatpush2.bf16.xpose.msra.mxu0 0
    %3512 = vmatprep.mubr.bf16.mxu0 %v640
    %3513 = vmatmul.mubr.bf16.gmra.mxu0 %v639
    %v3514 = vpop.f32.mrf.mxu0
    %v3515 = vadd.f32 %v3475, %v3514
    %v3516 = vpop.f32.mrf.mxu0
    %v3517 = vpop.f32.mrf.mxu0
    %v3518 = vpop.f32.mrf.mxu0
    %3519 = vdwg.mxu0
    %3520 = vmatprep.subr.bf16.mxu0 0
    %3521 = vmatpush1.bf16.xpose.msra.mxu0 0
    %3522 = vmatprep.subr.bf16.mxu0 0
    %3523 = vmatpush1.bf16.xpose.msra.mxu0 0
    %3524 = vmatprep.subr.bf16.mxu0 0
    %3525 = vmatpush1.bf16.xpose.msra.mxu0 0
    %3526 = vmatprep.subr.bf16.mxu0 0
    %3527 = vmatpush1.bf16.xpose.msra.mxu0 0
    %3528 = vmatprep.subr.bf16.mxu0 %v2629
    %3529 = vmatpush1.bf16.xpose.msra.mxu0 %v2628
    %3530 = vmatprep.subr.bf16.mxu0 %v2519
    %3531 = vmatpush1.bf16.xpose.msra.mxu0 %v2518
    %3532 = vmatprep.subr.bf16.mxu0 %v2409
    %3533 = vmatpush1.bf16.xpose.msra.mxu0 %v2408
    %3534 = vmatprep.subr.bf16.mxu0 %v2299
    %3535 = vmatpush1.bf16.xpose.msra.mxu0 %v2298
    %3536 = vmatprep.subr.bf16.mxu0 0
    %3537 = vmatpush2.bf16.xpose.msra.mxu0 0
    %3538 = vmatprep.subr.bf16.mxu0 0
    %3539 = vmatpush2.bf16.xpose.msra.mxu0 0
    %3540 = vmatprep.subr.bf16.mxu0 0
    %3541 = vmatpush2.bf16.xpose.msra.mxu0 0
    %3542 = vmatprep.subr.bf16.mxu0 0
    %3543 = vmatpush2.bf16.xpose.msra.mxu0 0
    %3544 = vmatprep.subr.bf16.mxu0 0
    %3545 = vmatpush2.bf16.xpose.msra.mxu0 0
    %3546 = vmatprep.subr.bf16.mxu0 0
    %3547 = vmatpush2.bf16.xpose.msra.mxu0 0
    %3548 = vmatprep.subr.bf16.mxu0 0
    %3549 = vmatpush2.bf16.xpose.msra.mxu0 0
    %3550 = vmatprep.subr.bf16.mxu0 0
    %3551 = vmatpush2.bf16.xpose.msra.mxu0 0
    %3552 = vmatprep.mubr.bf16.mxu0 %v642
    %3553 = vmatmul.mubr.bf16.gmra.mxu0 %v641
    %v3554 = vpop.f32.mrf.mxu0
    %v3555 = vadd.f32 %v3515, %v3554
    %v3556 = vpop.f32.mrf.mxu0
    %v3557 = vpop.f32.mrf.mxu0
    %v3558 = vpop.f32.mrf.mxu0
    %3559 = vdwg.mxu0
    %3560 = vmatprep.subr.bf16.mxu0 0
    %3561 = vmatpush1.bf16.xpose.msra.mxu0 0
    %3562 = vmatprep.subr.bf16.mxu0 0
    %3563 = vmatpush1.bf16.xpose.msra.mxu0 0
    %3564 = vmatprep.subr.bf16.mxu0 0
    %3565 = vmatpush1.bf16.xpose.msra.mxu0 0
    %3566 = vmatprep.subr.bf16.mxu0 0
    %3567 = vmatpush1.bf16.xpose.msra.mxu0 0
    %3568 = vmatprep.subr.bf16.mxu0 %v2631
    %3569 = vmatpush1.bf16.xpose.msra.mxu0 %v2630
    %3570 = vmatprep.subr.bf16.mxu0 %v2521
    %3571 = vmatpush1.bf16.xpose.msra.mxu0 %v2520
    %3572 = vmatprep.subr.bf16.mxu0 %v2411
    %3573 = vmatpush1.bf16.xpose.msra.mxu0 %v2410
    %3574 = vmatprep.subr.bf16.mxu0 %v2301
    %3575 = vmatpush1.bf16.xpose.msra.mxu0 %v2300
    %3576 = vmatprep.subr.bf16.mxu0 0
    %3577 = vmatpush2.bf16.xpose.msra.mxu0 0
    %3578 = vmatprep.subr.bf16.mxu0 0
    %3579 = vmatpush2.bf16.xpose.msra.mxu0 0
    %3580 = vmatprep.subr.bf16.mxu0 0
    %3581 = vmatpush2.bf16.xpose.msra.mxu0 0
    %3582 = vmatprep.subr.bf16.mxu0 0
    %3583 = vmatpush2.bf16.xpose.msra.mxu0 0
    %3584 = vmatprep.subr.bf16.mxu0 0
    %3585 = vmatpush2.bf16.xpose.msra.mxu0 0
    %3586 = vmatprep.subr.bf16.mxu0 0
    %3587 = vmatpush2.bf16.xpose.msra.mxu0 0
    %3588 = vmatprep.subr.bf16.mxu0 0
    %3589 = vmatpush2.bf16.xpose.msra.mxu0 0
    %3590 = vmatprep.subr.bf16.mxu0 0
    %3591 = vmatpush2.bf16.xpose.msra.mxu0 0
    %3592 = vmatprep.mubr.bf16.mxu0 %v644
    %3593 = vmatmul.mubr.bf16.gmra.mxu0 %v643
    %v3594 = vpop.f32.mrf.mxu0
    %v3595 = vadd.f32 %v3555, %v3594
    %v3596 = vpop.f32.mrf.mxu0
    %v3597 = vpop.f32.mrf.mxu0
    %v3598 = vpop.f32.mrf.mxu0
    %3599 = vdwg.mxu0
    %3600 = vmatprep.subr.bf16.mxu0 0
    %3601 = vmatpush1.bf16.xpose.msra.mxu0 0
    %3602 = vmatprep.subr.bf16.mxu0 0
    %3603 = vmatpush1.bf16.xpose.msra.mxu0 0
    %3604 = vmatprep.subr.bf16.mxu0 0
    %3605 = vmatpush1.bf16.xpose.msra.mxu0 0
    %3606 = vmatprep.subr.bf16.mxu0 0
    %3607 = vmatpush1.bf16.xpose.msra.mxu0 0
    %3608 = vmatprep.subr.bf16.mxu0 %v2633
    %3609 = vmatpush1.bf16.xpose.msra.mxu0 %v2632
    %3610 = vmatprep.subr.bf16.mxu0 %v2523
    %3611 = vmatpush1.bf16.xpose.msra.mxu0 %v2522
    %3612 = vmatprep.subr.bf16.mxu0 %v2413
    %3613 = vmatpush1.bf16.xpose.msra.mxu0 %v2412
    %3614 = vmatprep.subr.bf16.mxu0 %v2303
    %3615 = vmatpush1.bf16.xpose.msra.mxu0 %v2302
    %3616 = vmatprep.subr.bf16.mxu0 0
    %3617 = vmatpush2.bf16.xpose.msra.mxu0 0
    %3618 = vmatprep.subr.bf16.mxu0 0
    %3619 = vmatpush2.bf16.xpose.msra.mxu0 0
    %3620 = vmatprep.subr.bf16.mxu0 0
    %3621 = vmatpush2.bf16.xpose.msra.mxu0 0
    %3622 = vmatprep.subr.bf16.mxu0 0
    %3623 = vmatpush2.bf16.xpose.msra.mxu0 0
    %3624 = vmatprep.subr.bf16.mxu0 0
    %3625 = vmatpush2.bf16.xpose.msra.mxu0 0
    %3626 = vmatprep.subr.bf16.mxu0 0
    %3627 = vmatpush2.bf16.xpose.msra.mxu0 0
    %3628 = vmatprep.subr.bf16.mxu0 0
    %3629 = vmatpush2.bf16.xpose.msra.mxu0 0
    %3630 = vmatprep.subr.bf16.mxu0 0
    %3631 = vmatpush2.bf16.xpose.msra.mxu0 0
    %3632 = vmatprep.mubr.bf16.mxu0 %v646
    %3633 = vmatmul.mubr.bf16.gmra.mxu0 %v645
    %v3634 = vpop.f32.mrf.mxu0
    %v3635 = vadd.f32 %v3595, %v3634
    %v3636 = vpop.f32.mrf.mxu0
    %v3637 = vpop.f32.mrf.mxu0
    %v3638 = vpop.f32.mrf.mxu0
    %3639 = vdwg.mxu0
    %3640 = vmatprep.subr.bf16.mxu0 0
    %3641 = vmatpush1.bf16.xpose.msra.mxu0 0
    %3642 = vmatprep.subr.bf16.mxu0 0
    %3643 = vmatpush1.bf16.xpose.msra.mxu0 0
    %3644 = vmatprep.subr.bf16.mxu0 0
    %3645 = vmatpush1.bf16.xpose.msra.mxu0 0
    %3646 = vmatprep.subr.bf16.mxu0 0
    %3647 = vmatpush1.bf16.xpose.msra.mxu0 0
    %3648 = vmatprep.subr.bf16.mxu0 %v2635
    %3649 = vmatpush1.bf16.xpose.msra.mxu0 %v2634
    %3650 = vmatprep.subr.bf16.mxu0 %v2525
    %3651 = vmatpush1.bf16.xpose.msra.mxu0 %v2524
    %3652 = vmatprep.subr.bf16.mxu0 %v2415
    %3653 = vmatpush1.bf16.xpose.msra.mxu0 %v2414
    %3654 = vmatprep.subr.bf16.mxu0 %v2305
    %3655 = vmatpush1.bf16.xpose.msra.mxu0 %v2304
    %3656 = vmatprep.subr.bf16.mxu0 0
    %3657 = vmatpush2.bf16.xpose.msra.mxu0 0
    %3658 = vmatprep.subr.bf16.mxu0 0
    %3659 = vmatpush2.bf16.xpose.msra.mxu0 0
    %3660 = vmatprep.subr.bf16.mxu0 0
    %3661 = vmatpush2.bf16.xpose.msra.mxu0 0
    %3662 = vmatprep.subr.bf16.mxu0 0
    %3663 = vmatpush2.bf16.xpose.msra.mxu0 0
    %3664 = vmatprep.subr.bf16.mxu0 0
    %3665 = vmatpush2.bf16.xpose.msra.mxu0 0
    %3666 = vmatprep.subr.bf16.mxu0 0
    %3667 = vmatpush2.bf16.xpose.msra.mxu0 0
    %3668 = vmatprep.subr.bf16.mxu0 0
    %3669 = vmatpush2.bf16.xpose.msra.mxu0 0
    %3670 = vmatprep.subr.bf16.mxu0 0
    %3671 = vmatpush2.bf16.xpose.msra.mxu0 0
    %3672 = vmatprep.mubr.bf16.mxu0 %v648
    %3673 = vmatmul.mubr.bf16.gmra.mxu0 %v647
    %v3674 = vpop.f32.mrf.mxu0
    %v3675 = vadd.f32 %v3635, %v3674
    %v3676 = vpop.f32.mrf.mxu0
    %v3677 = vpop.f32.mrf.mxu0
    %v3678 = vpop.f32.mrf.mxu0
    %3679 = vdwg.mxu0
    %3680 = vmatprep.subr.bf16.mxu0 0
    %3681 = vmatpush1.bf16.xpose.msra.mxu0 0
    %3682 = vmatprep.subr.bf16.mxu0 0
    %3683 = vmatpush1.bf16.xpose.msra.mxu0 0
    %3684 = vmatprep.subr.bf16.mxu0 0
    %3685 = vmatpush1.bf16.xpose.msra.mxu0 0
    %3686 = vmatprep.subr.bf16.mxu0 0
    %3687 = vmatpush1.bf16.xpose.msra.mxu0 0
    %3688 = vmatprep.subr.bf16.mxu0 %v2637
    %3689 = vmatpush1.bf16.xpose.msra.mxu0 %v2636
    %3690 = vmatprep.subr.bf16.mxu0 %v2527
    %3691 = vmatpush1.bf16.xpose.msra.mxu0 %v2526
    %3692 = vmatprep.subr.bf16.mxu0 %v2417
    %3693 = vmatpush1.bf16.xpose.msra.mxu0 %v2416
    %3694 = vmatprep.subr.bf16.mxu0 %v2307
    %3695 = vmatpush1.bf16.xpose.msra.mxu0 %v2306
    %3696 = vmatprep.subr.bf16.mxu0 0
    %3697 = vmatpush2.bf16.xpose.msra.mxu0 0
    %3698 = vmatprep.subr.bf16.mxu0 0
    %3699 = vmatpush2.bf16.xpose.msra.mxu0 0
    %3700 = vmatprep.subr.bf16.mxu0 0
    %3701 = vmatpush2.bf16.xpose.msra.mxu0 0
    %3702 = vmatprep.subr.bf16.mxu0 0
    %3703 = vmatpush2.bf16.xpose.msra.mxu0 0
    %3704 = vmatprep.subr.bf16.mxu0 0
    %3705 = vmatpush2.bf16.xpose.msra.mxu0 0
    %3706 = vmatprep.subr.bf16.mxu0 0
    %3707 = vmatpush2.bf16.xpose.msra.mxu0 0
    %3708 = vmatprep.subr.bf16.mxu0 0
    %3709 = vmatpush2.bf16.xpose.msra.mxu0 0
    %3710 = vmatprep.subr.bf16.mxu0 0
    %3711 = vmatpush2.bf16.xpose.msra.mxu0 0
    %3712 = vmatprep.mubr.bf16.mxu0 %v650
    %3713 = vmatmul.mubr.bf16.gmra.mxu0 %v649
    %v3714 = vpop.f32.mrf.mxu0
    %v3715 = vadd.f32 %v3675, %v3714
    %v3716 = vpop.f32.mrf.mxu0
    %v3717 = vpop.f32.mrf.mxu0
    %v3718 = vpop.f32.mrf.mxu0
    %3719 = vdwg.mxu0
    %3720 = vmatprep.subr.bf16.mxu0 0
    %3721 = vmatpush1.bf16.xpose.msra.mxu0 0
    %3722 = vmatprep.subr.bf16.mxu0 0
    %3723 = vmatpush1.bf16.xpose.msra.mxu0 0
    %3724 = vmatprep.subr.bf16.mxu0 0
    %3725 = vmatpush1.bf16.xpose.msra.mxu0 0
    %3726 = vmatprep.subr.bf16.mxu0 0
    %3727 = vmatpush1.bf16.xpose.msra.mxu0 0
    %3728 = vmatprep.subr.bf16.mxu0 %v2639
    %3729 = vmatpush1.bf16.xpose.msra.mxu0 %v2638
    %3730 = vmatprep.subr.bf16.mxu0 %v2529
    %3731 = vmatpush1.bf16.xpose.msra.mxu0 %v2528
    %3732 = vmatprep.subr.bf16.mxu0 %v2419
    %3733 = vmatpush1.bf16.xpose.msra.mxu0 %v2418
    %3734 = vmatprep.subr.bf16.mxu0 %v2309
    %3735 = vmatpush1.bf16.xpose.msra.mxu0 %v2308
    %3736 = vmatprep.subr.bf16.mxu0 0
    %3737 = vmatpush2.bf16.xpose.msra.mxu0 0
    %3738 = vmatprep.subr.bf16.mxu0 0
    %3739 = vmatpush2.bf16.xpose.msra.mxu0 0
    %3740 = vmatprep.subr.bf16.mxu0 0
    %3741 = vmatpush2.bf16.xpose.msra.mxu0 0
    %3742 = vmatprep.subr.bf16.mxu0 0
    %3743 = vmatpush2.bf16.xpose.msra.mxu0 0
    %3744 = vmatprep.subr.bf16.mxu0 0
    %3745 = vmatpush2.bf16.xpose.msra.mxu0 0
    %3746 = vmatprep.subr.bf16.mxu0 0
    %3747 = vmatpush2.bf16.xpose.msra.mxu0 0
    %3748 = vmatprep.subr.bf16.mxu0 0
    %3749 = vmatpush2.bf16.xpose.msra.mxu0 0
    %3750 = vmatprep.subr.bf16.mxu0 0
    %3751 = vmatpush2.bf16.xpose.msra.mxu0 0
    %3752 = vmatprep.mubr.bf16.mxu0 %v652
    %3753 = vmatmul.mubr.bf16.gmra.mxu0 %v651
    %v3754 = vpop.f32.mrf.mxu0
    %v3755 = vadd.f32 %v3715, %v3754
    %v3756 = vpop.f32.mrf.mxu0
    %v3757 = vpop.f32.mrf.mxu0
    %v3758 = vpop.f32.mrf.mxu0
    %3759 = vdwg.mxu0
    %3760 = vmatprep.subr.bf16.mxu0 0
    %3761 = vmatpush1.bf16.xpose.msra.mxu0 0
    %3762 = vmatprep.subr.bf16.mxu0 0
    %3763 = vmatpush1.bf16.xpose.msra.mxu0 0
    %3764 = vmatprep.subr.bf16.mxu0 0
    %3765 = vmatpush1.bf16.xpose.msra.mxu0 0
    %3766 = vmatprep.subr.bf16.mxu0 0
    %3767 = vmatpush1.bf16.xpose.msra.mxu0 0
    %3768 = vmatprep.subr.bf16.mxu0 %v2641
    %3769 = vmatpush1.bf16.xpose.msra.mxu0 %v2640
    %3770 = vmatprep.subr.bf16.mxu0 %v2531
    %3771 = vmatpush1.bf16.xpose.msra.mxu0 %v2530
    %3772 = vmatprep.subr.bf16.mxu0 %v2421
    %3773 = vmatpush1.bf16.xpose.msra.mxu0 %v2420
    %3774 = vmatprep.subr.bf16.mxu0 %v2311
    %3775 = vmatpush1.bf16.xpose.msra.mxu0 %v2310
    %3776 = vmatprep.subr.bf16.mxu0 0
    %3777 = vmatpush2.bf16.xpose.msra.mxu0 0
    %3778 = vmatprep.subr.bf16.mxu0 0
    %3779 = vmatpush2.bf16.xpose.msra.mxu0 0
    %3780 = vmatprep.subr.bf16.mxu0 0
    %3781 = vmatpush2.bf16.xpose.msra.mxu0 0
    %3782 = vmatprep.subr.bf16.mxu0 0
    %3783 = vmatpush2.bf16.xpose.msra.mxu0 0
    %3784 = vmatprep.subr.bf16.mxu0 0
    %3785 = vmatpush2.bf16.xpose.msra.mxu0 0
    %3786 = vmatprep.subr.bf16.mxu0 0
    %3787 = vmatpush2.bf16.xpose.msra.mxu0 0
    %3788 = vmatprep.subr.bf16.mxu0 0
    %3789 = vmatpush2.bf16.xpose.msra.mxu0 0
    %3790 = vmatprep.subr.bf16.mxu0 0
    %3791 = vmatpush2.bf16.xpose.msra.mxu0 0
    %3792 = vmatprep.mubr.bf16.mxu0 %v654
    %3793 = vmatmul.mubr.bf16.gmra.mxu0 %v653
    %v3794 = vpop.f32.mrf.mxu0
    %v3795 = vadd.f32 %v3755, %v3794
    %v3796 = vpop.f32.mrf.mxu0
    %v3797 = vpop.f32.mrf.mxu0
    %v3798 = vpop.f32.mrf.mxu0
    %3799 = vdwg.mxu0
    %3800 = vmatprep.subr.bf16.mxu0 0
    %3801 = vmatpush1.bf16.xpose.msra.mxu0 0
    %3802 = vmatprep.subr.bf16.mxu0 0
    %3803 = vmatpush1.bf16.xpose.msra.mxu0 0
    %3804 = vmatprep.subr.bf16.mxu0 0
    %3805 = vmatpush1.bf16.xpose.msra.mxu0 0
    %3806 = vmatprep.subr.bf16.mxu0 0
    %3807 = vmatpush1.bf16.xpose.msra.mxu0 0
    %3808 = vmatprep.subr.bf16.mxu0 %v2643
    %3809 = vmatpush1.bf16.xpose.msra.mxu0 %v2642
    %3810 = vmatprep.subr.bf16.mxu0 %v2533
    %3811 = vmatpush1.bf16.xpose.msra.mxu0 %v2532
    %3812 = vmatprep.subr.bf16.mxu0 %v2423
    %3813 = vmatpush1.bf16.xpose.msra.mxu0 %v2422
    %3814 = vmatprep.subr.bf16.mxu0 %v2313
    %3815 = vmatpush1.bf16.xpose.msra.mxu0 %v2312
    %3816 = vmatprep.subr.bf16.mxu0 0
    %3817 = vmatpush2.bf16.xpose.msra.mxu0 0
    %3818 = vmatprep.subr.bf16.mxu0 0
    %3819 = vmatpush2.bf16.xpose.msra.mxu0 0
    %3820 = vmatprep.subr.bf16.mxu0 0
    %3821 = vmatpush2.bf16.xpose.msra.mxu0 0
    %3822 = vmatprep.subr.bf16.mxu0 0
    %3823 = vmatpush2.bf16.xpose.msra.mxu0 0
    %3824 = vmatprep.subr.bf16.mxu0 0
    %3825 = vmatpush2.bf16.xpose.msra.mxu0 0
    %3826 = vmatprep.subr.bf16.mxu0 0
    %3827 = vmatpush2.bf16.xpose.msra.mxu0 0
    %3828 = vmatprep.subr.bf16.mxu0 0
    %3829 = vmatpush2.bf16.xpose.msra.mxu0 0
    %3830 = vmatprep.subr.bf16.mxu0 0
    %3831 = vmatpush2.bf16.xpose.msra.mxu0 0
    %3832 = vmatprep.mubr.bf16.mxu0 %v656
    %3833 = vmatmul.mubr.bf16.gmra.mxu0 %v655
    %v3834 = vpop.f32.mrf.mxu0
    %v3835 = vadd.f32 %v3795, %v3834
    %v3836 = vpop.f32.mrf.mxu0
    %v3837 = vpop.f32.mrf.mxu0
    %v3838 = vpop.f32.mrf.mxu0
    %3839 = vdwg.mxu0
    %3840 = vmatprep.subr.bf16.mxu0 0
    %3841 = vmatpush1.bf16.xpose.msra.mxu0 0
    %3842 = vmatprep.subr.bf16.mxu0 0
    %3843 = vmatpush1.bf16.xpose.msra.mxu0 0
    %3844 = vmatprep.subr.bf16.mxu0 0
    %3845 = vmatpush1.bf16.xpose.msra.mxu0 0
    %3846 = vmatprep.subr.bf16.mxu0 0
    %3847 = vmatpush1.bf16.xpose.msra.mxu0 0
    %3848 = vmatprep.subr.bf16.mxu0 %v2645
    %3849 = vmatpush1.bf16.xpose.msra.mxu0 %v2644
    %3850 = vmatprep.subr.bf16.mxu0 %v2535
    %3851 = vmatpush1.bf16.xpose.msra.mxu0 %v2534
    %3852 = vmatprep.subr.bf16.mxu0 %v2425
    %3853 = vmatpush1.bf16.xpose.msra.mxu0 %v2424
    %3854 = vmatprep.subr.bf16.mxu0 %v2315
    %3855 = vmatpush1.bf16.xpose.msra.mxu0 %v2314
    %3856 = vmatprep.subr.bf16.mxu0 0
    %3857 = vmatpush2.bf16.xpose.msra.mxu0 0
    %3858 = vmatprep.subr.bf16.mxu0 0
    %3859 = vmatpush2.bf16.xpose.msra.mxu0 0
    %3860 = vmatprep.subr.bf16.mxu0 0
    %3861 = vmatpush2.bf16.xpose.msra.mxu0 0
    %3862 = vmatprep.subr.bf16.mxu0 0
    %3863 = vmatpush2.bf16.xpose.msra.mxu0 0
    %3864 = vmatprep.subr.bf16.mxu0 0
    %3865 = vmatpush2.bf16.xpose.msra.mxu0 0
    %3866 = vmatprep.subr.bf16.mxu0 0
    %3867 = vmatpush2.bf16.xpose.msra.mxu0 0
    %3868 = vmatprep.subr.bf16.mxu0 0
    %3869 = vmatpush2.bf16.xpose.msra.mxu0 0
    %3870 = vmatprep.subr.bf16.mxu0 0
    %3871 = vmatpush2.bf16.xpose.msra.mxu0 0
    %3872 = vmatprep.mubr.bf16.mxu0 %v658
    %3873 = vmatmul.mubr.bf16.gmra.mxu0 %v657
    %v3874 = vpop.f32.mrf.mxu0
    %v3875 = vadd.f32 %v3835, %v3874
    %v3876 = vpop.f32.mrf.mxu0
    %v3877 = vpop.f32.mrf.mxu0
    %v3878 = vpop.f32.mrf.mxu0
    %3879 = vdwg.mxu0
    %3880 = vmatprep.subr.bf16.mxu0 0
    %3881 = vmatpush1.bf16.xpose.msra.mxu0 0
    %3882 = vmatprep.subr.bf16.mxu0 0
    %3883 = vmatpush1.bf16.xpose.msra.mxu0 0
    %3884 = vmatprep.subr.bf16.mxu0 0
    %3885 = vmatpush1.bf16.xpose.msra.mxu0 0
    %3886 = vmatprep.subr.bf16.mxu0 0
    %3887 = vmatpush1.bf16.xpose.msra.mxu0 0
    %3888 = vmatprep.subr.bf16.mxu0 %v2647
    %3889 = vmatpush1.bf16.xpose.msra.mxu0 %v2646
    %3890 = vmatprep.subr.bf16.mxu0 %v2537
    %3891 = vmatpush1.bf16.xpose.msra.mxu0 %v2536
    %3892 = vmatprep.subr.bf16.mxu0 %v2427
    %3893 = vmatpush1.bf16.xpose.msra.mxu0 %v2426
    %3894 = vmatprep.subr.bf16.mxu0 %v2317
    %3895 = vmatpush1.bf16.xpose.msra.mxu0 %v2316
    %3896 = vmatprep.subr.bf16.mxu0 0
    %3897 = vmatpush2.bf16.xpose.msra.mxu0 0
    %3898 = vmatprep.subr.bf16.mxu0 0
    %3899 = vmatpush2.bf16.xpose.msra.mxu0 0
    %3900 = vmatprep.subr.bf16.mxu0 0
    %3901 = vmatpush2.bf16.xpose.msra.mxu0 0
    %3902 = vmatprep.subr.bf16.mxu0 0
    %3903 = vmatpush2.bf16.xpose.msra.mxu0 0
    %3904 = vmatprep.subr.bf16.mxu0 0
    %3905 = vmatpush2.bf16.xpose.msra.mxu0 0
    %3906 = vmatprep.subr.bf16.mxu0 0
    %3907 = vmatpush2.bf16.xpose.msra.mxu0 0
    %3908 = vmatprep.subr.bf16.mxu0 0
    %3909 = vmatpush2.bf16.xpose.msra.mxu0 0
    %3910 = vmatprep.subr.bf16.mxu0 0
    %3911 = vmatpush2.bf16.xpose.msra.mxu0 0
    %3912 = vmatprep.mubr.bf16.mxu0 %v660
    %3913 = vmatmul.mubr.bf16.gmra.mxu0 %v659
    %v3914 = vpop.f32.mrf.mxu0
    %v3915 = vadd.f32 %v3875, %v3914
    %v3916 = vpop.f32.mrf.mxu0
    %v3917 = vpop.f32.mrf.mxu0
    %v3918 = vpop.f32.mrf.mxu0
    %3919 = vdwg.mxu0
    %3920 = vmatprep.subr.bf16.mxu0 0
    %3921 = vmatpush1.bf16.xpose.msra.mxu0 0
    %3922 = vmatprep.subr.bf16.mxu0 0
    %3923 = vmatpush1.bf16.xpose.msra.mxu0 0
    %3924 = vmatprep.subr.bf16.mxu0 0
    %3925 = vmatpush1.bf16.xpose.msra.mxu0 0
    %3926 = vmatprep.subr.bf16.mxu0 0
    %3927 = vmatpush1.bf16.xpose.msra.mxu0 0
    %3928 = vmatprep.subr.bf16.mxu0 %v2649
    %3929 = vmatpush1.bf16.xpose.msra.mxu0 %v2648
    %3930 = vmatprep.subr.bf16.mxu0 %v2539
    %3931 = vmatpush1.bf16.xpose.msra.mxu0 %v2538
    %3932 = vmatprep.subr.bf16.mxu0 %v2429
    %3933 = vmatpush1.bf16.xpose.msra.mxu0 %v2428
    %3934 = vmatprep.subr.bf16.mxu0 %v2319
    %3935 = vmatpush1.bf16.xpose.msra.mxu0 %v2318
    %3936 = vmatprep.subr.bf16.mxu0 0
    %3937 = vmatpush2.bf16.xpose.msra.mxu0 0
    %3938 = vmatprep.subr.bf16.mxu0 0
    %3939 = vmatpush2.bf16.xpose.msra.mxu0 0
    %3940 = vmatprep.subr.bf16.mxu0 0
    %3941 = vmatpush2.bf16.xpose.msra.mxu0 0
    %3942 = vmatprep.subr.bf16.mxu0 0
    %3943 = vmatpush2.bf16.xpose.msra.mxu0 0
    %3944 = vmatprep.subr.bf16.mxu0 0
    %3945 = vmatpush2.bf16.xpose.msra.mxu0 0
    %3946 = vmatprep.subr.bf16.mxu0 0
    %3947 = vmatpush2.bf16.xpose.msra.mxu0 0
    %3948 = vmatprep.subr.bf16.mxu0 0
    %3949 = vmatpush2.bf16.xpose.msra.mxu0 0
    %3950 = vmatprep.subr.bf16.mxu0 0
    %3951 = vmatpush2.bf16.xpose.msra.mxu0 0
    %3952 = vmatprep.mubr.bf16.mxu0 %v662
    %3953 = vmatmul.mubr.bf16.gmra.mxu0 %v661
    %v3954 = vpop.f32.mrf.mxu0
    %v3955 = vadd.f32 %v3915, %v3954
    %v3956 = vpop.f32.mrf.mxu0
    %v3957 = vpop.f32.mrf.mxu0
    %v3958 = vpop.f32.mrf.mxu0
    %3959 = vdwg.mxu0
    %3960 = vmatprep.subr.bf16.mxu0 0
    %3961 = vmatpush1.bf16.xpose.msra.mxu0 0
    %3962 = vmatprep.subr.bf16.mxu0 0
    %3963 = vmatpush1.bf16.xpose.msra.mxu0 0
    %3964 = vmatprep.subr.bf16.mxu0 0
    %3965 = vmatpush1.bf16.xpose.msra.mxu0 0
    %3966 = vmatprep.subr.bf16.mxu0 0
    %3967 = vmatpush1.bf16.xpose.msra.mxu0 0
    %3968 = vmatprep.subr.bf16.mxu0 %v2651
    %3969 = vmatpush1.bf16.xpose.msra.mxu0 %v2650
    %3970 = vmatprep.subr.bf16.mxu0 %v2541
    %3971 = vmatpush1.bf16.xpose.msra.mxu0 %v2540
    %3972 = vmatprep.subr.bf16.mxu0 %v2431
    %3973 = vmatpush1.bf16.xpose.msra.mxu0 %v2430
    %3974 = vmatprep.subr.bf16.mxu0 %v2321
    %3975 = vmatpush1.bf16.xpose.msra.mxu0 %v2320
    %3976 = vmatprep.subr.bf16.mxu0 0
    %3977 = vmatpush2.bf16.xpose.msra.mxu0 0
    %3978 = vmatprep.subr.bf16.mxu0 0
    %3979 = vmatpush2.bf16.xpose.msra.mxu0 0
    %3980 = vmatprep.subr.bf16.mxu0 0
    %3981 = vmatpush2.bf16.xpose.msra.mxu0 0
    %3982 = vmatprep.subr.bf16.mxu0 0
    %3983 = vmatpush2.bf16.xpose.msra.mxu0 0
    %3984 = vmatprep.subr.bf16.mxu0 0
    %3985 = vmatpush2.bf16.xpose.msra.mxu0 0
    %3986 = vmatprep.subr.bf16.mxu0 0
    %3987 = vmatpush2.bf16.xpose.msra.mxu0 0
    %3988 = vmatprep.subr.bf16.mxu0 0
    %3989 = vmatpush2.bf16.xpose.msra.mxu0 0
    %3990 = vmatprep.subr.bf16.mxu0 0
    %3991 = vmatpush2.bf16.xpose.msra.mxu0 0
    %3992 = vmatprep.mubr.bf16.mxu0 %v664
    %3993 = vmatmul.mubr.bf16.gmra.mxu0 %v663
    %v3994 = vpop.f32.mrf.mxu0
    %v3995 = vadd.f32 %v3955, %v3994
    %v3996 = vpop.f32.mrf.mxu0
    %v3997 = vpop.f32.mrf.mxu0
    %v3998 = vpop.f32.mrf.mxu0
    %3999 = vdwg.mxu0
    %4000 = vmatprep.subr.bf16.mxu0 0
    %4001 = vmatpush1.bf16.xpose.msra.mxu0 0
    %4002 = vmatprep.subr.bf16.mxu0 0
    %4003 = vmatpush1.bf16.xpose.msra.mxu0 0
    %4004 = vmatprep.subr.bf16.mxu0 0
    %4005 = vmatpush1.bf16.xpose.msra.mxu0 0
    %4006 = vmatprep.subr.bf16.mxu0 0
    %4007 = vmatpush1.bf16.xpose.msra.mxu0 0
    %4008 = vmatprep.subr.bf16.mxu0 %v2653
    %4009 = vmatpush1.bf16.xpose.msra.mxu0 %v2652
    %4010 = vmatprep.subr.bf16.mxu0 %v2543
    %4011 = vmatpush1.bf16.xpose.msra.mxu0 %v2542
    %4012 = vmatprep.subr.bf16.mxu0 %v2433
    %4013 = vmatpush1.bf16.xpose.msra.mxu0 %v2432
    %4014 = vmatprep.subr.bf16.mxu0 %v2323
    %4015 = vmatpush1.bf16.xpose.msra.mxu0 %v2322
    %4016 = vmatprep.subr.bf16.mxu0 0
    %4017 = vmatpush2.bf16.xpose.msra.mxu0 0
    %4018 = vmatprep.subr.bf16.mxu0 0
    %4019 = vmatpush2.bf16.xpose.msra.mxu0 0
    %4020 = vmatprep.subr.bf16.mxu0 0
    %4021 = vmatpush2.bf16.xpose.msra.mxu0 0
    %4022 = vmatprep.subr.bf16.mxu0 0
    %4023 = vmatpush2.bf16.xpose.msra.mxu0 0
    %4024 = vmatprep.subr.bf16.mxu0 0
    %4025 = vmatpush2.bf16.xpose.msra.mxu0 0
    %4026 = vmatprep.subr.bf16.mxu0 0
    %4027 = vmatpush2.bf16.xpose.msra.mxu0 0
    %4028 = vmatprep.subr.bf16.mxu0 0
    %4029 = vmatpush2.bf16.xpose.msra.mxu0 0
    %4030 = vmatprep.subr.bf16.mxu0 0
    %4031 = vmatpush2.bf16.xpose.msra.mxu0 0
    %4032 = vmatprep.mubr.bf16.mxu0 %v666
    %4033 = vmatmul.mubr.bf16.gmra.mxu0 %v665
    %v4034 = vpop.f32.mrf.mxu0
    %v4035 = vadd.f32 %v3995, %v4034
    %v4036 = vpop.f32.mrf.mxu0
    %v4037 = vpop.f32.mrf.mxu0
    %v4038 = vpop.f32.mrf.mxu0
    %4039 = vdwg.mxu0
    %4040 = vmatprep.subr.bf16.mxu0 0
    %4041 = vmatpush1.bf16.xpose.msra.mxu0 0
    %4042 = vmatprep.subr.bf16.mxu0 0
    %4043 = vmatpush1.bf16.xpose.msra.mxu0 0
    %4044 = vmatprep.subr.bf16.mxu0 0
    %4045 = vmatpush1.bf16.xpose.msra.mxu0 0
    %4046 = vmatprep.subr.bf16.mxu0 0
    %4047 = vmatpush1.bf16.xpose.msra.mxu0 0
    %4048 = vmatprep.subr.bf16.mxu0 %v2655
    %4049 = vmatpush1.bf16.xpose.msra.mxu0 %v2654
    %4050 = vmatprep.subr.bf16.mxu0 %v2545
    %4051 = vmatpush1.bf16.xpose.msra.mxu0 %v2544
    %4052 = vmatprep.subr.bf16.mxu0 %v2435
    %4053 = vmatpush1.bf16.xpose.msra.mxu0 %v2434
    %4054 = vmatprep.subr.bf16.mxu0 %v2325
    %4055 = vmatpush1.bf16.xpose.msra.mxu0 %v2324
    %4056 = vmatprep.subr.bf16.mxu0 0
    %4057 = vmatpush2.bf16.xpose.msra.mxu0 0
    %4058 = vmatprep.subr.bf16.mxu0 0
    %4059 = vmatpush2.bf16.xpose.msra.mxu0 0
    %4060 = vmatprep.subr.bf16.mxu0 0
    %4061 = vmatpush2.bf16.xpose.msra.mxu0 0
    %4062 = vmatprep.subr.bf16.mxu0 0
    %4063 = vmatpush2.bf16.xpose.msra.mxu0 0
    %4064 = vmatprep.subr.bf16.mxu0 0
    %4065 = vmatpush2.bf16.xpose.msra.mxu0 0
    %4066 = vmatprep.subr.bf16.mxu0 0
    %4067 = vmatpush2.bf16.xpose.msra.mxu0 0
    %4068 = vmatprep.subr.bf16.mxu0 0
    %4069 = vmatpush2.bf16.xpose.msra.mxu0 0
    %4070 = vmatprep.subr.bf16.mxu0 0
    %4071 = vmatpush2.bf16.xpose.msra.mxu0 0
    %4072 = vmatprep.mubr.bf16.mxu0 %v668
    %4073 = vmatmul.mubr.bf16.gmra.mxu0 %v667
    %v4074 = vpop.f32.mrf.mxu0
    %v4075 = vadd.f32 %v4035, %v4074
    %v4076 = vpop.f32.mrf.mxu0
    %v4077 = vpop.f32.mrf.mxu0
    %v4078 = vpop.f32.mrf.mxu0
    %4079 = vdwg.mxu0
    %4080 = vmatprep.subr.bf16.mxu0 0
    %4081 = vmatpush1.bf16.xpose.msra.mxu0 0
    %4082 = vmatprep.subr.bf16.mxu0 0
    %4083 = vmatpush1.bf16.xpose.msra.mxu0 0
    %4084 = vmatprep.subr.bf16.mxu0 0
    %4085 = vmatpush1.bf16.xpose.msra.mxu0 0
    %4086 = vmatprep.subr.bf16.mxu0 0
    %4087 = vmatpush1.bf16.xpose.msra.mxu0 0
    %4088 = vmatprep.subr.bf16.mxu0 %v2657
    %4089 = vmatpush1.bf16.xpose.msra.mxu0 %v2656
    %4090 = vmatprep.subr.bf16.mxu0 %v2547
    %4091 = vmatpush1.bf16.xpose.msra.mxu0 %v2546
    %4092 = vmatprep.subr.bf16.mxu0 %v2437
    %4093 = vmatpush1.bf16.xpose.msra.mxu0 %v2436
    %4094 = vmatprep.subr.bf16.mxu0 %v2327
    %4095 = vmatpush1.bf16.xpose.msra.mxu0 %v2326
    %4096 = vmatprep.subr.bf16.mxu0 0
    %4097 = vmatpush2.bf16.xpose.msra.mxu0 0
    %4098 = vmatprep.subr.bf16.mxu0 0
    %4099 = vmatpush2.bf16.xpose.msra.mxu0 0
    %4100 = vmatprep.subr.bf16.mxu0 0
    %4101 = vmatpush2.bf16.xpose.msra.mxu0 0
    %4102 = vmatprep.subr.bf16.mxu0 0
    %4103 = vmatpush2.bf16.xpose.msra.mxu0 0
    %4104 = vmatprep.subr.bf16.mxu0 0
    %4105 = vmatpush2.bf16.xpose.msra.mxu0 0
    %4106 = vmatprep.subr.bf16.mxu0 0
    %4107 = vmatpush2.bf16.xpose.msra.mxu0 0
    %4108 = vmatprep.subr.bf16.mxu0 0
    %4109 = vmatpush2.bf16.xpose.msra.mxu0 0
    %4110 = vmatprep.subr.bf16.mxu0 0
    %4111 = vmatpush2.bf16.xpose.msra.mxu0 0
    %4112 = vmatprep.mubr.bf16.mxu0 %v670
    %4113 = vmatmul.mubr.bf16.gmra.mxu0 %v669
    %v4114 = vpop.f32.mrf.mxu0
    %v4115 = vadd.f32 %v4075, %v4114
    %v4116 = vpop.f32.mrf.mxu0
    %v4117 = vpop.f32.mrf.mxu0
    %v4118 = vpop.f32.mrf.mxu0
    %4119 = vdwg.mxu0
    %4120 = vmatprep.subr.bf16.mxu0 0
    %4121 = vmatpush1.bf16.xpose.msra.mxu0 0
    %4122 = vmatprep.subr.bf16.mxu0 0
    %4123 = vmatpush1.bf16.xpose.msra.mxu0 0
    %4124 = vmatprep.subr.bf16.mxu0 0
    %4125 = vmatpush1.bf16.xpose.msra.mxu0 0
    %4126 = vmatprep.subr.bf16.mxu0 0
    %4127 = vmatpush1.bf16.xpose.msra.mxu0 0
    %4128 = vmatprep.subr.bf16.mxu0 %v2659
    %4129 = vmatpush1.bf16.xpose.msra.mxu0 %v2658
    %4130 = vmatprep.subr.bf16.mxu0 %v2549
    %4131 = vmatpush1.bf16.xpose.msra.mxu0 %v2548
    %4132 = vmatprep.subr.bf16.mxu0 %v2439
    %4133 = vmatpush1.bf16.xpose.msra.mxu0 %v2438
    %4134 = vmatprep.subr.bf16.mxu0 %v2329
    %4135 = vmatpush1.bf16.xpose.msra.mxu0 %v2328
    %4136 = vmatprep.subr.bf16.mxu0 0
    %4137 = vmatpush2.bf16.xpose.msra.mxu0 0
    %4138 = vmatprep.subr.bf16.mxu0 0
    %4139 = vmatpush2.bf16.xpose.msra.mxu0 0
    %4140 = vmatprep.subr.bf16.mxu0 0
    %4141 = vmatpush2.bf16.xpose.msra.mxu0 0
    %4142 = vmatprep.subr.bf16.mxu0 0
    %4143 = vmatpush2.bf16.xpose.msra.mxu0 0
    %4144 = vmatprep.subr.bf16.mxu0 0
    %4145 = vmatpush2.bf16.xpose.msra.mxu0 0
    %4146 = vmatprep.subr.bf16.mxu0 0
    %4147 = vmatpush2.bf16.xpose.msra.mxu0 0
    %4148 = vmatprep.subr.bf16.mxu0 0
    %4149 = vmatpush2.bf16.xpose.msra.mxu0 0
    %4150 = vmatprep.subr.bf16.mxu0 0
    %4151 = vmatpush2.bf16.xpose.msra.mxu0 0
    %4152 = vmatprep.mubr.bf16.mxu0 %v672
    %4153 = vmatmul.mubr.bf16.gmra.mxu0 %v671
    %v4154 = vpop.f32.mrf.mxu0
    %v4155 = vadd.f32 %v4115, %v4154
    %v4156 = vpop.f32.mrf.mxu0
    %v4157 = vpop.f32.mrf.mxu0
    %v4158 = vpop.f32.mrf.mxu0
    %4159 = vdwg.mxu0
    %4160 = vmatprep.subr.bf16.mxu0 0
    %4161 = vmatpush1.bf16.xpose.msra.mxu0 0
    %4162 = vmatprep.subr.bf16.mxu0 0
    %4163 = vmatpush1.bf16.xpose.msra.mxu0 0
    %4164 = vmatprep.subr.bf16.mxu0 0
    %4165 = vmatpush1.bf16.xpose.msra.mxu0 0
    %4166 = vmatprep.subr.bf16.mxu0 0
    %4167 = vmatpush1.bf16.xpose.msra.mxu0 0
    %4168 = vmatprep.subr.bf16.mxu0 %v2661
    %4169 = vmatpush1.bf16.xpose.msra.mxu0 %v2660
    %4170 = vmatprep.subr.bf16.mxu0 %v2551
    %4171 = vmatpush1.bf16.xpose.msra.mxu0 %v2550
    %4172 = vmatprep.subr.bf16.mxu0 %v2441
    %4173 = vmatpush1.bf16.xpose.msra.mxu0 %v2440
    %4174 = vmatprep.subr.bf16.mxu0 %v2331
    %4175 = vmatpush1.bf16.xpose.msra.mxu0 %v2330
    %4176 = vmatprep.subr.bf16.mxu0 0
    %4177 = vmatpush2.bf16.xpose.msra.mxu0 0
    %4178 = vmatprep.subr.bf16.mxu0 0
    %4179 = vmatpush2.bf16.xpose.msra.mxu0 0
    %4180 = vmatprep.subr.bf16.mxu0 0
    %4181 = vmatpush2.bf16.xpose.msra.mxu0 0
    %4182 = vmatprep.subr.bf16.mxu0 0
    %4183 = vmatpush2.bf16.xpose.msra.mxu0 0
    %4184 = vmatprep.subr.bf16.mxu0 0
    %4185 = vmatpush2.bf16.xpose.msra.mxu0 0
    %4186 = vmatprep.subr.bf16.mxu0 0
    %4187 = vmatpush2.bf16.xpose.msra.mxu0 0
    %4188 = vmatprep.subr.bf16.mxu0 0
    %4189 = vmatpush2.bf16.xpose.msra.mxu0 0
    %4190 = vmatprep.subr.bf16.mxu0 0
    %4191 = vmatpush2.bf16.xpose.msra.mxu0 0
    %4192 = vmatprep.mubr.bf16.mxu0 %v674
    %4193 = vmatmul.mubr.bf16.gmra.mxu0 %v673
    %v4194 = vpop.f32.mrf.mxu0
    %v4195 = vadd.f32 %v4155, %v4194
    %v4196 = vpop.f32.mrf.mxu0
    %v4197 = vpop.f32.mrf.mxu0
    %v4198 = vpop.f32.mrf.mxu0
    %4199 = vdwg.mxu0
    %4200 = vmatprep.subr.bf16.mxu0 0
    %4201 = vmatpush1.bf16.xpose.msra.mxu0 0
    %4202 = vmatprep.subr.bf16.mxu0 0
    %4203 = vmatpush1.bf16.xpose.msra.mxu0 0
    %4204 = vmatprep.subr.bf16.mxu0 0
    %4205 = vmatpush1.bf16.xpose.msra.mxu0 0
    %4206 = vmatprep.subr.bf16.mxu0 0
    %4207 = vmatpush1.bf16.xpose.msra.mxu0 0
    %4208 = vmatprep.subr.bf16.mxu0 %v2663
    %4209 = vmatpush1.bf16.xpose.msra.mxu0 %v2662
    %4210 = vmatprep.subr.bf16.mxu0 %v2553
    %4211 = vmatpush1.bf16.xpose.msra.mxu0 %v2552
    %4212 = vmatprep.subr.bf16.mxu0 %v2443
    %4213 = vmatpush1.bf16.xpose.msra.mxu0 %v2442
    %4214 = vmatprep.subr.bf16.mxu0 %v2333
    %4215 = vmatpush1.bf16.xpose.msra.mxu0 %v2332
    %4216 = vmatprep.subr.bf16.mxu0 0
    %4217 = vmatpush2.bf16.xpose.msra.mxu0 0
    %4218 = vmatprep.subr.bf16.mxu0 0
    %4219 = vmatpush2.bf16.xpose.msra.mxu0 0
    %4220 = vmatprep.subr.bf16.mxu0 0
    %4221 = vmatpush2.bf16.xpose.msra.mxu0 0
    %4222 = vmatprep.subr.bf16.mxu0 0
    %4223 = vmatpush2.bf16.xpose.msra.mxu0 0
    %4224 = vmatprep.subr.bf16.mxu0 0
    %4225 = vmatpush2.bf16.xpose.msra.mxu0 0
    %4226 = vmatprep.subr.bf16.mxu0 0
    %4227 = vmatpush2.bf16.xpose.msra.mxu0 0
    %4228 = vmatprep.subr.bf16.mxu0 0
    %4229 = vmatpush2.bf16.xpose.msra.mxu0 0
    %4230 = vmatprep.subr.bf16.mxu0 0
    %4231 = vmatpush2.bf16.xpose.msra.mxu0 0
    %4232 = vmatprep.mubr.bf16.mxu0 %v676
    %4233 = vmatmul.mubr.bf16.gmra.mxu0 %v675
    %v4234 = vpop.f32.mrf.mxu0
    %v4235 = vadd.f32 %v4195, %v4234
    %v4236 = vpop.f32.mrf.mxu0
    %v4237 = vpop.f32.mrf.mxu0
    %v4238 = vpop.f32.mrf.mxu0
    %4239 = vdwg.mxu0
    %4240 = vmatprep.subr.bf16.mxu0 0
    %4241 = vmatpush1.bf16.xpose.msra.mxu0 0
    %4242 = vmatprep.subr.bf16.mxu0 0
    %4243 = vmatpush1.bf16.xpose.msra.mxu0 0
    %4244 = vmatprep.subr.bf16.mxu0 0
    %4245 = vmatpush1.bf16.xpose.msra.mxu0 0
    %4246 = vmatprep.subr.bf16.mxu0 0
    %4247 = vmatpush1.bf16.xpose.msra.mxu0 0
    %4248 = vmatprep.subr.bf16.mxu0 %v2665
    %4249 = vmatpush1.bf16.xpose.msra.mxu0 %v2664
    %4250 = vmatprep.subr.bf16.mxu0 %v2555
    %4251 = vmatpush1.bf16.xpose.msra.mxu0 %v2554
    %4252 = vmatprep.subr.bf16.mxu0 %v2445
    %4253 = vmatpush1.bf16.xpose.msra.mxu0 %v2444
    %4254 = vmatprep.subr.bf16.mxu0 %v2335
    %4255 = vmatpush1.bf16.xpose.msra.mxu0 %v2334
    %4256 = vmatprep.subr.bf16.mxu0 0
    %4257 = vmatpush2.bf16.xpose.msra.mxu0 0
    %4258 = vmatprep.subr.bf16.mxu0 0
    %4259 = vmatpush2.bf16.xpose.msra.mxu0 0
    %4260 = vmatprep.subr.bf16.mxu0 0
    %4261 = vmatpush2.bf16.xpose.msra.mxu0 0
    %4262 = vmatprep.subr.bf16.mxu0 0
    %4263 = vmatpush2.bf16.xpose.msra.mxu0 0
    %4264 = vmatprep.subr.bf16.mxu0 0
    %4265 = vmatpush2.bf16.xpose.msra.mxu0 0
    %4266 = vmatprep.subr.bf16.mxu0 0
    %4267 = vmatpush2.bf16.xpose.msra.mxu0 0
    %4268 = vmatprep.subr.bf16.mxu0 0
    %4269 = vmatpush2.bf16.xpose.msra.mxu0 0
    %4270 = vmatprep.subr.bf16.mxu0 0
    %4271 = vmatpush2.bf16.xpose.msra.mxu0 0
    %4272 = vmatprep.mubr.bf16.mxu0 %v678
    %4273 = vmatmul.mubr.bf16.gmra.mxu0 %v677
    %v4274 = vpop.f32.mrf.mxu0
    %v4275 = vadd.f32 %v4235, %v4274
    %v4276 = vpop.f32.mrf.mxu0
    %v4277 = vpop.f32.mrf.mxu0
    %v4278 = vpop.f32.mrf.mxu0
    %4279 = vdwg.mxu0
    %4280 = vmatprep.subr.bf16.mxu0 0
    %4281 = vmatpush1.bf16.xpose.msra.mxu0 0
    %4282 = vmatprep.subr.bf16.mxu0 0
    %4283 = vmatpush1.bf16.xpose.msra.mxu0 0
    %4284 = vmatprep.subr.bf16.mxu0 0
    %4285 = vmatpush1.bf16.xpose.msra.mxu0 0
    %4286 = vmatprep.subr.bf16.mxu0 0
    %4287 = vmatpush1.bf16.xpose.msra.mxu0 0
    %4288 = vmatprep.subr.bf16.mxu0 %v2667
    %4289 = vmatpush1.bf16.xpose.msra.mxu0 %v2666
    %4290 = vmatprep.subr.bf16.mxu0 %v2557
    %4291 = vmatpush1.bf16.xpose.msra.mxu0 %v2556
    %4292 = vmatprep.subr.bf16.mxu0 %v2447
    %4293 = vmatpush1.bf16.xpose.msra.mxu0 %v2446
    %4294 = vmatprep.subr.bf16.mxu0 %v2337
    %4295 = vmatpush1.bf16.xpose.msra.mxu0 %v2336
    %4296 = vmatprep.subr.bf16.mxu0 0
    %4297 = vmatpush2.bf16.xpose.msra.mxu0 0
    %4298 = vmatprep.subr.bf16.mxu0 0
    %4299 = vmatpush2.bf16.xpose.msra.mxu0 0
    %4300 = vmatprep.subr.bf16.mxu0 0
    %4301 = vmatpush2.bf16.xpose.msra.mxu0 0
    %4302 = vmatprep.subr.bf16.mxu0 0
    %4303 = vmatpush2.bf16.xpose.msra.mxu0 0
    %4304 = vmatprep.subr.bf16.mxu0 0
    %4305 = vmatpush2.bf16.xpose.msra.mxu0 0
    %4306 = vmatprep.subr.bf16.mxu0 0
    %4307 = vmatpush2.bf16.xpose.msra.mxu0 0
    %4308 = vmatprep.subr.bf16.mxu0 0
    %4309 = vmatpush2.bf16.xpose.msra.mxu0 0
    %4310 = vmatprep.subr.bf16.mxu0 0
    %4311 = vmatpush2.bf16.xpose.msra.mxu0 0
    %4312 = vmatprep.mubr.bf16.mxu0 %v680
    %4313 = vmatmul.mubr.bf16.gmra.mxu0 %v679
    %v4314 = vpop.f32.mrf.mxu0
    %v4315 = vadd.f32 %v4275, %v4314
    %v4316 = vpop.f32.mrf.mxu0
    %v4317 = vpop.f32.mrf.mxu0
    %v4318 = vpop.f32.mrf.mxu0
    %4319 = vdwg.mxu0
    %4320 = vmatprep.subr.bf16.mxu0 0
    %4321 = vmatpush1.bf16.xpose.msra.mxu0 0
    %4322 = vmatprep.subr.bf16.mxu0 0
    %4323 = vmatpush1.bf16.xpose.msra.mxu0 0
    %4324 = vmatprep.subr.bf16.mxu0 0
    %4325 = vmatpush1.bf16.xpose.msra.mxu0 0
    %4326 = vmatprep.subr.bf16.mxu0 0
    %4327 = vmatpush1.bf16.xpose.msra.mxu0 0
    %4328 = vmatprep.subr.bf16.mxu0 %v2669
    %4329 = vmatpush1.bf16.xpose.msra.mxu0 %v2668
    %4330 = vmatprep.subr.bf16.mxu0 %v2559
    %4331 = vmatpush1.bf16.xpose.msra.mxu0 %v2558
    %4332 = vmatprep.subr.bf16.mxu0 %v2449
    %4333 = vmatpush1.bf16.xpose.msra.mxu0 %v2448
    %4334 = vmatprep.subr.bf16.mxu0 %v2339
    %4335 = vmatpush1.bf16.xpose.msra.mxu0 %v2338
    %4336 = vmatprep.subr.bf16.mxu0 0
    %4337 = vmatpush2.bf16.xpose.msra.mxu0 0
    %4338 = vmatprep.subr.bf16.mxu0 0
    %4339 = vmatpush2.bf16.xpose.msra.mxu0 0
    %4340 = vmatprep.subr.bf16.mxu0 0
    %4341 = vmatpush2.bf16.xpose.msra.mxu0 0
    %4342 = vmatprep.subr.bf16.mxu0 0
    %4343 = vmatpush2.bf16.xpose.msra.mxu0 0
    %4344 = vmatprep.subr.bf16.mxu0 0
    %4345 = vmatpush2.bf16.xpose.msra.mxu0 0
    %4346 = vmatprep.subr.bf16.mxu0 0
    %4347 = vmatpush2.bf16.xpose.msra.mxu0 0
    %4348 = vmatprep.subr.bf16.mxu0 0
    %4349 = vmatpush2.bf16.xpose.msra.mxu0 0
    %4350 = vmatprep.subr.bf16.mxu0 0
    %4351 = vmatpush2.bf16.xpose.msra.mxu0 0
    %4352 = vmatprep.mubr.bf16.mxu0 %v682
    %4353 = vmatmul.mubr.bf16.gmra.mxu0 %v681
    %v4354 = vpop.f32.mrf.mxu0
    %v4355 = vadd.f32 %v4315, %v4354
    %v4356 = vpop.f32.mrf.mxu0
    %v4357 = vpop.f32.mrf.mxu0
    %v4358 = vpop.f32.mrf.mxu0
    %4359 = vdwg.mxu0
    %4360 = vmatprep.subr.bf16.mxu0 0
    %4361 = vmatpush1.bf16.xpose.msra.mxu0 0
    %4362 = vmatprep.subr.bf16.mxu0 0
    %4363 = vmatpush1.bf16.xpose.msra.mxu0 0
    %4364 = vmatprep.subr.bf16.mxu0 0
    %4365 = vmatpush1.bf16.xpose.msra.mxu0 0
    %4366 = vmatprep.subr.bf16.mxu0 0
    %4367 = vmatpush1.bf16.xpose.msra.mxu0 0
    %4368 = vmatprep.subr.bf16.mxu0 %v2671
    %4369 = vmatpush1.bf16.xpose.msra.mxu0 %v2670
    %4370 = vmatprep.subr.bf16.mxu0 %v2561
    %4371 = vmatpush1.bf16.xpose.msra.mxu0 %v2560
    %4372 = vmatprep.subr.bf16.mxu0 %v2451
    %4373 = vmatpush1.bf16.xpose.msra.mxu0 %v2450
    %4374 = vmatprep.subr.bf16.mxu0 %v2341
    %4375 = vmatpush1.bf16.xpose.msra.mxu0 %v2340
    %4376 = vmatprep.subr.bf16.mxu0 0
    %4377 = vmatpush2.bf16.xpose.msra.mxu0 0
    %4378 = vmatprep.subr.bf16.mxu0 0
    %4379 = vmatpush2.bf16.xpose.msra.mxu0 0
    %4380 = vmatprep.subr.bf16.mxu0 0
    %4381 = vmatpush2.bf16.xpose.msra.mxu0 0
    %4382 = vmatprep.subr.bf16.mxu0 0
    %4383 = vmatpush2.bf16.xpose.msra.mxu0 0
    %4384 = vmatprep.subr.bf16.mxu0 0
    %4385 = vmatpush2.bf16.xpose.msra.mxu0 0
    %4386 = vmatprep.subr.bf16.mxu0 0
    %4387 = vmatpush2.bf16.xpose.msra.mxu0 0
    %4388 = vmatprep.subr.bf16.mxu0 0
    %4389 = vmatpush2.bf16.xpose.msra.mxu0 0
    %4390 = vmatprep.subr.bf16.mxu0 0
    %4391 = vmatpush2.bf16.xpose.msra.mxu0 0
    %4392 = vmatprep.mubr.bf16.mxu0 %v684
    %4393 = vmatmul.mubr.bf16.gmra.mxu0 %v683
    %v4394 = vpop.f32.mrf.mxu0
    %v4395 = vadd.f32 %v4355, %v4394
    %v4396 = vpop.f32.mrf.mxu0
    %v4397 = vpop.f32.mrf.mxu0
    %v4398 = vpop.f32.mrf.mxu0
    %4399 = vdwg.mxu0
    %4400 = vmatprep.subr.bf16.mxu0 0
    %4401 = vmatpush1.bf16.xpose.msra.mxu0 0
    %4402 = vmatprep.subr.bf16.mxu0 0
    %4403 = vmatpush1.bf16.xpose.msra.mxu0 0
    %4404 = vmatprep.subr.bf16.mxu0 0
    %4405 = vmatpush1.bf16.xpose.msra.mxu0 0
    %4406 = vmatprep.subr.bf16.mxu0 0
    %4407 = vmatpush1.bf16.xpose.msra.mxu0 0
    %4408 = vmatprep.subr.bf16.mxu0 %v2673
    %4409 = vmatpush1.bf16.xpose.msra.mxu0 %v2672
    %4410 = vmatprep.subr.bf16.mxu0 %v2563
    %4411 = vmatpush1.bf16.xpose.msra.mxu0 %v2562
    %4412 = vmatprep.subr.bf16.mxu0 %v2453
    %4413 = vmatpush1.bf16.xpose.msra.mxu0 %v2452
    %4414 = vmatprep.subr.bf16.mxu0 %v2343
    %4415 = vmatpush1.bf16.xpose.msra.mxu0 %v2342
    %4416 = vmatprep.subr.bf16.mxu0 0
    %4417 = vmatpush2.bf16.xpose.msra.mxu0 0
    %4418 = vmatprep.subr.bf16.mxu0 0
    %4419 = vmatpush2.bf16.xpose.msra.mxu0 0
    %4420 = vmatprep.subr.bf16.mxu0 0
    %4421 = vmatpush2.bf16.xpose.msra.mxu0 0
    %4422 = vmatprep.subr.bf16.mxu0 0
    %4423 = vmatpush2.bf16.xpose.msra.mxu0 0
    %4424 = vmatprep.subr.bf16.mxu0 0
    %4425 = vmatpush2.bf16.xpose.msra.mxu0 0
    %4426 = vmatprep.subr.bf16.mxu0 0
    %4427 = vmatpush2.bf16.xpose.msra.mxu0 0
    %4428 = vmatprep.subr.bf16.mxu0 0
    %4429 = vmatpush2.bf16.xpose.msra.mxu0 0
    %4430 = vmatprep.subr.bf16.mxu0 0
    %4431 = vmatpush2.bf16.xpose.msra.mxu0 0
    %4432 = vmatprep.mubr.bf16.mxu0 %v686
    %4433 = vmatmul.mubr.bf16.gmra.mxu0 %v685
    %v4434 = vpop.f32.mrf.mxu0
    %v4435 = vadd.f32 %v4395, %v4434
    %v4436 = vpop.f32.mrf.mxu0
    %v4437 = vpop.f32.mrf.mxu0
    %v4438 = vpop.f32.mrf.mxu0
    %4439 = vdwg.mxu0
    %4440 = vmatprep.subr.bf16.mxu0 0
    %4441 = vmatpush1.bf16.xpose.msra.mxu0 0
    %4442 = vmatprep.subr.bf16.mxu0 0
    %4443 = vmatpush1.bf16.xpose.msra.mxu0 0
    %4444 = vmatprep.subr.bf16.mxu0 0
    %4445 = vmatpush1.bf16.xpose.msra.mxu0 0
    %4446 = vmatprep.subr.bf16.mxu0 0
    %4447 = vmatpush1.bf16.xpose.msra.mxu0 0
    %4448 = vmatprep.subr.bf16.mxu0 %v2675
    %4449 = vmatpush1.bf16.xpose.msra.mxu0 %v2674
    %4450 = vmatprep.subr.bf16.mxu0 %v2565
    %4451 = vmatpush1.bf16.xpose.msra.mxu0 %v2564
    %4452 = vmatprep.subr.bf16.mxu0 %v2455
    %4453 = vmatpush1.bf16.xpose.msra.mxu0 %v2454
    %4454 = vmatprep.subr.bf16.mxu0 %v2345
    %4455 = vmatpush1.bf16.xpose.msra.mxu0 %v2344
    %4456 = vmatprep.subr.bf16.mxu0 0
    %4457 = vmatpush2.bf16.xpose.msra.mxu0 0
    %4458 = vmatprep.subr.bf16.mxu0 0
    %4459 = vmatpush2.bf16.xpose.msra.mxu0 0
    %4460 = vmatprep.subr.bf16.mxu0 0
    %4461 = vmatpush2.bf16.xpose.msra.mxu0 0
    %4462 = vmatprep.subr.bf16.mxu0 0
    %4463 = vmatpush2.bf16.xpose.msra.mxu0 0
    %4464 = vmatprep.subr.bf16.mxu0 0
    %4465 = vmatpush2.bf16.xpose.msra.mxu0 0
    %4466 = vmatprep.subr.bf16.mxu0 0
    %4467 = vmatpush2.bf16.xpose.msra.mxu0 0
    %4468 = vmatprep.subr.bf16.mxu0 0
    %4469 = vmatpush2.bf16.xpose.msra.mxu0 0
    %4470 = vmatprep.subr.bf16.mxu0 0
    %4471 = vmatpush2.bf16.xpose.msra.mxu0 0
    %4472 = vmatprep.mubr.bf16.mxu0 %v688
    %4473 = vmatmul.mubr.bf16.gmra.mxu0 %v687
    %v4474 = vpop.f32.mrf.mxu0
    %v4475 = vadd.f32 %v4435, %v4474
    %v4476 = vpop.f32.mrf.mxu0
    %v4477 = vpop.f32.mrf.mxu0
    %v4478 = vpop.f32.mrf.mxu0
    %4479 = vdwg.mxu0
    %4480 = vmatprep.subr.bf16.mxu0 0
    %4481 = vmatpush1.bf16.xpose.msra.mxu0 0
    %4482 = vmatprep.subr.bf16.mxu0 0
    %4483 = vmatpush1.bf16.xpose.msra.mxu0 0
    %4484 = vmatprep.subr.bf16.mxu0 0
    %4485 = vmatpush1.bf16.xpose.msra.mxu0 0
    %4486 = vmatprep.subr.bf16.mxu0 0
    %4487 = vmatpush1.bf16.xpose.msra.mxu0 0
    %4488 = vmatprep.subr.bf16.mxu0 %v2677
    %4489 = vmatpush1.bf16.xpose.msra.mxu0 %v2676
    %4490 = vmatprep.subr.bf16.mxu0 %v2567
    %4491 = vmatpush1.bf16.xpose.msra.mxu0 %v2566
    %4492 = vmatprep.subr.bf16.mxu0 %v2457
    %4493 = vmatpush1.bf16.xpose.msra.mxu0 %v2456
    %4494 = vmatprep.subr.bf16.mxu0 %v2347
    %4495 = vmatpush1.bf16.xpose.msra.mxu0 %v2346
    %4496 = vmatprep.subr.bf16.mxu0 0
    %4497 = vmatpush2.bf16.xpose.msra.mxu0 0
    %4498 = vmatprep.subr.bf16.mxu0 0
    %4499 = vmatpush2.bf16.xpose.msra.mxu0 0
    %4500 = vmatprep.subr.bf16.mxu0 0
    %4501 = vmatpush2.bf16.xpose.msra.mxu0 0
    %4502 = vmatprep.subr.bf16.mxu0 0
    %4503 = vmatpush2.bf16.xpose.msra.mxu0 0
    %4504 = vmatprep.subr.bf16.mxu0 0
    %4505 = vmatpush2.bf16.xpose.msra.mxu0 0
    %4506 = vmatprep.subr.bf16.mxu0 0
    %4507 = vmatpush2.bf16.xpose.msra.mxu0 0
    %4508 = vmatprep.subr.bf16.mxu0 0
    %4509 = vmatpush2.bf16.xpose.msra.mxu0 0
    %4510 = vmatprep.subr.bf16.mxu0 0
    %4511 = vmatpush2.bf16.xpose.msra.mxu0 0
    %4512 = vmatprep.mubr.bf16.mxu0 %v690
    %4513 = vmatmul.mubr.bf16.gmra.mxu0 %v689
    %v4514 = vpop.f32.mrf.mxu0
    %v4515 = vadd.f32 %v4475, %v4514
    %v4516 = vpop.f32.mrf.mxu0
    %v4517 = vpop.f32.mrf.mxu0
    %v4518 = vpop.f32.mrf.mxu0
    %4519 = vdwg.mxu0
    %4520 = vmatprep.subr.bf16.mxu0 0
    %4521 = vmatpush1.bf16.xpose.msra.mxu0 0
    %4522 = vmatprep.subr.bf16.mxu0 0
    %4523 = vmatpush1.bf16.xpose.msra.mxu0 0
    %4524 = vmatprep.subr.bf16.mxu0 0
    %4525 = vmatpush1.bf16.xpose.msra.mxu0 0
    %4526 = vmatprep.subr.bf16.mxu0 0
    %4527 = vmatpush1.bf16.xpose.msra.mxu0 0
    %4528 = vmatprep.subr.bf16.mxu0 %v2679
    %4529 = vmatpush1.bf16.xpose.msra.mxu0 %v2678
    %4530 = vmatprep.subr.bf16.mxu0 %v2569
    %4531 = vmatpush1.bf16.xpose.msra.mxu0 %v2568
    %4532 = vmatprep.subr.bf16.mxu0 %v2459
    %4533 = vmatpush1.bf16.xpose.msra.mxu0 %v2458
    %4534 = vmatprep.subr.bf16.mxu0 %v2349
    %4535 = vmatpush1.bf16.xpose.msra.mxu0 %v2348
    %4536 = vmatprep.subr.bf16.mxu0 0
    %4537 = vmatpush2.bf16.xpose.msra.mxu0 0
    %4538 = vmatprep.subr.bf16.mxu0 0
    %4539 = vmatpush2.bf16.xpose.msra.mxu0 0
    %4540 = vmatprep.subr.bf16.mxu0 0
    %4541 = vmatpush2.bf16.xpose.msra.mxu0 0
    %4542 = vmatprep.subr.bf16.mxu0 0
    %4543 = vmatpush2.bf16.xpose.msra.mxu0 0
    %4544 = vmatprep.subr.bf16.mxu0 0
    %4545 = vmatpush2.bf16.xpose.msra.mxu0 0
    %4546 = vmatprep.subr.bf16.mxu0 0
    %4547 = vmatpush2.bf16.xpose.msra.mxu0 0
    %4548 = vmatprep.subr.bf16.mxu0 0
    %4549 = vmatpush2.bf16.xpose.msra.mxu0 0
    %4550 = vmatprep.subr.bf16.mxu0 0
    %4551 = vmatpush2.bf16.xpose.msra.mxu0 0
    %4552 = vmatprep.mubr.bf16.mxu0 %v692
    %4553 = vmatmul.mubr.bf16.gmra.mxu0 %v691
    %v4554 = vpop.f32.mrf.mxu0
    %v4555 = vadd.f32 %v4515, %v4554
    %v4556 = vpop.f32.mrf.mxu0
    %v4557 = vpop.f32.mrf.mxu0
    %v4558 = vpop.f32.mrf.mxu0
    %4559 = vdwg.mxu0
    %4560 = vmatprep.subr.bf16.mxu0 0
    %4561 = vmatpush1.bf16.xpose.msra.mxu0 0
    %4562 = vmatprep.subr.bf16.mxu0 0
    %4563 = vmatpush1.bf16.xpose.msra.mxu0 0
    %4564 = vmatprep.subr.bf16.mxu0 0
    %4565 = vmatpush1.bf16.xpose.msra.mxu0 0
    %4566 = vmatprep.subr.bf16.mxu0 0
    %4567 = vmatpush1.bf16.xpose.msra.mxu0 0
    %4568 = vmatprep.subr.bf16.mxu0 %v2681
    %4569 = vmatpush1.bf16.xpose.msra.mxu0 %v2680
    %4570 = vmatprep.subr.bf16.mxu0 %v2571
    %4571 = vmatpush1.bf16.xpose.msra.mxu0 %v2570
    %4572 = vmatprep.subr.bf16.mxu0 %v2461
    %4573 = vmatpush1.bf16.xpose.msra.mxu0 %v2460
    %4574 = vmatprep.subr.bf16.mxu0 %v2351
    %4575 = vmatpush1.bf16.xpose.msra.mxu0 %v2350
    %4576 = vmatprep.subr.bf16.mxu0 0
    %4577 = vmatpush2.bf16.xpose.msra.mxu0 0
    %4578 = vmatprep.subr.bf16.mxu0 0
    %4579 = vmatpush2.bf16.xpose.msra.mxu0 0
    %4580 = vmatprep.subr.bf16.mxu0 0
    %4581 = vmatpush2.bf16.xpose.msra.mxu0 0
    %4582 = vmatprep.subr.bf16.mxu0 0
    %4583 = vmatpush2.bf16.xpose.msra.mxu0 0
    %4584 = vmatprep.subr.bf16.mxu0 0
    %4585 = vmatpush2.bf16.xpose.msra.mxu0 0
    %4586 = vmatprep.subr.bf16.mxu0 0
    %4587 = vmatpush2.bf16.xpose.msra.mxu0 0
    %4588 = vmatprep.subr.bf16.mxu0 0
    %4589 = vmatpush2.bf16.xpose.msra.mxu0 0
    %4590 = vmatprep.subr.bf16.mxu0 0
    %4591 = vmatpush2.bf16.xpose.msra.mxu0 0
    %4592 = vmatprep.mubr.bf16.mxu0 %v694
    %4593 = vmatmul.mubr.bf16.gmra.mxu0 %v693
    %v4594 = vpop.f32.mrf.mxu0
    %v4595 = vadd.f32 %v4555, %v4594
    %v4596 = vpop.f32.mrf.mxu0
    %v4597 = vpop.f32.mrf.mxu0
    %v4598 = vpop.f32.mrf.mxu0
    %4599 = vdwg.mxu0
    %4600 = vmatprep.subr.bf16.mxu0 0
    %4601 = vmatpush1.bf16.xpose.msra.mxu0 0
    %4602 = vmatprep.subr.bf16.mxu0 0
    %4603 = vmatpush1.bf16.xpose.msra.mxu0 0
    %4604 = vmatprep.subr.bf16.mxu0 0
    %4605 = vmatpush1.bf16.xpose.msra.mxu0 0
    %4606 = vmatprep.subr.bf16.mxu0 0
    %4607 = vmatpush1.bf16.xpose.msra.mxu0 0
    %4608 = vmatprep.subr.bf16.mxu0 %v2683
    %4609 = vmatpush1.bf16.xpose.msra.mxu0 %v2682
    %4610 = vmatprep.subr.bf16.mxu0 %v2573
    %4611 = vmatpush1.bf16.xpose.msra.mxu0 %v2572
    %4612 = vmatprep.subr.bf16.mxu0 %v2463
    %4613 = vmatpush1.bf16.xpose.msra.mxu0 %v2462
    %4614 = vmatprep.subr.bf16.mxu0 %v2353
    %4615 = vmatpush1.bf16.xpose.msra.mxu0 %v2352
    %4616 = vmatprep.subr.bf16.mxu0 0
    %4617 = vmatpush2.bf16.xpose.msra.mxu0 0
    %4618 = vmatprep.subr.bf16.mxu0 0
    %4619 = vmatpush2.bf16.xpose.msra.mxu0 0
    %4620 = vmatprep.subr.bf16.mxu0 0
    %4621 = vmatpush2.bf16.xpose.msra.mxu0 0
    %4622 = vmatprep.subr.bf16.mxu0 0
    %4623 = vmatpush2.bf16.xpose.msra.mxu0 0
    %4624 = vmatprep.subr.bf16.mxu0 0
    %4625 = vmatpush2.bf16.xpose.msra.mxu0 0
    %4626 = vmatprep.subr.bf16.mxu0 0
    %4627 = vmatpush2.bf16.xpose.msra.mxu0 0
    %4628 = vmatprep.subr.bf16.mxu0 0
    %4629 = vmatpush2.bf16.xpose.msra.mxu0 0
    %4630 = vmatprep.subr.bf16.mxu0 0
    %4631 = vmatpush2.bf16.xpose.msra.mxu0 0
    %4632 = vmatprep.mubr.bf16.mxu0 %v696
    %4633 = vmatmul.mubr.bf16.gmra.mxu0 %v695
    %v4634 = vpop.f32.mrf.mxu0
    %v4635 = vadd.f32 %v4595, %v4634
    %v4636 = vpop.f32.mrf.mxu0
    %v4637 = vpop.f32.mrf.mxu0
    %v4638 = vpop.f32.mrf.mxu0
    %4639 = vdwg.mxu0
    %4640 = vmatprep.subr.bf16.mxu0 0
    %4641 = vmatpush1.bf16.xpose.msra.mxu0 0
    %4642 = vmatprep.subr.bf16.mxu0 0
    %4643 = vmatpush1.bf16.xpose.msra.mxu0 0
    %4644 = vmatprep.subr.bf16.mxu0 0
    %4645 = vmatpush1.bf16.xpose.msra.mxu0 0
    %4646 = vmatprep.subr.bf16.mxu0 0
    %4647 = vmatpush1.bf16.xpose.msra.mxu0 0
    %4648 = vmatprep.subr.bf16.mxu0 %v2685
    %4649 = vmatpush1.bf16.xpose.msra.mxu0 %v2684
    %4650 = vmatprep.subr.bf16.mxu0 %v2575
    %4651 = vmatpush1.bf16.xpose.msra.mxu0 %v2574
    %4652 = vmatprep.subr.bf16.mxu0 %v2465
    %4653 = vmatpush1.bf16.xpose.msra.mxu0 %v2464
    %4654 = vmatprep.subr.bf16.mxu0 %v2355
    %4655 = vmatpush1.bf16.xpose.msra.mxu0 %v2354
    %4656 = vmatprep.subr.bf16.mxu0 0
    %4657 = vmatpush2.bf16.xpose.msra.mxu0 0
    %4658 = vmatprep.subr.bf16.mxu0 0
    %4659 = vmatpush2.bf16.xpose.msra.mxu0 0
    %4660 = vmatprep.subr.bf16.mxu0 0
    %4661 = vmatpush2.bf16.xpose.msra.mxu0 0
    %4662 = vmatprep.subr.bf16.mxu0 0
    %4663 = vmatpush2.bf16.xpose.msra.mxu0 0
    %4664 = vmatprep.subr.bf16.mxu0 0
    %4665 = vmatpush2.bf16.xpose.msra.mxu0 0
    %4666 = vmatprep.subr.bf16.mxu0 0
    %4667 = vmatpush2.bf16.xpose.msra.mxu0 0
    %4668 = vmatprep.subr.bf16.mxu0 0
    %4669 = vmatpush2.bf16.xpose.msra.mxu0 0
    %4670 = vmatprep.subr.bf16.mxu0 0
    %4671 = vmatpush2.bf16.xpose.msra.mxu0 0
    %4672 = vmatprep.mubr.bf16.mxu0 %v698
    %4673 = vmatmul.mubr.bf16.gmra.mxu0 %v697
    %v4674 = vpop.f32.mrf.mxu0
    %v4675 = vadd.f32 %v4635, %v4674
    %v4676 = vpop.f32.mrf.mxu0
    %v4677 = vpop.f32.mrf.mxu0
    %v4678 = vpop.f32.mrf.mxu0
    %4679 = vdwg.mxu0
    %4680 = vmatprep.subr.bf16.mxu0 0
    %4681 = vmatpush1.bf16.xpose.msra.mxu0 0
    %4682 = vmatprep.subr.bf16.mxu0 0
    %4683 = vmatpush1.bf16.xpose.msra.mxu0 0
    %4684 = vmatprep.subr.bf16.mxu0 0
    %4685 = vmatpush1.bf16.xpose.msra.mxu0 0
    %4686 = vmatprep.subr.bf16.mxu0 0
    %4687 = vmatpush1.bf16.xpose.msra.mxu0 0
    %4688 = vmatprep.subr.bf16.mxu0 %v2687
    %4689 = vmatpush1.bf16.xpose.msra.mxu0 %v2686
    %4690 = vmatprep.subr.bf16.mxu0 %v2577
    %4691 = vmatpush1.bf16.xpose.msra.mxu0 %v2576
    %4692 = vmatprep.subr.bf16.mxu0 %v2467
    %4693 = vmatpush1.bf16.xpose.msra.mxu0 %v2466
    %4694 = vmatprep.subr.bf16.mxu0 %v2357
    %4695 = vmatpush1.bf16.xpose.msra.mxu0 %v2356
    %4696 = vmatprep.subr.bf16.mxu0 0
    %4697 = vmatpush2.bf16.xpose.msra.mxu0 0
    %4698 = vmatprep.subr.bf16.mxu0 0
    %4699 = vmatpush2.bf16.xpose.msra.mxu0 0
    %4700 = vmatprep.subr.bf16.mxu0 0
    %4701 = vmatpush2.bf16.xpose.msra.mxu0 0
    %4702 = vmatprep.subr.bf16.mxu0 0
    %4703 = vmatpush2.bf16.xpose.msra.mxu0 0
    %4704 = vmatprep.subr.bf16.mxu0 0
    %4705 = vmatpush2.bf16.xpose.msra.mxu0 0
    %4706 = vmatprep.subr.bf16.mxu0 0
    %4707 = vmatpush2.bf16.xpose.msra.mxu0 0
    %4708 = vmatprep.subr.bf16.mxu0 0
    %4709 = vmatpush2.bf16.xpose.msra.mxu0 0
    %4710 = vmatprep.subr.bf16.mxu0 0
    %4711 = vmatpush2.bf16.xpose.msra.mxu0 0
    %4712 = vmatprep.mubr.bf16.mxu0 %v700
    %4713 = vmatmul.mubr.bf16.gmra.mxu0 %v699
    %v4714 = vpop.f32.mrf.mxu0
    %v4715 = vadd.f32 %v4675, %v4714
    %v4716 = vpop.f32.mrf.mxu0
    %v4717 = vpop.f32.mrf.mxu0
    %v4718 = vpop.f32.mrf.mxu0
    %4719 = vdwg.mxu0
    %4720 = vmatprep.subr.bf16.mxu0 0
    %4721 = vmatpush1.bf16.xpose.msra.mxu0 0
    %4722 = vmatprep.subr.bf16.mxu0 0
    %4723 = vmatpush1.bf16.xpose.msra.mxu0 0
    %4724 = vmatprep.subr.bf16.mxu0 0
    %4725 = vmatpush1.bf16.xpose.msra.mxu0 0
    %4726 = vmatprep.subr.bf16.mxu0 0
    %4727 = vmatpush1.bf16.xpose.msra.mxu0 0
    %4728 = vmatprep.subr.bf16.mxu0 %v2689
    %4729 = vmatpush1.bf16.xpose.msra.mxu0 %v2688
    %4730 = vmatprep.subr.bf16.mxu0 %v2579
    %4731 = vmatpush1.bf16.xpose.msra.mxu0 %v2578
    %4732 = vmatprep.subr.bf16.mxu0 %v2469
    %4733 = vmatpush1.bf16.xpose.msra.mxu0 %v2468
    %4734 = vmatprep.subr.bf16.mxu0 %v2359
    %4735 = vmatpush1.bf16.xpose.msra.mxu0 %v2358
    %4736 = vmatprep.subr.bf16.mxu0 0
    %4737 = vmatpush2.bf16.xpose.msra.mxu0 0
    %4738 = vmatprep.subr.bf16.mxu0 0
    %4739 = vmatpush2.bf16.xpose.msra.mxu0 0
    %4740 = vmatprep.subr.bf16.mxu0 0
    %4741 = vmatpush2.bf16.xpose.msra.mxu0 0
    %4742 = vmatprep.subr.bf16.mxu0 0
    %4743 = vmatpush2.bf16.xpose.msra.mxu0 0
    %4744 = vmatprep.subr.bf16.mxu0 0
    %4745 = vmatpush2.bf16.xpose.msra.mxu0 0
    %4746 = vmatprep.subr.bf16.mxu0 0
    %4747 = vmatpush2.bf16.xpose.msra.mxu0 0
    %4748 = vmatprep.subr.bf16.mxu0 0
    %4749 = vmatpush2.bf16.xpose.msra.mxu0 0
    %4750 = vmatprep.subr.bf16.mxu0 0
    %4751 = vmatpush2.bf16.xpose.msra.mxu0 0
    %4752 = vmatprep.mubr.bf16.mxu0 %v702
    %4753 = vmatmul.mubr.bf16.gmra.mxu0 %v701
    %v4754 = vpop.f32.mrf.mxu0
    %v4755 = vadd.f32 %v4715, %v4754
    %v4756 = vpop.f32.mrf.mxu0
    %v4757 = vpop.f32.mrf.mxu0
    %v4758 = vpop.f32.mrf.mxu0
    %4759 = vdwg.mxu0
    %4760 = vmatprep.subr.bf16.mxu0 0
    %4761 = vmatpush1.bf16.xpose.msra.mxu0 0
    %4762 = vmatprep.subr.bf16.mxu0 0
    %4763 = vmatpush1.bf16.xpose.msra.mxu0 0
    %4764 = vmatprep.subr.bf16.mxu0 0
    %4765 = vmatpush1.bf16.xpose.msra.mxu0 0
    %4766 = vmatprep.subr.bf16.mxu0 0
    %4767 = vmatpush1.bf16.xpose.msra.mxu0 0
    %4768 = vmatprep.subr.bf16.mxu0 %v2691
    %4769 = vmatpush1.bf16.xpose.msra.mxu0 %v2690
    %4770 = vmatprep.subr.bf16.mxu0 %v2581
    %4771 = vmatpush1.bf16.xpose.msra.mxu0 %v2580
    %4772 = vmatprep.subr.bf16.mxu0 %v2471
    %4773 = vmatpush1.bf16.xpose.msra.mxu0 %v2470
    %4774 = vmatprep.subr.bf16.mxu0 %v2361
    %4775 = vmatpush1.bf16.xpose.msra.mxu0 %v2360
    %4776 = vmatprep.subr.bf16.mxu0 0
    %4777 = vmatpush2.bf16.xpose.msra.mxu0 0
    %4778 = vmatprep.subr.bf16.mxu0 0
    %4779 = vmatpush2.bf16.xpose.msra.mxu0 0
    %4780 = vmatprep.subr.bf16.mxu0 0
    %4781 = vmatpush2.bf16.xpose.msra.mxu0 0
    %4782 = vmatprep.subr.bf16.mxu0 0
    %4783 = vmatpush2.bf16.xpose.msra.mxu0 0
    %4784 = vmatprep.subr.bf16.mxu0 0
    %4785 = vmatpush2.bf16.xpose.msra.mxu0 0
    %4786 = vmatprep.subr.bf16.mxu0 0
    %4787 = vmatpush2.bf16.xpose.msra.mxu0 0
    %4788 = vmatprep.subr.bf16.mxu0 0
    %4789 = vmatpush2.bf16.xpose.msra.mxu0 0
    %4790 = vmatprep.subr.bf16.mxu0 0
    %4791 = vmatpush2.bf16.xpose.msra.mxu0 0
    %4792 = vmatprep.mubr.bf16.mxu0 %v704
    %4793 = vmatmul.mubr.bf16.gmra.mxu0 %v703
    %v4794 = vpop.f32.mrf.mxu0
    %v4795 = vadd.f32 %v4755, %v4794
    %v4796 = vpop.f32.mrf.mxu0
    %v4797 = vpop.f32.mrf.mxu0
    %v4798 = vpop.f32.mrf.mxu0
    %4799 = vdwg.mxu0
    %4800 = vmatprep.subr.bf16.mxu0 0
    %4801 = vmatpush1.bf16.xpose.msra.mxu0 0
    %4802 = vmatprep.subr.bf16.mxu0 0
    %4803 = vmatpush1.bf16.xpose.msra.mxu0 0
    %4804 = vmatprep.subr.bf16.mxu0 0
    %4805 = vmatpush1.bf16.xpose.msra.mxu0 0
    %4806 = vmatprep.subr.bf16.mxu0 0
    %4807 = vmatpush1.bf16.xpose.msra.mxu0 0
    %4808 = vmatprep.subr.bf16.mxu0 %v2693
    %4809 = vmatpush1.bf16.xpose.msra.mxu0 %v2692
    %4810 = vmatprep.subr.bf16.mxu0 %v2583
    %4811 = vmatpush1.bf16.xpose.msra.mxu0 %v2582
    %4812 = vmatprep.subr.bf16.mxu0 %v2473
    %4813 = vmatpush1.bf16.xpose.msra.mxu0 %v2472
    %4814 = vmatprep.subr.bf16.mxu0 %v2363
    %4815 = vmatpush1.bf16.xpose.msra.mxu0 %v2362
    %4816 = vmatprep.subr.bf16.mxu0 0
    %4817 = vmatpush2.bf16.xpose.msra.mxu0 0
    %4818 = vmatprep.subr.bf16.mxu0 0
    %4819 = vmatpush2.bf16.xpose.msra.mxu0 0
    %4820 = vmatprep.subr.bf16.mxu0 0
    %4821 = vmatpush2.bf16.xpose.msra.mxu0 0
    %4822 = vmatprep.subr.bf16.mxu0 0
    %4823 = vmatpush2.bf16.xpose.msra.mxu0 0
    %4824 = vmatprep.subr.bf16.mxu0 0
    %4825 = vmatpush2.bf16.xpose.msra.mxu0 0
    %4826 = vmatprep.subr.bf16.mxu0 0
    %4827 = vmatpush2.bf16.xpose.msra.mxu0 0
    %4828 = vmatprep.subr.bf16.mxu0 0
    %4829 = vmatpush2.bf16.xpose.msra.mxu0 0
    %4830 = vmatprep.subr.bf16.mxu0 0
    %4831 = vmatpush2.bf16.xpose.msra.mxu0 0
    %4832 = vmatprep.mubr.bf16.mxu0 %v706
    %4833 = vmatmul.mubr.bf16.gmra.mxu0 %v705
    %v4834 = vpop.f32.mrf.mxu0
    %v4835 = vadd.f32 %v4795, %v4834
    %v4836 = vpop.f32.mrf.mxu0
    %v4837 = vpop.f32.mrf.mxu0
    %v4838 = vpop.f32.mrf.mxu0
    %4839 = vdwg.mxu0
    %4840 = vmatprep.subr.bf16.mxu0 0
    %4841 = vmatpush1.bf16.xpose.msra.mxu0 0
    %4842 = vmatprep.subr.bf16.mxu0 0
    %4843 = vmatpush1.bf16.xpose.msra.mxu0 0
    %4844 = vmatprep.subr.bf16.mxu0 0
    %4845 = vmatpush1.bf16.xpose.msra.mxu0 0
    %4846 = vmatprep.subr.bf16.mxu0 0
    %4847 = vmatpush1.bf16.xpose.msra.mxu0 0
    %4848 = vmatprep.subr.bf16.mxu0 %v2695
    %4849 = vmatpush1.bf16.xpose.msra.mxu0 %v2694
    %4850 = vmatprep.subr.bf16.mxu0 %v2585
    %4851 = vmatpush1.bf16.xpose.msra.mxu0 %v2584
    %4852 = vmatprep.subr.bf16.mxu0 %v2475
    %4853 = vmatpush1.bf16.xpose.msra.mxu0 %v2474
    %4854 = vmatprep.subr.bf16.mxu0 %v2365
    %4855 = vmatpush1.bf16.xpose.msra.mxu0 %v2364
    %4856 = vmatprep.subr.bf16.mxu0 0
    %4857 = vmatpush2.bf16.xpose.msra.mxu0 0
    %4858 = vmatprep.subr.bf16.mxu0 0
    %4859 = vmatpush2.bf16.xpose.msra.mxu0 0
    %4860 = vmatprep.subr.bf16.mxu0 0
    %4861 = vmatpush2.bf16.xpose.msra.mxu0 0
    %4862 = vmatprep.subr.bf16.mxu0 0
    %4863 = vmatpush2.bf16.xpose.msra.mxu0 0
    %4864 = vmatprep.subr.bf16.mxu0 0
    %4865 = vmatpush2.bf16.xpose.msra.mxu0 0
    %4866 = vmatprep.subr.bf16.mxu0 0
    %4867 = vmatpush2.bf16.xpose.msra.mxu0 0
    %4868 = vmatprep.subr.bf16.mxu0 0
    %4869 = vmatpush2.bf16.xpose.msra.mxu0 0
    %4870 = vmatprep.subr.bf16.mxu0 0
    %4871 = vmatpush2.bf16.xpose.msra.mxu0 0
    %4872 = vmatprep.mubr.bf16.mxu0 %v708
    %4873 = vmatmul.mubr.bf16.gmra.mxu0 %v707
    %v4874 = vpop.f32.mrf.mxu0
    %v4875 = vadd.f32 %v4835, %v4874
    %v4876 = vpop.f32.mrf.mxu0
    %v4877 = vpop.f32.mrf.mxu0
    %v4878 = vpop.f32.mrf.mxu0
    %4879 = vdwg.mxu0
    %4880 = vmatprep.subr.bf16.mxu0 0
    %4881 = vmatpush1.bf16.xpose.msra.mxu0 0
    %4882 = vmatprep.subr.bf16.mxu0 0
    %4883 = vmatpush1.bf16.xpose.msra.mxu0 0
    %4884 = vmatprep.subr.bf16.mxu0 0
    %4885 = vmatpush1.bf16.xpose.msra.mxu0 0
    %4886 = vmatprep.subr.bf16.mxu0 0
    %4887 = vmatpush1.bf16.xpose.msra.mxu0 0
    %4888 = vmatprep.subr.bf16.mxu0 %v2697
    %4889 = vmatpush1.bf16.xpose.msra.mxu0 %v2696
    %4890 = vmatprep.subr.bf16.mxu0 %v2587
    %4891 = vmatpush1.bf16.xpose.msra.mxu0 %v2586
    %4892 = vmatprep.subr.bf16.mxu0 %v2477
    %4893 = vmatpush1.bf16.xpose.msra.mxu0 %v2476
    %4894 = vmatprep.subr.bf16.mxu0 %v2367
    %4895 = vmatpush1.bf16.xpose.msra.mxu0 %v2366
    %4896 = vmatprep.subr.bf16.mxu0 0
    %4897 = vmatpush2.bf16.xpose.msra.mxu0 0
    %4898 = vmatprep.subr.bf16.mxu0 0
    %4899 = vmatpush2.bf16.xpose.msra.mxu0 0
    %4900 = vmatprep.subr.bf16.mxu0 0
    %4901 = vmatpush2.bf16.xpose.msra.mxu0 0
    %4902 = vmatprep.subr.bf16.mxu0 0
    %4903 = vmatpush2.bf16.xpose.msra.mxu0 0
    %4904 = vmatprep.subr.bf16.mxu0 0
    %4905 = vmatpush2.bf16.xpose.msra.mxu0 0
    %4906 = vmatprep.subr.bf16.mxu0 0
    %4907 = vmatpush2.bf16.xpose.msra.mxu0 0
    %4908 = vmatprep.subr.bf16.mxu0 0
    %4909 = vmatpush2.bf16.xpose.msra.mxu0 0
    %4910 = vmatprep.subr.bf16.mxu0 0
    %4911 = vmatpush2.bf16.xpose.msra.mxu0 0
    %4912 = vmatprep.mubr.bf16.mxu0 %v710
    %4913 = vmatmul.mubr.bf16.gmra.mxu0 %v709
    %v4914 = vpop.f32.mrf.mxu0
    %v4915 = vadd.f32 %v4875, %v4914
    %v4916 = vpop.f32.mrf.mxu0
    %v4917 = vpop.f32.mrf.mxu0
    %v4918 = vpop.f32.mrf.mxu0
    %4919 = vdwg.mxu0
    %4920 = vmatprep.subr.bf16.mxu0 0
    %4921 = vmatpush1.bf16.xpose.msra.mxu0 0
    %4922 = vmatprep.subr.bf16.mxu0 0
    %4923 = vmatpush1.bf16.xpose.msra.mxu0 0
    %4924 = vmatprep.subr.bf16.mxu0 0
    %4925 = vmatpush1.bf16.xpose.msra.mxu0 0
    %4926 = vmatprep.subr.bf16.mxu0 0
    %4927 = vmatpush1.bf16.xpose.msra.mxu0 0
    %4928 = vmatprep.subr.bf16.mxu0 %v2699
    %4929 = vmatpush1.bf16.xpose.msra.mxu0 %v2698
    %4930 = vmatprep.subr.bf16.mxu0 %v2589
    %4931 = vmatpush1.bf16.xpose.msra.mxu0 %v2588
    %4932 = vmatprep.subr.bf16.mxu0 %v2479
    %4933 = vmatpush1.bf16.xpose.msra.mxu0 %v2478
    %4934 = vmatprep.subr.bf16.mxu0 %v2369
    %4935 = vmatpush1.bf16.xpose.msra.mxu0 %v2368
    %4936 = vmatprep.subr.bf16.mxu0 0
    %4937 = vmatpush2.bf16.xpose.msra.mxu0 0
    %4938 = vmatprep.subr.bf16.mxu0 0
    %4939 = vmatpush2.bf16.xpose.msra.mxu0 0
    %4940 = vmatprep.subr.bf16.mxu0 0
    %4941 = vmatpush2.bf16.xpose.msra.mxu0 0
    %4942 = vmatprep.subr.bf16.mxu0 0
    %4943 = vmatpush2.bf16.xpose.msra.mxu0 0
    %4944 = vmatprep.subr.bf16.mxu0 0
    %4945 = vmatpush2.bf16.xpose.msra.mxu0 0
    %4946 = vmatprep.subr.bf16.mxu0 0
    %4947 = vmatpush2.bf16.xpose.msra.mxu0 0
    %4948 = vmatprep.subr.bf16.mxu0 0
    %4949 = vmatpush2.bf16.xpose.msra.mxu0 0
    %4950 = vmatprep.subr.bf16.mxu0 0
    %4951 = vmatpush2.bf16.xpose.msra.mxu0 0
    %4952 = vmatprep.mubr.bf16.mxu0 %v712
    %4953 = vmatmul.mubr.bf16.gmra.mxu0 %v711
    %v4954 = vpop.f32.mrf.mxu0
    %v4955 = vadd.f32 %v4915, %v4954
    %v4956 = vpop.f32.mrf.mxu0
    %v4957 = vpop.f32.mrf.mxu0
    %v4958 = vpop.f32.mrf.mxu0
    %4959 = vdwg.mxu0
    %4960 = vmatprep.subr.bf16.mxu0 0
    %4961 = vmatpush1.bf16.xpose.msra.mxu0 0
    %4962 = vmatprep.subr.bf16.mxu0 0
    %4963 = vmatpush1.bf16.xpose.msra.mxu0 0
    %4964 = vmatprep.subr.bf16.mxu0 0
    %4965 = vmatpush1.bf16.xpose.msra.mxu0 0
    %4966 = vmatprep.subr.bf16.mxu0 0
    %4967 = vmatpush1.bf16.xpose.msra.mxu0 0
    %4968 = vmatprep.subr.bf16.mxu0 %v2701
    %4969 = vmatpush1.bf16.xpose.msra.mxu0 %v2700
    %4970 = vmatprep.subr.bf16.mxu0 %v2591
    %4971 = vmatpush1.bf16.xpose.msra.mxu0 %v2590
    %4972 = vmatprep.subr.bf16.mxu0 %v2481
    %4973 = vmatpush1.bf16.xpose.msra.mxu0 %v2480
    %4974 = vmatprep.subr.bf16.mxu0 %v2371
    %4975 = vmatpush1.bf16.xpose.msra.mxu0 %v2370
    %4976 = vmatprep.subr.bf16.mxu0 0
    %4977 = vmatpush2.bf16.xpose.msra.mxu0 0
    %4978 = vmatprep.subr.bf16.mxu0 0
    %4979 = vmatpush2.bf16.xpose.msra.mxu0 0
    %4980 = vmatprep.subr.bf16.mxu0 0
    %4981 = vmatpush2.bf16.xpose.msra.mxu0 0
    %4982 = vmatprep.subr.bf16.mxu0 0
    %4983 = vmatpush2.bf16.xpose.msra.mxu0 0
    %4984 = vmatprep.subr.bf16.mxu0 0
    %4985 = vmatpush2.bf16.xpose.msra.mxu0 0
    %4986 = vmatprep.subr.bf16.mxu0 0
    %4987 = vmatpush2.bf16.xpose.msra.mxu0 0
    %4988 = vmatprep.subr.bf16.mxu0 0
    %4989 = vmatpush2.bf16.xpose.msra.mxu0 0
    %4990 = vmatprep.subr.bf16.mxu0 0
    %4991 = vmatpush2.bf16.xpose.msra.mxu0 0
    %4992 = vmatprep.mubr.bf16.mxu0 %v714
    %4993 = vmatmul.mubr.bf16.gmra.mxu0 %v713
    %v4994 = vpop.f32.mrf.mxu0
    %v4995 = vadd.f32 %v4955, %v4994
    %v4996 = vpop.f32.mrf.mxu0
    %v4997 = vpop.f32.mrf.mxu0
    %v4998 = vpop.f32.mrf.mxu0
    %4999 = vdwg.mxu0
    %5000 = vmatprep.subr.bf16.mxu0 0
    %5001 = vmatpush1.bf16.xpose.msra.mxu0 0
    %5002 = vmatprep.subr.bf16.mxu0 0
    %5003 = vmatpush1.bf16.xpose.msra.mxu0 0
    %5004 = vmatprep.subr.bf16.mxu0 0
    %5005 = vmatpush1.bf16.xpose.msra.mxu0 0
    %5006 = vmatprep.subr.bf16.mxu0 0
    %5007 = vmatpush1.bf16.xpose.msra.mxu0 0
    %5008 = vmatprep.subr.bf16.mxu0 %v2703
    %5009 = vmatpush1.bf16.xpose.msra.mxu0 %v2702
    %5010 = vmatprep.subr.bf16.mxu0 %v2593
    %5011 = vmatpush1.bf16.xpose.msra.mxu0 %v2592
    %5012 = vmatprep.subr.bf16.mxu0 %v2483
    %5013 = vmatpush1.bf16.xpose.msra.mxu0 %v2482
    %5014 = vmatprep.subr.bf16.mxu0 %v2373
    %5015 = vmatpush1.bf16.xpose.msra.mxu0 %v2372
    %5016 = vmatprep.subr.bf16.mxu0 0
    %5017 = vmatpush2.bf16.xpose.msra.mxu0 0
    %5018 = vmatprep.subr.bf16.mxu0 0
    %5019 = vmatpush2.bf16.xpose.msra.mxu0 0
    %5020 = vmatprep.subr.bf16.mxu0 0
    %5021 = vmatpush2.bf16.xpose.msra.mxu0 0
    %5022 = vmatprep.subr.bf16.mxu0 0
    %5023 = vmatpush2.bf16.xpose.msra.mxu0 0
    %5024 = vmatprep.subr.bf16.mxu0 0
    %5025 = vmatpush2.bf16.xpose.msra.mxu0 0
    %5026 = vmatprep.subr.bf16.mxu0 0
    %5027 = vmatpush2.bf16.xpose.msra.mxu0 0
    %5028 = vmatprep.subr.bf16.mxu0 0
    %5029 = vmatpush2.bf16.xpose.msra.mxu0 0
    %5030 = vmatprep.subr.bf16.mxu0 0
    %5031 = vmatpush2.bf16.xpose.msra.mxu0 0
    %5032 = vmatprep.mubr.bf16.mxu0 %v716
    %5033 = vmatmul.mubr.bf16.gmra.mxu0 %v715
    %v5034 = vpop.f32.mrf.mxu0
    %v5035 = vadd.f32 %v4995, %v5034
    %v5036 = vpop.f32.mrf.mxu0
    %v5037 = vpop.f32.mrf.mxu0
    %v5038 = vpop.f32.mrf.mxu0
    %5039 = vdwg.mxu0
    %5040 = vmatprep.subr.bf16.mxu0 0
    %5041 = vmatpush1.bf16.xpose.msra.mxu0 0
    %5042 = vmatprep.subr.bf16.mxu0 0
    %5043 = vmatpush1.bf16.xpose.msra.mxu0 0
    %5044 = vmatprep.subr.bf16.mxu0 0
    %5045 = vmatpush1.bf16.xpose.msra.mxu0 0
    %5046 = vmatprep.subr.bf16.mxu0 0
    %5047 = vmatpush1.bf16.xpose.msra.mxu0 0
    %5048 = vmatprep.subr.bf16.mxu0 %v2705
    %5049 = vmatpush1.bf16.xpose.msra.mxu0 %v2704
    %5050 = vmatprep.subr.bf16.mxu0 %v2595
    %5051 = vmatpush1.bf16.xpose.msra.mxu0 %v2594
    %5052 = vmatprep.subr.bf16.mxu0 %v2485
    %5053 = vmatpush1.bf16.xpose.msra.mxu0 %v2484
    %5054 = vmatprep.subr.bf16.mxu0 %v2375
    %5055 = vmatpush1.bf16.xpose.msra.mxu0 %v2374
    %5056 = vmatprep.subr.bf16.mxu0 0
    %5057 = vmatpush2.bf16.xpose.msra.mxu0 0
    %5058 = vmatprep.subr.bf16.mxu0 0
    %5059 = vmatpush2.bf16.xpose.msra.mxu0 0
    %5060 = vmatprep.subr.bf16.mxu0 0
    %5061 = vmatpush2.bf16.xpose.msra.mxu0 0
    %5062 = vmatprep.subr.bf16.mxu0 0
    %5063 = vmatpush2.bf16.xpose.msra.mxu0 0
    %5064 = vmatprep.subr.bf16.mxu0 0
    %5065 = vmatpush2.bf16.xpose.msra.mxu0 0
    %5066 = vmatprep.subr.bf16.mxu0 0
    %5067 = vmatpush2.bf16.xpose.msra.mxu0 0
    %5068 = vmatprep.subr.bf16.mxu0 0
    %5069 = vmatpush2.bf16.xpose.msra.mxu0 0
    %5070 = vmatprep.subr.bf16.mxu0 0
    %5071 = vmatpush2.bf16.xpose.msra.mxu0 0
    %5072 = vmatprep.mubr.bf16.mxu0 %v718
    %5073 = vmatmul.mubr.bf16.gmra.mxu0 %v717
    %v5074 = vpop.f32.mrf.mxu0
    %v5075 = vadd.f32 %v5035, %v5074
    %v5076 = vpop.f32.mrf.mxu0
    %v5077 = vpop.f32.mrf.mxu0
    %v5078 = vpop.f32.mrf.mxu0
    %5079 = vdwg.mxu0
    %5080 = vmatprep.subr.bf16.mxu0 0
    %5081 = vmatpush1.bf16.xpose.msra.mxu0 0
    %5082 = vmatprep.subr.bf16.mxu0 0
    %5083 = vmatpush1.bf16.xpose.msra.mxu0 0
    %5084 = vmatprep.subr.bf16.mxu0 0
    %5085 = vmatpush1.bf16.xpose.msra.mxu0 0
    %5086 = vmatprep.subr.bf16.mxu0 0
    %5087 = vmatpush1.bf16.xpose.msra.mxu0 0
    %5088 = vmatprep.subr.bf16.mxu0 %v2707
    %5089 = vmatpush1.bf16.xpose.msra.mxu0 %v2706
    %5090 = vmatprep.subr.bf16.mxu0 %v2597
    %5091 = vmatpush1.bf16.xpose.msra.mxu0 %v2596
    %5092 = vmatprep.subr.bf16.mxu0 %v2487
    %5093 = vmatpush1.bf16.xpose.msra.mxu0 %v2486
    %5094 = vmatprep.subr.bf16.mxu0 %v2377
    %5095 = vmatpush1.bf16.xpose.msra.mxu0 %v2376
    %5096 = vmatprep.subr.bf16.mxu0 0
    %5097 = vmatpush2.bf16.xpose.msra.mxu0 0
    %5098 = vmatprep.subr.bf16.mxu0 0
    %5099 = vmatpush2.bf16.xpose.msra.mxu0 0
    %5100 = vmatprep.subr.bf16.mxu0 0
    %5101 = vmatpush2.bf16.xpose.msra.mxu0 0
    %5102 = vmatprep.subr.bf16.mxu0 0
    %5103 = vmatpush2.bf16.xpose.msra.mxu0 0
    %5104 = vmatprep.subr.bf16.mxu0 0
    %5105 = vmatpush2.bf16.xpose.msra.mxu0 0
    %5106 = vmatprep.subr.bf16.mxu0 0
    %5107 = vmatpush2.bf16.xpose.msra.mxu0 0
    %5108 = vmatprep.subr.bf16.mxu0 0
    %5109 = vmatpush2.bf16.xpose.msra.mxu0 0
    %5110 = vmatprep.subr.bf16.mxu0 0
    %5111 = vmatpush2.bf16.xpose.msra.mxu0 0
    %5112 = vmatprep.mubr.bf16.mxu0 %v720
    %5113 = vmatmul.mubr.bf16.gmra.mxu0 %v719
    %v5114 = vpop.f32.mrf.mxu0
    %v5115 = vadd.f32 %v5075, %v5114
    %v5116 = vpop.f32.mrf.mxu0
    %v5117 = vpop.f32.mrf.mxu0
    %v5118 = vpop.f32.mrf.mxu0
    %5119 = vdwg.mxu0
    %5120 = vmatprep.subr.bf16.mxu0 0
    %5121 = vmatpush1.bf16.xpose.msra.mxu0 0
    %5122 = vmatprep.subr.bf16.mxu0 0
    %5123 = vmatpush1.bf16.xpose.msra.mxu0 0
    %5124 = vmatprep.subr.bf16.mxu0 0
    %5125 = vmatpush1.bf16.xpose.msra.mxu0 0
    %5126 = vmatprep.subr.bf16.mxu0 0
    %5127 = vmatpush1.bf16.xpose.msra.mxu0 0
    %5128 = vmatprep.subr.bf16.mxu0 %v2709
    %5129 = vmatpush1.bf16.xpose.msra.mxu0 %v2708
    %5130 = vmatprep.subr.bf16.mxu0 %v2599
    %5131 = vmatpush1.bf16.xpose.msra.mxu0 %v2598
    %5132 = vmatprep.subr.bf16.mxu0 %v2489
    %5133 = vmatpush1.bf16.xpose.msra.mxu0 %v2488
    %5134 = vmatprep.subr.bf16.mxu0 %v2379
    %5135 = vmatpush1.bf16.xpose.msra.mxu0 %v2378
    %5136 = vmatprep.subr.bf16.mxu0 0
    %5137 = vmatpush2.bf16.xpose.msra.mxu0 0
    %5138 = vmatprep.subr.bf16.mxu0 0
    %5139 = vmatpush2.bf16.xpose.msra.mxu0 0
    %5140 = vmatprep.subr.bf16.mxu0 0
    %5141 = vmatpush2.bf16.xpose.msra.mxu0 0
    %5142 = vmatprep.subr.bf16.mxu0 0
    %5143 = vmatpush2.bf16.xpose.msra.mxu0 0
    %5144 = vmatprep.subr.bf16.mxu0 0
    %5145 = vmatpush2.bf16.xpose.msra.mxu0 0
    %5146 = vmatprep.subr.bf16.mxu0 0
    %5147 = vmatpush2.bf16.xpose.msra.mxu0 0
    %5148 = vmatprep.subr.bf16.mxu0 0
    %5149 = vmatpush2.bf16.xpose.msra.mxu0 0
    %5150 = vmatprep.subr.bf16.mxu0 0
    %5151 = vmatpush2.bf16.xpose.msra.mxu0 0
    %5152 = vmatprep.mubr.bf16.mxu0 %v722
    %5153 = vmatmul.mubr.bf16.gmra.mxu0 %v721
    %v5154 = vpop.f32.mrf.mxu0
    %v5155 = vadd.f32 %v5115, %v5154
    %v5156 = vpop.f32.mrf.mxu0
    %v5157 = vpop.f32.mrf.mxu0
    %v5158 = vpop.f32.mrf.mxu0
    %5159 = vdwg.mxu0
    %5160 = vmatprep.subr.bf16.mxu0 0
    %5161 = vmatpush1.bf16.xpose.msra.mxu0 0
    %5162 = vmatprep.subr.bf16.mxu0 0
    %5163 = vmatpush1.bf16.xpose.msra.mxu0 0
    %5164 = vmatprep.subr.bf16.mxu0 0
    %5165 = vmatpush1.bf16.xpose.msra.mxu0 0
    %5166 = vmatprep.subr.bf16.mxu0 0
    %5167 = vmatpush1.bf16.xpose.msra.mxu0 0
    %5168 = vmatprep.subr.bf16.mxu0 %v2711
    %5169 = vmatpush1.bf16.xpose.msra.mxu0 %v2710
    %5170 = vmatprep.subr.bf16.mxu0 %v2601
    %5171 = vmatpush1.bf16.xpose.msra.mxu0 %v2600
    %5172 = vmatprep.subr.bf16.mxu0 %v2491
    %5173 = vmatpush1.bf16.xpose.msra.mxu0 %v2490
    %5174 = vmatprep.subr.bf16.mxu0 %v2381
    %5175 = vmatpush1.bf16.xpose.msra.mxu0 %v2380
    %5176 = vmatprep.subr.bf16.mxu0 0
    %5177 = vmatpush2.bf16.xpose.msra.mxu0 0
    %5178 = vmatprep.subr.bf16.mxu0 0
    %5179 = vmatpush2.bf16.xpose.msra.mxu0 0
    %5180 = vmatprep.subr.bf16.mxu0 0
    %5181 = vmatpush2.bf16.xpose.msra.mxu0 0
    %5182 = vmatprep.subr.bf16.mxu0 0
    %5183 = vmatpush2.bf16.xpose.msra.mxu0 0
    %5184 = vmatprep.subr.bf16.mxu0 0
    %5185 = vmatpush2.bf16.xpose.msra.mxu0 0
    %5186 = vmatprep.subr.bf16.mxu0 0
    %5187 = vmatpush2.bf16.xpose.msra.mxu0 0
    %5188 = vmatprep.subr.bf16.mxu0 0
    %5189 = vmatpush2.bf16.xpose.msra.mxu0 0
    %5190 = vmatprep.subr.bf16.mxu0 0
    %5191 = vmatpush2.bf16.xpose.msra.mxu0 0
    %5192 = vmatprep.mubr.bf16.mxu0 %v724
    %5193 = vmatmul.mubr.bf16.gmra.mxu0 %v723
    %v5194 = vpop.f32.mrf.mxu0
    %v5195 = vadd.f32 %v5155, %v5194
    %v5196 = vpop.f32.mrf.mxu0
    %v5197 = vpop.f32.mrf.mxu0
    %v5198 = vpop.f32.mrf.mxu0
    %5199 = vdwg.mxu0
    %5200 = vmatprep.subr.bf16.mxu0 0
    %5201 = vmatpush1.bf16.xpose.msra.mxu0 0
    %5202 = vmatprep.subr.bf16.mxu0 0
    %5203 = vmatpush1.bf16.xpose.msra.mxu0 0
    %5204 = vmatprep.subr.bf16.mxu0 0
    %5205 = vmatpush1.bf16.xpose.msra.mxu0 0
    %5206 = vmatprep.subr.bf16.mxu0 0
    %5207 = vmatpush1.bf16.xpose.msra.mxu0 0
    %5208 = vmatprep.subr.bf16.mxu0 %v2713
    %5209 = vmatpush1.bf16.xpose.msra.mxu0 %v2712
    %5210 = vmatprep.subr.bf16.mxu0 %v2603
    %5211 = vmatpush1.bf16.xpose.msra.mxu0 %v2602
    %5212 = vmatprep.subr.bf16.mxu0 %v2493
    %5213 = vmatpush1.bf16.xpose.msra.mxu0 %v2492
    %5214 = vmatprep.subr.bf16.mxu0 %v2383
    %5215 = vmatpush1.bf16.xpose.msra.mxu0 %v2382
    %5216 = vmatprep.subr.bf16.mxu0 0
    %5217 = vmatpush2.bf16.xpose.msra.mxu0 0
    %5218 = vmatprep.subr.bf16.mxu0 0
    %5219 = vmatpush2.bf16.xpose.msra.mxu0 0
    %5220 = vmatprep.subr.bf16.mxu0 0
    %5221 = vmatpush2.bf16.xpose.msra.mxu0 0
    %5222 = vmatprep.subr.bf16.mxu0 0
    %5223 = vmatpush2.bf16.xpose.msra.mxu0 0
    %5224 = vmatprep.subr.bf16.mxu0 0
    %5225 = vmatpush2.bf16.xpose.msra.mxu0 0
    %5226 = vmatprep.subr.bf16.mxu0 0
    %5227 = vmatpush2.bf16.xpose.msra.mxu0 0
    %5228 = vmatprep.subr.bf16.mxu0 0
    %5229 = vmatpush2.bf16.xpose.msra.mxu0 0
    %5230 = vmatprep.subr.bf16.mxu0 0
    %5231 = vmatpush2.bf16.xpose.msra.mxu0 0
    %5232 = vmatprep.mubr.bf16.mxu0 %v726
    %5233 = vmatmul.mubr.bf16.gmra.mxu0 %v725
    %v5234 = vpop.f32.mrf.mxu0
    %v5235 = vadd.f32 %v5195, %v5234
    %v5236 = vpop.f32.mrf.mxu0
    %v5237 = vpop.f32.mrf.mxu0
    %v5238 = vpop.f32.mrf.mxu0
    %5239 = vdwg.mxu0
    %5240 = vmatprep.subr.bf16.mxu0 0
    %5241 = vmatpush1.bf16.xpose.msra.mxu0 0
    %5242 = vmatprep.subr.bf16.mxu0 0
    %5243 = vmatpush1.bf16.xpose.msra.mxu0 0
    %5244 = vmatprep.subr.bf16.mxu0 0
    %5245 = vmatpush1.bf16.xpose.msra.mxu0 0
    %5246 = vmatprep.subr.bf16.mxu0 0
    %5247 = vmatpush1.bf16.xpose.msra.mxu0 0
    %5248 = vmatprep.subr.bf16.mxu0 %v2715
    %5249 = vmatpush1.bf16.xpose.msra.mxu0 %v2714
    %5250 = vmatprep.subr.bf16.mxu0 %v2605
    %5251 = vmatpush1.bf16.xpose.msra.mxu0 %v2604
    %5252 = vmatprep.subr.bf16.mxu0 %v2495
    %5253 = vmatpush1.bf16.xpose.msra.mxu0 %v2494
    %5254 = vmatprep.subr.bf16.mxu0 %v2385
    %5255 = vmatpush1.bf16.xpose.msra.mxu0 %v2384
    %5256 = vmatprep.subr.bf16.mxu0 0
    %5257 = vmatpush2.bf16.xpose.msra.mxu0 0
    %5258 = vmatprep.subr.bf16.mxu0 0
    %5259 = vmatpush2.bf16.xpose.msra.mxu0 0
    %5260 = vmatprep.subr.bf16.mxu0 0
    %5261 = vmatpush2.bf16.xpose.msra.mxu0 0
    %5262 = vmatprep.subr.bf16.mxu0 0
    %5263 = vmatpush2.bf16.xpose.msra.mxu0 0
    %5264 = vmatprep.subr.bf16.mxu0 0
    %5265 = vmatpush2.bf16.xpose.msra.mxu0 0
    %5266 = vmatprep.subr.bf16.mxu0 0
    %5267 = vmatpush2.bf16.xpose.msra.mxu0 0
    %5268 = vmatprep.subr.bf16.mxu0 0
    %5269 = vmatpush2.bf16.xpose.msra.mxu0 0
    %5270 = vmatprep.subr.bf16.mxu0 0
    %5271 = vmatpush2.bf16.xpose.msra.mxu0 0
    %5272 = vmatprep.mubr.bf16.mxu0 %v728
    %5273 = vmatmul.mubr.bf16.gmra.mxu0 %v727
    %v5274 = vpop.f32.mrf.mxu0
    %v5275 = vadd.f32 %v5235, %v5274
    %v5276 = vpop.f32.mrf.mxu0
    %v5277 = vpop.f32.mrf.mxu0
    %v5278 = vpop.f32.mrf.mxu0
    %5279 = vdwg.mxu0
    %5280 = vmatprep.subr.bf16.mxu0 0
    %5281 = vmatpush1.bf16.xpose.msra.mxu0 0
    %5282 = vmatprep.subr.bf16.mxu0 0
    %5283 = vmatpush1.bf16.xpose.msra.mxu0 0
    %5284 = vmatprep.subr.bf16.mxu0 0
    %5285 = vmatpush1.bf16.xpose.msra.mxu0 0
    %5286 = vmatprep.subr.bf16.mxu0 0
    %5287 = vmatpush1.bf16.xpose.msra.mxu0 0
    %5288 = vmatprep.subr.bf16.mxu0 %v2717
    %5289 = vmatpush1.bf16.xpose.msra.mxu0 %v2716
    %5290 = vmatprep.subr.bf16.mxu0 %v2607
    %5291 = vmatpush1.bf16.xpose.msra.mxu0 %v2606
    %5292 = vmatprep.subr.bf16.mxu0 %v2497
    %5293 = vmatpush1.bf16.xpose.msra.mxu0 %v2496
    %5294 = vmatprep.subr.bf16.mxu0 %v2387
    %5295 = vmatpush1.bf16.xpose.msra.mxu0 %v2386
    %5296 = vmatprep.subr.bf16.mxu0 0
    %5297 = vmatpush2.bf16.xpose.msra.mxu0 0
    %5298 = vmatprep.subr.bf16.mxu0 0
    %5299 = vmatpush2.bf16.xpose.msra.mxu0 0
    %5300 = vmatprep.subr.bf16.mxu0 0
    %5301 = vmatpush2.bf16.xpose.msra.mxu0 0
    %5302 = vmatprep.subr.bf16.mxu0 0
    %5303 = vmatpush2.bf16.xpose.msra.mxu0 0
    %5304 = vmatprep.subr.bf16.mxu0 0
    %5305 = vmatpush2.bf16.xpose.msra.mxu0 0
    %5306 = vmatprep.subr.bf16.mxu0 0
    %5307 = vmatpush2.bf16.xpose.msra.mxu0 0
    %5308 = vmatprep.subr.bf16.mxu0 0
    %5309 = vmatpush2.bf16.xpose.msra.mxu0 0
    %5310 = vmatprep.subr.bf16.mxu0 0
    %5311 = vmatpush2.bf16.xpose.msra.mxu0 0
    %5312 = vmatprep.mubr.bf16.mxu0 %v730
    %5313 = vmatmul.mubr.bf16.gmra.mxu0 %v729
    %v5314 = vpop.f32.mrf.mxu0
    %v5315 = vadd.f32 %v5275, %v5314
    %v5316 = vpop.f32.mrf.mxu0
    %v5317 = vpop.f32.mrf.mxu0
    %v5318 = vpop.f32.mrf.mxu0
    %5319 = vdwg.mxu0
    %5320 = vmatprep.subr.bf16.mxu0 0
    %5321 = vmatpush1.bf16.xpose.msra.mxu0 0
    %5322 = vmatprep.subr.bf16.mxu0 0
    %5323 = vmatpush1.bf16.xpose.msra.mxu0 0
    %5324 = vmatprep.subr.bf16.mxu0 0
    %5325 = vmatpush1.bf16.xpose.msra.mxu0 0
    %5326 = vmatprep.subr.bf16.mxu0 0
    %5327 = vmatpush1.bf16.xpose.msra.mxu0 0
    %5328 = vmatprep.subr.bf16.mxu0 %v2719
    %5329 = vmatpush1.bf16.xpose.msra.mxu0 %v2718
    %5330 = vmatprep.subr.bf16.mxu0 %v2609
    %5331 = vmatpush1.bf16.xpose.msra.mxu0 %v2608
    %5332 = vmatprep.subr.bf16.mxu0 %v2499
    %5333 = vmatpush1.bf16.xpose.msra.mxu0 %v2498
    %5334 = vmatprep.subr.bf16.mxu0 %v2389
    %5335 = vmatpush1.bf16.xpose.msra.mxu0 %v2388
    %5336 = vmatprep.subr.bf16.mxu0 0
    %5337 = vmatpush2.bf16.xpose.msra.mxu0 0
    %5338 = vmatprep.subr.bf16.mxu0 0
    %5339 = vmatpush2.bf16.xpose.msra.mxu0 0
    %5340 = vmatprep.subr.bf16.mxu0 0
    %5341 = vmatpush2.bf16.xpose.msra.mxu0 0
    %5342 = vmatprep.subr.bf16.mxu0 0
    %5343 = vmatpush2.bf16.xpose.msra.mxu0 0
    %5344 = vmatprep.subr.bf16.mxu0 0
    %5345 = vmatpush2.bf16.xpose.msra.mxu0 0
    %5346 = vmatprep.subr.bf16.mxu0 0
    %5347 = vmatpush2.bf16.xpose.msra.mxu0 0
    %5348 = vmatprep.subr.bf16.mxu0 0
    %5349 = vmatpush2.bf16.xpose.msra.mxu0 0
    %5350 = vmatprep.subr.bf16.mxu0 0
    %5351 = vmatpush2.bf16.xpose.msra.mxu0 0
    %5352 = vmatprep.mubr.bf16.mxu0 %v732
    %5353 = vmatmul.mubr.bf16.gmra.mxu0 %v731
    %v5354 = vpop.f32.mrf.mxu0
    %v5355 = vadd.f32 %v5315, %v5354
    %v5356 = vpop.f32.mrf.mxu0
    %v5357 = vpop.f32.mrf.mxu0
    %v5358 = vpop.f32.mrf.mxu0
    %5359 = vdwg.mxu0
    %v5360 = vmax.f32 %v5355, 0.0
    %v5361 = vld [vmem:[#allocation8] sm:$0x1]
    %v5363 = vlaneseq
    %v5364 = vshrl.u32 %v5363, 7
    %v5365 = vsub.s32 0, %v5364
    %v5366 = vrot.slane %v5361, %v5365
    %v5368 = vmul.f32 %v5360, %v5366
    %vm5369 = vcmask 404480
    %v5370 = vsel %vm5369, %v5368, 0.0
    %5371 = vadd.xlane.f32.xlu0 %v5370
    %v5372 = vpop.xlane.xlu0 %5371
    %v5373 = vld [vmem:[#allocation2] sm:$0x1]
    %v5375 = vlaneseq
    %v5376 = vshrl.u32 %v5375, 7
    %v5377 = vsub.s32 0, %v5376
    %v5378 = vrot.slane %v5373, %v5377
    %v5380 = vadd.f32 %v5372, %v5378
    %vm5381 = vcmask 3072
    %5382 = vst.msk [vmem:[%s5] sm:$0xf] %vm5381, %v5380
    // Predicated region
    $region38: #{mlp_forward.1} parent=1 // pred_check
      _
    $region39: #{mlp_forward.1} parent=1 // pred_check_branch
      %5384 = sbr.rel (0) target = $region41
    $region40: #{mlp_forward.1} parent=1 // pred_region
      _
    $region41: #{mlp_forward.1} parent=1 // pred_fallthru
      _
    // Predicated region
    $region42: #{mlp_forward.1} parent=1 // pred_check
      _
    $region43: #{mlp_forward.1} parent=1 // pred_check_branch
      %5386 = sbr.rel (0) target = $region45
    $region44: #{mlp_forward.1} parent=1 // pred_region
      _
    $region45: #{mlp_forward.1} parent=1 // pred_fallthru
      _
    %5387 = vsyncpa [#allocation4], 1
    %5388 = vsyncpa [#allocation6], 1
    %5389 = vsyncpa [#allocation9], 1

</llo_original>
